<compile_context>
chip_gen: v6e
topology: v6e:2x2x1
jax: 0.10.0
libtpu: 0.0.40
codegen_flags: <defaults>
</compile_context>

<pallas_src>
import functools
import math

import jax
import jax.numpy as jnp
from jax.experimental import pallas as pl
from jax.experimental.pallas import tpu as pltpu


# ----------------------------------------------------------------------------
# Fused kernel
# ----------------------------------------------------------------------------
def _layer_norm(x, gamma, beta, eps=1e-5):
    mu = jnp.mean(x, axis=-1, keepdims=True)
    var = jnp.mean((x - mu) ** 2, axis=-1, keepdims=True)
    return (x - mu) * jax.lax.rsqrt(var + eps) * gamma + beta


def fused_transformer_kernel(src_ref, w_emb_ref, b_emb_ref, pe_ref,
                             w_attn_ref, b_attn_ref, wo_ref,
                             w1_ref, b1_ref, w2_ref, vecs_ref,
                             w_out_ref, b_out_ref, o_ref,
                             *, num_layers, num_heads):
    # One batch element per grid step; all weights resident in VMEM.
    S, D = pe_ref.shape
    hd = D // num_heads
    scale = 1.0 / math.sqrt(hd)

    # Embedding Linear(1, D) + positional encoding (dropout p=0 -> identity).
    x = src_ref[0] * w_emb_ref[...] + b_emb_ref[...] + pe_ref[...]      # (S, D)

    for l in range(num_layers):                     # static unroll over layers
        # ---- multi-head self-attention: all heads batched, no lane slicing --
        xb = jnp.broadcast_to(x, (num_heads, S, D))                     # (H,S,D)
        q = jnp.einsum('hsd,hde->hse', xb, w_attn_ref[3 * l + 0],
                       preferred_element_type=jnp.float32) + b_attn_ref[3 * l + 0]
        k = jnp.einsum('hsd,hde->hse', xb, w_attn_ref[3 * l + 1],
                       preferred_element_type=jnp.float32) + b_attn_ref[3 * l + 1]
        v = jnp.einsum('hsd,hde->hse', xb, w_attn_ref[3 * l + 2],
                       preferred_element_type=jnp.float32) + b_attn_ref[3 * l + 2]

        s = jnp.einsum('hqe,hke->hqk', q * scale, k,
                       preferred_element_type=jnp.float32)              # (H,S,S)
        s = s - jnp.max(s, axis=-1, keepdims=True)
        p = jnp.exp(s)
        p = p * pl.reciprocal(jnp.sum(p, axis=-1, keepdims=True), approx=True)

        ctx = jnp.einsum('hqk,hke->hqe', p, v,
                         preferred_element_type=jnp.float32)            # (H,S,hd)
        attn = jnp.einsum('hqe,hed->hqd', ctx, wo_ref[l],
                          preferred_element_type=jnp.float32)           # (H,S,D)
        attn = jnp.sum(attn, axis=0) + vecs_ref[6 * l + 0]              # + b_o

        # residual + norm1 (dropout identity in eval mode)
        x = _layer_norm(x + attn, vecs_ref[6 * l + 1], vecs_ref[6 * l + 2])

        # ---- feed-forward ----
        h1 = jnp.dot(x, w1_ref[l], preferred_element_type=jnp.float32) + b1_ref[l]
        h1 = jnp.maximum(h1, 0.0)                                       # ReLU
        ff = (jnp.dot(h1, w2_ref[l], preferred_element_type=jnp.float32)
              + vecs_ref[6 * l + 3])

        # residual + norm2
        x = _layer_norm(x + ff, vecs_ref[6 * l + 4], vecs_ref[6 * l + 5])

    # Output Linear(D, 1) as an MXU matmul.
    o_ref[0] = (jnp.dot(x, w_out_ref[...], preferred_element_type=jnp.float32)
                + b_out_ref[...])


# ----------------------------------------------------------------------------
# Wrapper (single pallas_call for the whole forward pass)
# ----------------------------------------------------------------------------
def decoder_only_transformer_forward(src, kparams, *, num_layers, num_heads):
    """src: (B, S, 1) float32 -> (B, S, 1) float32."""
    B, S, _ = src.shape

    names = ('w_emb', 'b_emb', 'pe', 'w_attn', 'b_attn', 'wo',
             'w1', 'b1', 'w2', 'vecs', 'w_out', 'b_out')
    weights = [kparams[n] for n in names]

    def full_spec(a):
        nd = a.ndim
        return pl.BlockSpec(a.shape, lambda b, _nd=nd: (0,) * _nd)

    return pl.pallas_call(
        functools.partial(fused_transformer_kernel,
                          num_layers=num_layers, num_heads=num_heads),
        out_shape=jax.ShapeDtypeStruct((B, S, 1), jnp.float32),
        grid=(B,),
        in_specs=[pl.BlockSpec((1, S, 1), lambda b: (b, 0, 0))]
                + [full_spec(a) for a in weights],
        out_specs=pl.BlockSpec((1, S, 1), lambda b: (b, 0, 0)),
        compiler_params=pltpu.CompilerParams(
            dimension_semantics=("parallel",)),       # 2-way across v7x TCs
    )(src, *weights)


# ----------------------------------------------------------------------------
# Deterministic parameter construction, packing, and pure-JAX reference
# ----------------------------------------------------------------------------
def make_positional_encoding(d_model, max_len):
    position = jnp.arange(max_len, dtype=jnp.float32)[:, None]
    div_term = jnp.exp(jnp.arange(0, d_model, 2, dtype=jnp.float32)
                       * (-math.log(10000.0) / d_model))
    pe = jnp.zeros((max_len, d_model), dtype=jnp.float32)
    pe = pe.at[:, 0::2].set(jnp.sin(position * div_term))
    pe = pe.at[:, 1::2].set(jnp.cos(position * div_term))
    return pe


def init_params(key, d_model, num_layers, dim_ff, seq_len):
    def rnd(k, shape, fan_in):
        return (jax.random.normal(k, shape, jnp.float32)
                / math.sqrt(max(fan_in, 1)))

    keys = jax.random.split(key, 4 + 8 * num_layers)
    it = iter(keys)
    params = {
        "w_emb": rnd(next(it), (1, d_model), 1),          # Linear(1, D)
        "b_emb": rnd(next(it), (1, d_model), 1),
        "w_out": rnd(next(it), (d_model, 1), d_model),    # Linear(D, 1) column
        "b_out": rnd(next(it), (1, 1), d_model),
        "pe": make_positional_encoding(d_model, seq_len),
        "layers": [],
    }
    for _ in range(num_layers):
        params["layers"].append({
            "wqkv": rnd(next(it), (d_model, 3 * d_model), d_model),
            "bqkv": rnd(next(it), (1, 3 * d_model), d_model),
            "wo":   rnd(next(it), (d_model, d_model), d_model),
            "bo":   rnd(next(it), (1, d_model), d_model),
            "g1":   jnp.ones((1, d_model), jnp.float32),
            "be1":  jnp.zeros((1, d_model), jnp.float32),
            "w1":   rnd(next(it), (d_model, dim_ff), d_model),
            "bf1":  rnd(next(it), (1, dim_ff), d_model),
            "w2":   rnd(next(it), (dim_ff, d_model), dim_ff),
            "bf2":  rnd(next(it), (1, d_model), dim_ff),
            "g2":   jnp.ones((1, d_model), jnp.float32),
            "be2":  jnp.zeros((1, d_model), jnp.float32),
        })
    return params


def pack_params(params, num_heads):
    """Repack PyTorch-layout params into the head-split / layer-stacked layout
    the fused kernel consumes (13 arrays total)."""
    D = params["pe"].shape[1]
    hd = D // num_heads

    w_attn, b_attn, wo, w1, b1, w2, vecs = [], [], [], [], [], [], []
    for p in params["layers"]:
        # head h of projection i uses columns i*D + h*hd : i*D + (h+1)*hd
        w_attn.append(p["wqkv"].reshape(D, 3, num_heads, hd).transpose(1, 2, 0, 3))
        b_attn.append(p["bqkv"].reshape(3, num_heads, 1, hd))
        wo.append(p["wo"].reshape(num_heads, hd, D))       # rows h*hd:(h+1)*hd
        w1.append(p["w1"])
        b1.append(p["bf1"])
        w2.append(p["w2"])
        vecs.append(jnp.stack([p["bo"], p["g1"], p["be1"],
                               p["bf2"], p["g2"], p["be2"]], axis=0))   # (6,1,D)

    return {
        "w_emb": params["w_emb"], "b_emb": params["b_emb"], "pe": params["pe"],
        "w_out": params["w_out"], "b_out": params["b_out"],
        "w_attn": jnp.concatenate(w_attn, axis=0),   # (3L, H, D, hd)
        "b_attn": jnp.concatenate(b_attn, axis=0),   # (3L, H, 1, hd)
        "wo":     jnp.stack(wo, axis=0),             # (L, H, hd, D)
        "w1":     jnp.stack(w1, axis=0),             # (L, D, FF)
        "b1":     jnp.stack(b1, axis=0),             # (L, 1, FF)
        "w2":     jnp.stack(w2, axis=0),             # (L, FF, D)
        "vecs":   jnp.concatenate(vecs, axis=0),     # (6L, 1, D)
    }


def reference_forward(src, params, num_heads):
    """Pure-jnp reference of the same forward pass (eval-mode dropout)."""
    x = src * params["w_emb"] + params["b_emb"] + params["pe"][None]
    B, S, D = x.shape
    hd = D // num_heads
    for p in params["layers"]:
        qkv = x @ p["wqkv"] + p["bqkv"]
        q, k, v = jnp.split(qkv, 3, axis=-1)

        def split_heads(t):
            return t.reshape(B, S, num_heads, hd).transpose(0, 2, 1, 3)

        qh, kh, vh = split_heads(q), split_heads(k), split_heads(v)
        s = jnp.einsum("bhqd,bhkd->bhqk", qh, kh) / math.sqrt(hd)
        a = jax.nn.softmax(s, axis=-1)
        attn = jnp.einsum("bhqk,bhkd->bhqd", a, vh)
        attn = attn.transpose(0, 2, 1, 3).reshape(B, S, D)
        attn = attn @ p["wo"] + p["bo"]

        def ln(t, g, b, eps=1e-5):
            mu = jnp.mean(t, axis=-1, keepdims=True)
            var = jnp.mean((t - mu) ** 2, axis=-1, keepdims=True)
            return (t - mu) * jax.lax.rsqrt(var + eps) * g + b

        x = ln(x + attn, p["g1"], p["be1"])
        ff = jnp.maximum(x @ p["w1"] + p["bf1"], 0.0) @ p["w2"] + p["bf2"]
        x = ln(x + ff, p["g2"], p["be2"])
    return x @ params["w_out"] + params["b_out"]


# ----------------------------------------------------------------------------
if __name__ == "__main__":
    # model_params analogue: d_model=32, num_heads=4, num_layers=2,
    # dim_feedforward=64, block_size(seq)=8, batch=2, input feature dim=1.
    B, S, D, H, L, FF = 2, 8, 32, 4, 2, 64

    key = jax.random.PRNGKey(0)
    k_x, k_p = jax.random.split(key)
    src = jax.random.normal(k_x, (B, S, 1), jnp.float32)
    params = init_params(k_p, D, L, FF, S)
    kparams = pack_params(params, H)

    out = decoder_only_transformer_forward(src, kparams,
                                           num_layers=L, num_heads=H)
    out = jax.block_until_ready(out)

    ref = reference_forward(src, params, H)
    assert out.shape == (B, S, 1)
    # Slightly looser tolerance than exact: softmax denominators use the
    # EUP approximate reciprocal (pl.reciprocal(..., approx=True)).
    assert jnp.allclose(out, ref, rtol=2e-3, atol=2e-3), "mismatch vs reference"

    print("KERNEL_OK")
</pallas_src>

<mosaic_0001>
module attributes {stable_mosaic.version = 11 : i64} {
  func.func @fused_transformer_kernel(%arg0: i32, %arg1: memref<1x8x1xf32, #tpu.memory_space<vmem>>, %arg2: memref<1x32xf32, #tpu.memory_space<vmem>>, %arg3: memref<1x32xf32, #tpu.memory_space<vmem>>, %arg4: memref<8x32xf32, #tpu.memory_space<vmem>>, %arg5: memref<6x4x32x8xf32, #tpu.memory_space<vmem>>, %arg6: memref<6x4x1x8xf32, #tpu.memory_space<vmem>>, %arg7: memref<2x4x8x32xf32, #tpu.memory_space<vmem>>, %arg8: memref<2x32x64xf32, #tpu.memory_space<vmem>>, %arg9: memref<2x1x64xf32, #tpu.memory_space<vmem>>, %arg10: memref<2x64x32xf32, #tpu.memory_space<vmem>>, %arg11: memref<12x1x32xf32, #tpu.memory_space<vmem>>, %arg12: memref<32x1xf32, #tpu.memory_space<vmem>>, %arg13: memref<1x1xf32, #tpu.memory_space<vmem>>, %arg14: memref<1x8x1xf32, #tpu.memory_space<vmem>>) attributes {dimension_semantics = [#tpu.dimension_semantics<parallel>], iteration_bounds = array<i64: 2>, scalar_prefetch = 0 : i64, scratch_operands = 0 : i64, tpu.core_type = #tpu.core_type<tc>, window_params = [{transform_indices = @transform_0, window_bounds = array<i64: 1, 8, 1>}, {pipeline_mode = #tpu.pipeline_mode<synchronous>, transform_indices = @transform_1, window_bounds = array<i64: 1, 32>}, {pipeline_mode = #tpu.pipeline_mode<synchronous>, transform_indices = @transform_2, window_bounds = array<i64: 1, 32>}, {pipeline_mode = #tpu.pipeline_mode<synchronous>, transform_indices = @transform_3, window_bounds = array<i64: 8, 32>}, {pipeline_mode = #tpu.pipeline_mode<synchronous>, transform_indices = @transform_4, window_bounds = array<i64: 6, 4, 32, 8>}, {pipeline_mode = #tpu.pipeline_mode<synchronous>, transform_indices = @transform_5, window_bounds = array<i64: 6, 4, 1, 8>}, {pipeline_mode = #tpu.pipeline_mode<synchronous>, transform_indices = @transform_6, window_bounds = array<i64: 2, 4, 8, 32>}, {pipeline_mode = #tpu.pipeline_mode<synchronous>, transform_indices = @transform_7, window_bounds = array<i64: 2, 32, 64>}, {pipeline_mode = #tpu.pipeline_mode<synchronous>, transform_indices = @transform_8, window_bounds = array<i64: 2, 1, 64>}, {pipeline_mode = #tpu.pipeline_mode<synchronous>, transform_indices = @transform_9, window_bounds = array<i64: 2, 64, 32>}, {pipeline_mode = #tpu.pipeline_mode<synchronous>, transform_indices = @transform_10, window_bounds = array<i64: 12, 1, 32>}, {pipeline_mode = #tpu.pipeline_mode<synchronous>, transform_indices = @transform_11, window_bounds = array<i64: 32, 1>}, {pipeline_mode = #tpu.pipeline_mode<synchronous>, transform_indices = @transform_12, window_bounds = array<i64: 1, 1>}, {transform_indices = @transform_13, window_bounds = array<i64: 1, 8, 1>}]} {
    %c0 = arith.constant 0 : index
    %c0_0 = arith.constant 0 : index
    %c0_1 = arith.constant 0 : index
    %0 = vector.load %arg1[%c0, %c0_0, %c0_1] : memref<1x8x1xf32, #tpu.memory_space<vmem>>, vector<1x8x1xf32>
    %1 = vector.shape_cast %0 : vector<1x8x1xf32> to vector<8x1xf32>
    %c0_2 = arith.constant 0 : index
    %c0_3 = arith.constant 0 : index
    %2 = vector.load %arg2[%c0_2, %c0_3] : memref<1x32xf32, #tpu.memory_space<vmem>>, vector<1x32xf32>
    %3 = vector.broadcast %1 : vector<8x1xf32> to vector<8x32xf32>
    %4 = vector.broadcast %2 : vector<1x32xf32> to vector<8x32xf32>
    %5 = arith.mulf %3, %4 : vector<8x32xf32>
    %c0_4 = arith.constant 0 : index
    %c0_5 = arith.constant 0 : index
    %6 = vector.load %arg3[%c0_4, %c0_5] : memref<1x32xf32, #tpu.memory_space<vmem>>, vector<1x32xf32>
    %7 = vector.broadcast %6 : vector<1x32xf32> to vector<8x32xf32>
    %8 = arith.addf %5, %7 : vector<8x32xf32>
    %c0_6 = arith.constant 0 : index
    %c0_7 = arith.constant 0 : index
    %9 = vector.load %arg4[%c0_6, %c0_7] : memref<8x32xf32, #tpu.memory_space<vmem>>, vector<8x32xf32>
    %10 = arith.addf %8, %9 : vector<8x32xf32>
    %11 = vector.shape_cast %10 : vector<8x32xf32> to vector<1x8x32xf32>
    %12 = vector.broadcast %11 : vector<1x8x32xf32> to vector<4x8x32xf32>
    %c0_8 = arith.constant 0 : index
    %c0_9 = arith.constant 0 : index
    %c0_10 = arith.constant 0 : index
    %c0_11 = arith.constant 0 : index
    %13 = vector.load %arg5[%c0_8, %c0_9, %c0_10, %c0_11] : memref<6x4x32x8xf32, #tpu.memory_space<vmem>>, vector<1x4x32x8xf32>
    %14 = vector.shape_cast %13 : vector<1x4x32x8xf32> to vector<4x32x8xf32>
    "tpu.trace_start"() <{level = 10 : i32, message = "hsd,hde->hse"}> : () -> ()
    %cst = arith.constant dense<0.000000e+00> : vector<4x8x8xf32>
    %15 = tpu.matmul %12, %14, %cst {dimension_numbers = #tpu.dot_dimension_numbers<[2], [1], [1], [2], [0, 0, 0, 1, 1, 2], [0], [0]>} : vector<4x8x32xf32>, vector<4x32x8xf32>, vector<4x8x8xf32> -> vector<4x8x8xf32>
    "tpu.trace_stop"() : () -> ()
    %c0_12 = arith.constant 0 : index
    %c0_13 = arith.constant 0 : index
    %c0_14 = arith.constant 0 : index
    %c0_15 = arith.constant 0 : index
    %16 = vector.load %arg6[%c0_12, %c0_13, %c0_14, %c0_15] : memref<6x4x1x8xf32, #tpu.memory_space<vmem>>, vector<1x4x1x8xf32>
    %17 = vector.shape_cast %16 : vector<1x4x1x8xf32> to vector<4x1x8xf32>
    %18 = vector.broadcast %17 : vector<4x1x8xf32> to vector<4x8x8xf32>
    %19 = arith.addf %15, %18 : vector<4x8x8xf32>
    %c1 = arith.constant 1 : index
    %c0_16 = arith.constant 0 : index
    %c0_17 = arith.constant 0 : index
    %c0_18 = arith.constant 0 : index
    %20 = vector.load %arg5[%c1, %c0_16, %c0_17, %c0_18] : memref<6x4x32x8xf32, #tpu.memory_space<vmem>>, vector<1x4x32x8xf32>
    %21 = vector.shape_cast %20 : vector<1x4x32x8xf32> to vector<4x32x8xf32>
    "tpu.trace_start"() <{level = 10 : i32, message = "hsd,hde->hse"}> : () -> ()
    %cst_19 = arith.constant dense<0.000000e+00> : vector<4x8x8xf32>
    %22 = tpu.matmul %12, %21, %cst_19 {dimension_numbers = #tpu.dot_dimension_numbers<[2], [1], [1], [2], [0, 0, 0, 1, 1, 2], [0], [0]>} : vector<4x8x32xf32>, vector<4x32x8xf32>, vector<4x8x8xf32> -> vector<4x8x8xf32>
    "tpu.trace_stop"() : () -> ()
    %c1_20 = arith.constant 1 : index
    %c0_21 = arith.constant 0 : index
    %c0_22 = arith.constant 0 : index
    %c0_23 = arith.constant 0 : index
    %23 = vector.load %arg6[%c1_20, %c0_21, %c0_22, %c0_23] : memref<6x4x1x8xf32, #tpu.memory_space<vmem>>, vector<1x4x1x8xf32>
    %24 = vector.shape_cast %23 : vector<1x4x1x8xf32> to vector<4x1x8xf32>
    %25 = vector.broadcast %24 : vector<4x1x8xf32> to vector<4x8x8xf32>
    %26 = arith.addf %22, %25 : vector<4x8x8xf32>
    %c2 = arith.constant 2 : index
    %c0_24 = arith.constant 0 : index
    %c0_25 = arith.constant 0 : index
    %c0_26 = arith.constant 0 : index
    %27 = vector.load %arg5[%c2, %c0_24, %c0_25, %c0_26] : memref<6x4x32x8xf32, #tpu.memory_space<vmem>>, vector<1x4x32x8xf32>
    %28 = vector.shape_cast %27 : vector<1x4x32x8xf32> to vector<4x32x8xf32>
    "tpu.trace_start"() <{level = 10 : i32, message = "hsd,hde->hse"}> : () -> ()
    %cst_27 = arith.constant dense<0.000000e+00> : vector<4x8x8xf32>
    %29 = tpu.matmul %12, %28, %cst_27 {dimension_numbers = #tpu.dot_dimension_numbers<[2], [1], [1], [2], [0, 0, 0, 1, 1, 2], [0], [0]>} : vector<4x8x32xf32>, vector<4x32x8xf32>, vector<4x8x8xf32> -> vector<4x8x8xf32>
    "tpu.trace_stop"() : () -> ()
    %c2_28 = arith.constant 2 : index
    %c0_29 = arith.constant 0 : index
    %c0_30 = arith.constant 0 : index
    %c0_31 = arith.constant 0 : index
    %30 = vector.load %arg6[%c2_28, %c0_29, %c0_30, %c0_31] : memref<6x4x1x8xf32, #tpu.memory_space<vmem>>, vector<1x4x1x8xf32>
    %31 = vector.shape_cast %30 : vector<1x4x1x8xf32> to vector<4x1x8xf32>
    %32 = vector.broadcast %31 : vector<4x1x8xf32> to vector<4x8x8xf32>
    %33 = arith.addf %29, %32 : vector<4x8x8xf32>
    %cst_32 = arith.constant 0.353553385 : f32
    %34 = vector.broadcast %cst_32 : f32 to vector<4x8x8xf32>
    %35 = arith.mulf %19, %34 : vector<4x8x8xf32>
    "tpu.trace_start"() <{level = 10 : i32, message = "hqe,hke->hqk"}> : () -> ()
    %cst_33 = arith.constant dense<0.000000e+00> : vector<4x8x8xf32>
    %36 = tpu.matmul %35, %26, %cst_33 {dimension_numbers = #tpu.dot_dimension_numbers<[2], [2], [1], [1], [0, 0, 0, 1, 1, 1], [0], [0]>} : vector<4x8x8xf32>, vector<4x8x8xf32>, vector<4x8x8xf32> -> vector<4x8x8xf32>
    "tpu.trace_stop"() : () -> ()
    %cst_34 = arith.constant dense<0xFF800000> : vector<4x8xf32>
    %37 = vector.multi_reduction <maximumf>, %36, %cst_34 [2] : vector<4x8x8xf32> to vector<4x8xf32>
    %38 = vector.shape_cast %37 : vector<4x8xf32> to vector<4x8x1xf32>
    %39 = vector.broadcast %38 : vector<4x8x1xf32> to vector<4x8x8xf32>
    %40 = arith.subf %36, %39 : vector<4x8x8xf32>
    %41 = math.exp %40 : vector<4x8x8xf32>
    %cst_35 = arith.constant dense<0.000000e+00> : vector<4x8xf32>
    %42 = vector.multi_reduction <add>, %41, %cst_35 [2] : vector<4x8x8xf32> to vector<4x8xf32>
    %43 = vector.shape_cast %42 : vector<4x8xf32> to vector<4x8x1xf32>
    %44 = tpu.reciprocal %43 {approx = true} : vector<4x8x1xf32> -> vector<4x8x1xf32>
    %45 = vector.broadcast %44 : vector<4x8x1xf32> to vector<4x8x8xf32>
    %46 = arith.mulf %41, %45 : vector<4x8x8xf32>
    "tpu.trace_start"() <{level = 10 : i32, message = "hqk,hke->hqe"}> : () -> ()
    %cst_36 = arith.constant dense<0.000000e+00> : vector<4x8x8xf32>
    %47 = tpu.matmul %46, %33, %cst_36 {dimension_numbers = #tpu.dot_dimension_numbers<[2], [1], [1], [2], [0, 0, 0, 1, 1, 2], [0], [0]>} : vector<4x8x8xf32>, vector<4x8x8xf32>, vector<4x8x8xf32> -> vector<4x8x8xf32>
    "tpu.trace_stop"() : () -> ()
    %c0_37 = arith.constant 0 : index
    %c0_38 = arith.constant 0 : index
    %c0_39 = arith.constant 0 : index
    %c0_40 = arith.constant 0 : index
    %48 = vector.load %arg7[%c0_37, %c0_38, %c0_39, %c0_40] : memref<2x4x8x32xf32, #tpu.memory_space<vmem>>, vector<1x4x8x32xf32>
    %49 = vector.shape_cast %48 : vector<1x4x8x32xf32> to vector<4x8x32xf32>
    "tpu.trace_start"() <{level = 10 : i32, message = "hqe,hed->hqd"}> : () -> ()
    %cst_41 = arith.constant dense<0.000000e+00> : vector<4x8x32xf32>
    %50 = tpu.matmul %47, %49, %cst_41 {dimension_numbers = #tpu.dot_dimension_numbers<[2], [1], [1], [2], [0, 0, 0, 1, 1, 2], [0], [0]>} : vector<4x8x8xf32>, vector<4x8x32xf32>, vector<4x8x32xf32> -> vector<4x8x32xf32>
    "tpu.trace_stop"() : () -> ()
    %cst_42 = arith.constant dense<0.000000e+00> : vector<8x32xf32>
    %51 = vector.multi_reduction <add>, %50, %cst_42 [0] : vector<4x8x32xf32> to vector<8x32xf32>
    %c0_43 = arith.constant 0 : index
    %c0_44 = arith.constant 0 : index
    %c0_45 = arith.constant 0 : index
    %52 = vector.load %arg11[%c0_43, %c0_44, %c0_45] : memref<12x1x32xf32, #tpu.memory_space<vmem>>, vector<1x1x32xf32>
    %53 = vector.shape_cast %52 : vector<1x1x32xf32> to vector<1x32xf32>
    %54 = vector.broadcast %53 : vector<1x32xf32> to vector<8x32xf32>
    %55 = arith.addf %51, %54 : vector<8x32xf32>
    %56 = arith.addf %10, %55 : vector<8x32xf32>
    %c1_46 = arith.constant 1 : index
    %c0_47 = arith.constant 0 : index
    %c0_48 = arith.constant 0 : index
    %57 = vector.load %arg11[%c1_46, %c0_47, %c0_48] : memref<12x1x32xf32, #tpu.memory_space<vmem>>, vector<1x1x32xf32>
    %58 = vector.shape_cast %57 : vector<1x1x32xf32> to vector<1x32xf32>
    %c2_49 = arith.constant 2 : index
    %c0_50 = arith.constant 0 : index
    %c0_51 = arith.constant 0 : index
    %59 = vector.load %arg11[%c2_49, %c0_50, %c0_51] : memref<12x1x32xf32, #tpu.memory_space<vmem>>, vector<1x1x32xf32>
    %60 = vector.shape_cast %59 : vector<1x1x32xf32> to vector<1x32xf32>
    %cst_52 = arith.constant dense<0.000000e+00> : vector<8xf32>
    %61 = vector.multi_reduction <add>, %56, %cst_52 [1] : vector<8x32xf32> to vector<8xf32>
    %62 = vector.shape_cast %61 : vector<8xf32> to vector<8x1xf32>
    %cst_53 = arith.constant 3.200000e+01 : f32
    %63 = vector.broadcast %cst_53 : f32 to vector<8x1xf32>
    %64 = arith.divf %62, %63 : vector<8x1xf32>
    %65 = vector.broadcast %64 : vector<8x1xf32> to vector<8x32xf32>
    %66 = arith.subf %56, %65 : vector<8x32xf32>
    %67 = arith.mulf %66, %66 : vector<8x32xf32>
    %cst_54 = arith.constant dense<0.000000e+00> : vector<8xf32>
    %68 = vector.multi_reduction <add>, %67, %cst_54 [1] : vector<8x32xf32> to vector<8xf32>
    %69 = vector.shape_cast %68 : vector<8xf32> to vector<8x1xf32>
    %cst_55 = arith.constant 3.200000e+01 : f32
    %70 = vector.broadcast %cst_55 : f32 to vector<8x1xf32>
    %71 = arith.divf %69, %70 : vector<8x1xf32>
    %72 = vector.broadcast %64 : vector<8x1xf32> to vector<8x32xf32>
    %73 = arith.subf %56, %72 : vector<8x32xf32>
    %cst_56 = arith.constant 9.99999974E-6 : f32
    %74 = vector.broadcast %cst_56 : f32 to vector<8x1xf32>
    %75 = arith.addf %71, %74 : vector<8x1xf32>
    %76 = math.rsqrt %75 : vector<8x1xf32>
    %77 = vector.broadcast %76 : vector<8x1xf32> to vector<8x32xf32>
    %78 = arith.mulf %73, %77 : vector<8x32xf32>
    %79 = vector.broadcast %58 : vector<1x32xf32> to vector<8x32xf32>
    %80 = arith.mulf %78, %79 : vector<8x32xf32>
    %81 = vector.broadcast %60 : vector<1x32xf32> to vector<8x32xf32>
    %82 = arith.addf %80, %81 : vector<8x32xf32>
    %c0_57 = arith.constant 0 : index
    %c0_58 = arith.constant 0 : index
    %c0_59 = arith.constant 0 : index
    %83 = vector.load %arg8[%c0_57, %c0_58, %c0_59] : memref<2x32x64xf32, #tpu.memory_space<vmem>>, vector<1x32x64xf32>
    %84 = vector.shape_cast %83 : vector<1x32x64xf32> to vector<32x64xf32>
    %cst_60 = arith.constant dense<0.000000e+00> : vector<8x64xf32>
    %85 = tpu.matmul %82, %84, %cst_60 {dimension_numbers = #tpu.dot_dimension_numbers<[1], [0], [0], [1], [0, 0, 1, 1], [], []>} : vector<8x32xf32>, vector<32x64xf32>, vector<8x64xf32> -> vector<8x64xf32>
    %c0_61 = arith.constant 0 : index
    %c0_62 = arith.constant 0 : index
    %c0_63 = arith.constant 0 : index
    %86 = vector.load %arg9[%c0_61, %c0_62, %c0_63] : memref<2x1x64xf32, #tpu.memory_space<vmem>>, vector<1x1x64xf32>
    %87 = vector.shape_cast %86 : vector<1x1x64xf32> to vector<1x64xf32>
    %88 = vector.broadcast %87 : vector<1x64xf32> to vector<8x64xf32>
    %89 = arith.addf %85, %88 : vector<8x64xf32>
    %cst_64 = arith.constant 0.000000e+00 : f32
    %90 = vector.broadcast %cst_64 : f32 to vector<8x64xf32>
    %91 = arith.maximumf %89, %90 : vector<8x64xf32>
    %c0_65 = arith.constant 0 : index
    %c0_66 = arith.constant 0 : index
    %c0_67 = arith.constant 0 : index
    %92 = vector.load %arg10[%c0_65, %c0_66, %c0_67] : memref<2x64x32xf32, #tpu.memory_space<vmem>>, vector<1x64x32xf32>
    %93 = vector.shape_cast %92 : vector<1x64x32xf32> to vector<64x32xf32>
    %cst_68 = arith.constant dense<0.000000e+00> : vector<8x32xf32>
    %94 = tpu.matmul %91, %93, %cst_68 {dimension_numbers = #tpu.dot_dimension_numbers<[1], [0], [0], [1], [0, 0, 1, 1], [], []>} : vector<8x64xf32>, vector<64x32xf32>, vector<8x32xf32> -> vector<8x32xf32>
    %c3 = arith.constant 3 : index
    %c0_69 = arith.constant 0 : index
    %c0_70 = arith.constant 0 : index
    %95 = vector.load %arg11[%c3, %c0_69, %c0_70] : memref<12x1x32xf32, #tpu.memory_space<vmem>>, vector<1x1x32xf32>
    %96 = vector.shape_cast %95 : vector<1x1x32xf32> to vector<1x32xf32>
    %97 = vector.broadcast %96 : vector<1x32xf32> to vector<8x32xf32>
    %98 = arith.addf %94, %97 : vector<8x32xf32>
    %99 = arith.addf %82, %98 : vector<8x32xf32>
    %c4 = arith.constant 4 : index
    %c0_71 = arith.constant 0 : index
    %c0_72 = arith.constant 0 : index
    %100 = vector.load %arg11[%c4, %c0_71, %c0_72] : memref<12x1x32xf32, #tpu.memory_space<vmem>>, vector<1x1x32xf32>
    %101 = vector.shape_cast %100 : vector<1x1x32xf32> to vector<1x32xf32>
    %c5 = arith.constant 5 : index
    %c0_73 = arith.constant 0 : index
    %c0_74 = arith.constant 0 : index
    %102 = vector.load %arg11[%c5, %c0_73, %c0_74] : memref<12x1x32xf32, #tpu.memory_space<vmem>>, vector<1x1x32xf32>
    %103 = vector.shape_cast %102 : vector<1x1x32xf32> to vector<1x32xf32>
    %cst_75 = arith.constant dense<0.000000e+00> : vector<8xf32>
    %104 = vector.multi_reduction <add>, %99, %cst_75 [1] : vector<8x32xf32> to vector<8xf32>
    %105 = vector.shape_cast %104 : vector<8xf32> to vector<8x1xf32>
    %cst_76 = arith.constant 3.200000e+01 : f32
    %106 = vector.broadcast %cst_76 : f32 to vector<8x1xf32>
    %107 = arith.divf %105, %106 : vector<8x1xf32>
    %108 = vector.broadcast %107 : vector<8x1xf32> to vector<8x32xf32>
    %109 = arith.subf %99, %108 : vector<8x32xf32>
    %110 = arith.mulf %109, %109 : vector<8x32xf32>
    %cst_77 = arith.constant dense<0.000000e+00> : vector<8xf32>
    %111 = vector.multi_reduction <add>, %110, %cst_77 [1] : vector<8x32xf32> to vector<8xf32>
    %112 = vector.shape_cast %111 : vector<8xf32> to vector<8x1xf32>
    %cst_78 = arith.constant 3.200000e+01 : f32
    %113 = vector.broadcast %cst_78 : f32 to vector<8x1xf32>
    %114 = arith.divf %112, %113 : vector<8x1xf32>
    %115 = vector.broadcast %107 : vector<8x1xf32> to vector<8x32xf32>
    %116 = arith.subf %99, %115 : vector<8x32xf32>
    %cst_79 = arith.constant 9.99999974E-6 : f32
    %117 = vector.broadcast %cst_79 : f32 to vector<8x1xf32>
    %118 = arith.addf %114, %117 : vector<8x1xf32>
    %119 = math.rsqrt %118 : vector<8x1xf32>
    %120 = vector.broadcast %119 : vector<8x1xf32> to vector<8x32xf32>
    %121 = arith.mulf %116, %120 : vector<8x32xf32>
    %122 = vector.broadcast %101 : vector<1x32xf32> to vector<8x32xf32>
    %123 = arith.mulf %121, %122 : vector<8x32xf32>
    %124 = vector.broadcast %103 : vector<1x32xf32> to vector<8x32xf32>
    %125 = arith.addf %123, %124 : vector<8x32xf32>
    %126 = vector.shape_cast %125 : vector<8x32xf32> to vector<1x8x32xf32>
    %127 = vector.broadcast %126 : vector<1x8x32xf32> to vector<4x8x32xf32>
    %c3_80 = arith.constant 3 : index
    %c0_81 = arith.constant 0 : index
    %c0_82 = arith.constant 0 : index
    %c0_83 = arith.constant 0 : index
    %128 = vector.load %arg5[%c3_80, %c0_81, %c0_82, %c0_83] : memref<6x4x32x8xf32, #tpu.memory_space<vmem>>, vector<1x4x32x8xf32>
    %129 = vector.shape_cast %128 : vector<1x4x32x8xf32> to vector<4x32x8xf32>
    "tpu.trace_start"() <{level = 10 : i32, message = "hsd,hde->hse"}> : () -> ()
    %cst_84 = arith.constant dense<0.000000e+00> : vector<4x8x8xf32>
    %130 = tpu.matmul %127, %129, %cst_84 {dimension_numbers = #tpu.dot_dimension_numbers<[2], [1], [1], [2], [0, 0, 0, 1, 1, 2], [0], [0]>} : vector<4x8x32xf32>, vector<4x32x8xf32>, vector<4x8x8xf32> -> vector<4x8x8xf32>
    "tpu.trace_stop"() : () -> ()
    %c3_85 = arith.constant 3 : index
    %c0_86 = arith.constant 0 : index
    %c0_87 = arith.constant 0 : index
    %c0_88 = arith.constant 0 : index
    %131 = vector.load %arg6[%c3_85, %c0_86, %c0_87, %c0_88] : memref<6x4x1x8xf32, #tpu.memory_space<vmem>>, vector<1x4x1x8xf32>
    %132 = vector.shape_cast %131 : vector<1x4x1x8xf32> to vector<4x1x8xf32>
    %133 = vector.broadcast %132 : vector<4x1x8xf32> to vector<4x8x8xf32>
    %134 = arith.addf %130, %133 : vector<4x8x8xf32>
    %c4_89 = arith.constant 4 : index
    %c0_90 = arith.constant 0 : index
    %c0_91 = arith.constant 0 : index
    %c0_92 = arith.constant 0 : index
    %135 = vector.load %arg5[%c4_89, %c0_90, %c0_91, %c0_92] : memref<6x4x32x8xf32, #tpu.memory_space<vmem>>, vector<1x4x32x8xf32>
    %136 = vector.shape_cast %135 : vector<1x4x32x8xf32> to vector<4x32x8xf32>
    "tpu.trace_start"() <{level = 10 : i32, message = "hsd,hde->hse"}> : () -> ()
    %cst_93 = arith.constant dense<0.000000e+00> : vector<4x8x8xf32>
    %137 = tpu.matmul %127, %136, %cst_93 {dimension_numbers = #tpu.dot_dimension_numbers<[2], [1], [1], [2], [0, 0, 0, 1, 1, 2], [0], [0]>} : vector<4x8x32xf32>, vector<4x32x8xf32>, vector<4x8x8xf32> -> vector<4x8x8xf32>
    "tpu.trace_stop"() : () -> ()
    %c4_94 = arith.constant 4 : index
    %c0_95 = arith.constant 0 : index
    %c0_96 = arith.constant 0 : index
    %c0_97 = arith.constant 0 : index
    %138 = vector.load %arg6[%c4_94, %c0_95, %c0_96, %c0_97] : memref<6x4x1x8xf32, #tpu.memory_space<vmem>>, vector<1x4x1x8xf32>
    %139 = vector.shape_cast %138 : vector<1x4x1x8xf32> to vector<4x1x8xf32>
    %140 = vector.broadcast %139 : vector<4x1x8xf32> to vector<4x8x8xf32>
    %141 = arith.addf %137, %140 : vector<4x8x8xf32>
    %c5_98 = arith.constant 5 : index
    %c0_99 = arith.constant 0 : index
    %c0_100 = arith.constant 0 : index
    %c0_101 = arith.constant 0 : index
    %142 = vector.load %arg5[%c5_98, %c0_99, %c0_100, %c0_101] : memref<6x4x32x8xf32, #tpu.memory_space<vmem>>, vector<1x4x32x8xf32>
    %143 = vector.shape_cast %142 : vector<1x4x32x8xf32> to vector<4x32x8xf32>
    "tpu.trace_start"() <{level = 10 : i32, message = "hsd,hde->hse"}> : () -> ()
    %cst_102 = arith.constant dense<0.000000e+00> : vector<4x8x8xf32>
    %144 = tpu.matmul %127, %143, %cst_102 {dimension_numbers = #tpu.dot_dimension_numbers<[2], [1], [1], [2], [0, 0, 0, 1, 1, 2], [0], [0]>} : vector<4x8x32xf32>, vector<4x32x8xf32>, vector<4x8x8xf32> -> vector<4x8x8xf32>
    "tpu.trace_stop"() : () -> ()
    %c5_103 = arith.constant 5 : index
    %c0_104 = arith.constant 0 : index
    %c0_105 = arith.constant 0 : index
    %c0_106 = arith.constant 0 : index
    %145 = vector.load %arg6[%c5_103, %c0_104, %c0_105, %c0_106] : memref<6x4x1x8xf32, #tpu.memory_space<vmem>>, vector<1x4x1x8xf32>
    %146 = vector.shape_cast %145 : vector<1x4x1x8xf32> to vector<4x1x8xf32>
    %147 = vector.broadcast %146 : vector<4x1x8xf32> to vector<4x8x8xf32>
    %148 = arith.addf %144, %147 : vector<4x8x8xf32>
    %cst_107 = arith.constant 0.353553385 : f32
    %149 = vector.broadcast %cst_107 : f32 to vector<4x8x8xf32>
    %150 = arith.mulf %134, %149 : vector<4x8x8xf32>
    "tpu.trace_start"() <{level = 10 : i32, message = "hqe,hke->hqk"}> : () -> ()
    %cst_108 = arith.constant dense<0.000000e+00> : vector<4x8x8xf32>
    %151 = tpu.matmul %150, %141, %cst_108 {dimension_numbers = #tpu.dot_dimension_numbers<[2], [2], [1], [1], [0, 0, 0, 1, 1, 1], [0], [0]>} : vector<4x8x8xf32>, vector<4x8x8xf32>, vector<4x8x8xf32> -> vector<4x8x8xf32>
    "tpu.trace_stop"() : () -> ()
    %cst_109 = arith.constant dense<0xFF800000> : vector<4x8xf32>
    %152 = vector.multi_reduction <maximumf>, %151, %cst_109 [2] : vector<4x8x8xf32> to vector<4x8xf32>
    %153 = vector.shape_cast %152 : vector<4x8xf32> to vector<4x8x1xf32>
    %154 = vector.broadcast %153 : vector<4x8x1xf32> to vector<4x8x8xf32>
    %155 = arith.subf %151, %154 : vector<4x8x8xf32>
    %156 = math.exp %155 : vector<4x8x8xf32>
    %cst_110 = arith.constant dense<0.000000e+00> : vector<4x8xf32>
    %157 = vector.multi_reduction <add>, %156, %cst_110 [2] : vector<4x8x8xf32> to vector<4x8xf32>
    %158 = vector.shape_cast %157 : vector<4x8xf32> to vector<4x8x1xf32>
    %159 = tpu.reciprocal %158 {approx = true} : vector<4x8x1xf32> -> vector<4x8x1xf32>
    %160 = vector.broadcast %159 : vector<4x8x1xf32> to vector<4x8x8xf32>
    %161 = arith.mulf %156, %160 : vector<4x8x8xf32>
    "tpu.trace_start"() <{level = 10 : i32, message = "hqk,hke->hqe"}> : () -> ()
    %cst_111 = arith.constant dense<0.000000e+00> : vector<4x8x8xf32>
    %162 = tpu.matmul %161, %148, %cst_111 {dimension_numbers = #tpu.dot_dimension_numbers<[2], [1], [1], [2], [0, 0, 0, 1, 1, 2], [0], [0]>} : vector<4x8x8xf32>, vector<4x8x8xf32>, vector<4x8x8xf32> -> vector<4x8x8xf32>
    "tpu.trace_stop"() : () -> ()
    %c1_112 = arith.constant 1 : index
    %c0_113 = arith.constant 0 : index
    %c0_114 = arith.constant 0 : index
    %c0_115 = arith.constant 0 : index
    %163 = vector.load %arg7[%c1_112, %c0_113, %c0_114, %c0_115] : memref<2x4x8x32xf32, #tpu.memory_space<vmem>>, vector<1x4x8x32xf32>
    %164 = vector.shape_cast %163 : vector<1x4x8x32xf32> to vector<4x8x32xf32>
    "tpu.trace_start"() <{level = 10 : i32, message = "hqe,hed->hqd"}> : () -> ()
    %cst_116 = arith.constant dense<0.000000e+00> : vector<4x8x32xf32>
    %165 = tpu.matmul %162, %164, %cst_116 {dimension_numbers = #tpu.dot_dimension_numbers<[2], [1], [1], [2], [0, 0, 0, 1, 1, 2], [0], [0]>} : vector<4x8x8xf32>, vector<4x8x32xf32>, vector<4x8x32xf32> -> vector<4x8x32xf32>
    "tpu.trace_stop"() : () -> ()
    %cst_117 = arith.constant dense<0.000000e+00> : vector<8x32xf32>
    %166 = vector.multi_reduction <add>, %165, %cst_117 [0] : vector<4x8x32xf32> to vector<8x32xf32>
    %c6 = arith.constant 6 : index
    %c0_118 = arith.constant 0 : index
    %c0_119 = arith.constant 0 : index
    %167 = vector.load %arg11[%c6, %c0_118, %c0_119] : memref<12x1x32xf32, #tpu.memory_space<vmem>>, vector<1x1x32xf32>
    %168 = vector.shape_cast %167 : vector<1x1x32xf32> to vector<1x32xf32>
    %169 = vector.broadcast %168 : vector<1x32xf32> to vector<8x32xf32>
    %170 = arith.addf %166, %169 : vector<8x32xf32>
    %171 = arith.addf %125, %170 : vector<8x32xf32>
    %c7 = arith.constant 7 : index
    %c0_120 = arith.constant 0 : index
    %c0_121 = arith.constant 0 : index
    %172 = vector.load %arg11[%c7, %c0_120, %c0_121] : memref<12x1x32xf32, #tpu.memory_space<vmem>>, vector<1x1x32xf32>
    %173 = vector.shape_cast %172 : vector<1x1x32xf32> to vector<1x32xf32>
    %c8 = arith.constant 8 : index
    %c0_122 = arith.constant 0 : index
    %c0_123 = arith.constant 0 : index
    %174 = vector.load %arg11[%c8, %c0_122, %c0_123] : memref<12x1x32xf32, #tpu.memory_space<vmem>>, vector<1x1x32xf32>
    %175 = vector.shape_cast %174 : vector<1x1x32xf32> to vector<1x32xf32>
    %cst_124 = arith.constant dense<0.000000e+00> : vector<8xf32>
    %176 = vector.multi_reduction <add>, %171, %cst_124 [1] : vector<8x32xf32> to vector<8xf32>
    %177 = vector.shape_cast %176 : vector<8xf32> to vector<8x1xf32>
    %cst_125 = arith.constant 3.200000e+01 : f32
    %178 = vector.broadcast %cst_125 : f32 to vector<8x1xf32>
    %179 = arith.divf %177, %178 : vector<8x1xf32>
    %180 = vector.broadcast %179 : vector<8x1xf32> to vector<8x32xf32>
    %181 = arith.subf %171, %180 : vector<8x32xf32>
    %182 = arith.mulf %181, %181 : vector<8x32xf32>
    %cst_126 = arith.constant dense<0.000000e+00> : vector<8xf32>
    %183 = vector.multi_reduction <add>, %182, %cst_126 [1] : vector<8x32xf32> to vector<8xf32>
    %184 = vector.shape_cast %183 : vector<8xf32> to vector<8x1xf32>
    %cst_127 = arith.constant 3.200000e+01 : f32
    %185 = vector.broadcast %cst_127 : f32 to vector<8x1xf32>
    %186 = arith.divf %184, %185 : vector<8x1xf32>
    %187 = vector.broadcast %179 : vector<8x1xf32> to vector<8x32xf32>
    %188 = arith.subf %171, %187 : vector<8x32xf32>
    %cst_128 = arith.constant 9.99999974E-6 : f32
    %189 = vector.broadcast %cst_128 : f32 to vector<8x1xf32>
    %190 = arith.addf %186, %189 : vector<8x1xf32>
    %191 = math.rsqrt %190 : vector<8x1xf32>
    %192 = vector.broadcast %191 : vector<8x1xf32> to vector<8x32xf32>
    %193 = arith.mulf %188, %192 : vector<8x32xf32>
    %194 = vector.broadcast %173 : vector<1x32xf32> to vector<8x32xf32>
    %195 = arith.mulf %193, %194 : vector<8x32xf32>
    %196 = vector.broadcast %175 : vector<1x32xf32> to vector<8x32xf32>
    %197 = arith.addf %195, %196 : vector<8x32xf32>
    %c1_129 = arith.constant 1 : index
    %c0_130 = arith.constant 0 : index
    %c0_131 = arith.constant 0 : index
    %198 = vector.load %arg8[%c1_129, %c0_130, %c0_131] : memref<2x32x64xf32, #tpu.memory_space<vmem>>, vector<1x32x64xf32>
    %199 = vector.shape_cast %198 : vector<1x32x64xf32> to vector<32x64xf32>
    %cst_132 = arith.constant dense<0.000000e+00> : vector<8x64xf32>
    %200 = tpu.matmul %197, %199, %cst_132 {dimension_numbers = #tpu.dot_dimension_numbers<[1], [0], [0], [1], [0, 0, 1, 1], [], []>} : vector<8x32xf32>, vector<32x64xf32>, vector<8x64xf32> -> vector<8x64xf32>
    %c1_133 = arith.constant 1 : index
    %c0_134 = arith.constant 0 : index
    %c0_135 = arith.constant 0 : index
    %201 = vector.load %arg9[%c1_133, %c0_134, %c0_135] : memref<2x1x64xf32, #tpu.memory_space<vmem>>, vector<1x1x64xf32>
    %202 = vector.shape_cast %201 : vector<1x1x64xf32> to vector<1x64xf32>
    %203 = vector.broadcast %202 : vector<1x64xf32> to vector<8x64xf32>
    %204 = arith.addf %200, %203 : vector<8x64xf32>
    %cst_136 = arith.constant 0.000000e+00 : f32
    %205 = vector.broadcast %cst_136 : f32 to vector<8x64xf32>
    %206 = arith.maximumf %204, %205 : vector<8x64xf32>
    %c1_137 = arith.constant 1 : index
    %c0_138 = arith.constant 0 : index
    %c0_139 = arith.constant 0 : index
    %207 = vector.load %arg10[%c1_137, %c0_138, %c0_139] : memref<2x64x32xf32, #tpu.memory_space<vmem>>, vector<1x64x32xf32>
    %208 = vector.shape_cast %207 : vector<1x64x32xf32> to vector<64x32xf32>
    %cst_140 = arith.constant dense<0.000000e+00> : vector<8x32xf32>
    %209 = tpu.matmul %206, %208, %cst_140 {dimension_numbers = #tpu.dot_dimension_numbers<[1], [0], [0], [1], [0, 0, 1, 1], [], []>} : vector<8x64xf32>, vector<64x32xf32>, vector<8x32xf32> -> vector<8x32xf32>
    %c9 = arith.constant 9 : index
    %c0_141 = arith.constant 0 : index
    %c0_142 = arith.constant 0 : index
    %210 = vector.load %arg11[%c9, %c0_141, %c0_142] : memref<12x1x32xf32, #tpu.memory_space<vmem>>, vector<1x1x32xf32>
    %211 = vector.shape_cast %210 : vector<1x1x32xf32> to vector<1x32xf32>
    %212 = vector.broadcast %211 : vector<1x32xf32> to vector<8x32xf32>
    %213 = arith.addf %209, %212 : vector<8x32xf32>
    %214 = arith.addf %197, %213 : vector<8x32xf32>
    %c10 = arith.constant 10 : index
    %c0_143 = arith.constant 0 : index
    %c0_144 = arith.constant 0 : index
    %215 = vector.load %arg11[%c10, %c0_143, %c0_144] : memref<12x1x32xf32, #tpu.memory_space<vmem>>, vector<1x1x32xf32>
    %216 = vector.shape_cast %215 : vector<1x1x32xf32> to vector<1x32xf32>
    %c11 = arith.constant 11 : index
    %c0_145 = arith.constant 0 : index
    %c0_146 = arith.constant 0 : index
    %217 = vector.load %arg11[%c11, %c0_145, %c0_146] : memref<12x1x32xf32, #tpu.memory_space<vmem>>, vector<1x1x32xf32>
    %218 = vector.shape_cast %217 : vector<1x1x32xf32> to vector<1x32xf32>
    %cst_147 = arith.constant dense<0.000000e+00> : vector<8xf32>
    %219 = vector.multi_reduction <add>, %214, %cst_147 [1] : vector<8x32xf32> to vector<8xf32>
    %220 = vector.shape_cast %219 : vector<8xf32> to vector<8x1xf32>
    %cst_148 = arith.constant 3.200000e+01 : f32
    %221 = vector.broadcast %cst_148 : f32 to vector<8x1xf32>
    %222 = arith.divf %220, %221 : vector<8x1xf32>
    %223 = vector.broadcast %222 : vector<8x1xf32> to vector<8x32xf32>
    %224 = arith.subf %214, %223 : vector<8x32xf32>
    %225 = arith.mulf %224, %224 : vector<8x32xf32>
    %cst_149 = arith.constant dense<0.000000e+00> : vector<8xf32>
    %226 = vector.multi_reduction <add>, %225, %cst_149 [1] : vector<8x32xf32> to vector<8xf32>
    %227 = vector.shape_cast %226 : vector<8xf32> to vector<8x1xf32>
    %cst_150 = arith.constant 3.200000e+01 : f32
    %228 = vector.broadcast %cst_150 : f32 to vector<8x1xf32>
    %229 = arith.divf %227, %228 : vector<8x1xf32>
    %230 = vector.broadcast %222 : vector<8x1xf32> to vector<8x32xf32>
    %231 = arith.subf %214, %230 : vector<8x32xf32>
    %cst_151 = arith.constant 9.99999974E-6 : f32
    %232 = vector.broadcast %cst_151 : f32 to vector<8x1xf32>
    %233 = arith.addf %229, %232 : vector<8x1xf32>
    %234 = math.rsqrt %233 : vector<8x1xf32>
    %235 = vector.broadcast %234 : vector<8x1xf32> to vector<8x32xf32>
    %236 = arith.mulf %231, %235 : vector<8x32xf32>
    %237 = vector.broadcast %216 : vector<1x32xf32> to vector<8x32xf32>
    %238 = arith.mulf %236, %237 : vector<8x32xf32>
    %239 = vector.broadcast %218 : vector<1x32xf32> to vector<8x32xf32>
    %240 = arith.addf %238, %239 : vector<8x32xf32>
    %c0_152 = arith.constant 0 : index
    %c0_153 = arith.constant 0 : index
    %241 = vector.load %arg12[%c0_152, %c0_153] : memref<32x1xf32, #tpu.memory_space<vmem>>, vector<32x1xf32>
    %cst_154 = arith.constant dense<0.000000e+00> : vector<8x1xf32>
    %242 = tpu.matmul %240, %241, %cst_154 {dimension_numbers = #tpu.dot_dimension_numbers<[1], [0], [0], [1], [0, 0, 1, 1], [], []>} : vector<8x32xf32>, vector<32x1xf32>, vector<8x1xf32> -> vector<8x1xf32>
    %c0_155 = arith.constant 0 : index
    %c0_156 = arith.constant 0 : index
    %243 = vector.load %arg13[%c0_155, %c0_156] : memref<1x1xf32, #tpu.memory_space<vmem>>, vector<1x1xf32>
    %244 = vector.broadcast %243 : vector<1x1xf32> to vector<8x1xf32>
    %245 = arith.addf %242, %244 : vector<8x1xf32>
    %c0_157 = arith.constant 0 : index
    %c0_158 = arith.constant 0 : index
    %c0_159 = arith.constant 0 : index
    %246 = vector.load %arg14[%c0_157, %c0_158, %c0_159] : memref<1x8x1xf32, #tpu.memory_space<vmem>>, vector<1x8x1xf32>
    %247 = vector.shape_cast %246 : vector<1x8x1xf32> to vector<8x1xf32>
    %248 = vector.shape_cast %245 : vector<8x1xf32> to vector<1x8x1xf32>
    tpu.vector_store %arg14[%c0_157, %c0_158, %c0_159], %248 {strides = array<i32>} : memref<1x8x1xf32, #tpu.memory_space<vmem>>, vector<1x8x1xf32>,
    return
  }
  func.func @transform_0(%arg0: i32) -> (i32, i32, i32) {
    %c0_i32 = arith.constant 0 : i32
    %c0_i32_0 = arith.constant 0 : i32
    %c0_i32_1 = arith.constant 0 : i32
    return %arg0, %c0_i32, %c0_i32_0 : i32, i32, i32
  }
  func.func @transform_1(%arg0: i32) -> (i32, i32) {
    %c0_i32 = arith.constant 0 : i32
    %c0_i32_0 = arith.constant 0 : i32
    %c0_i32_1 = arith.constant 0 : i32
    return %c0_i32, %c0_i32_0 : i32, i32
  }
  func.func @transform_2(%arg0: i32) -> (i32, i32) {
    %c0_i32 = arith.constant 0 : i32
    %c0_i32_0 = arith.constant 0 : i32
    %c0_i32_1 = arith.constant 0 : i32
    return %c0_i32, %c0_i32_0 : i32, i32
  }
  func.func @transform_3(%arg0: i32) -> (i32, i32) {
    %c0_i32 = arith.constant 0 : i32
    %c0_i32_0 = arith.constant 0 : i32
    %c0_i32_1 = arith.constant 0 : i32
    return %c0_i32, %c0_i32_0 : i32, i32
  }
  func.func @transform_4(%arg0: i32) -> (i32, i32, i32, i32) {
    %c0_i32 = arith.constant 0 : i32
    %c0_i32_0 = arith.constant 0 : i32
    %c0_i32_1 = arith.constant 0 : i32
    %c0_i32_2 = arith.constant 0 : i32
    %c0_i32_3 = arith.constant 0 : i32
    return %c0_i32, %c0_i32_0, %c0_i32_1, %c0_i32_2 : i32, i32, i32, i32
  }
  func.func @transform_5(%arg0: i32) -> (i32, i32, i32, i32) {
    %c0_i32 = arith.constant 0 : i32
    %c0_i32_0 = arith.constant 0 : i32
    %c0_i32_1 = arith.constant 0 : i32
    %c0_i32_2 = arith.constant 0 : i32
    %c0_i32_3 = arith.constant 0 : i32
    return %c0_i32, %c0_i32_0, %c0_i32_1, %c0_i32_2 : i32, i32, i32, i32
  }
  func.func @transform_6(%arg0: i32) -> (i32, i32, i32, i32) {
    %c0_i32 = arith.constant 0 : i32
    %c0_i32_0 = arith.constant 0 : i32
    %c0_i32_1 = arith.constant 0 : i32
    %c0_i32_2 = arith.constant 0 : i32
    %c0_i32_3 = arith.constant 0 : i32
    return %c0_i32, %c0_i32_0, %c0_i32_1, %c0_i32_2 : i32, i32, i32, i32
  }
  func.func @transform_7(%arg0: i32) -> (i32, i32, i32) {
    %c0_i32 = arith.constant 0 : i32
    %c0_i32_0 = arith.constant 0 : i32
    %c0_i32_1 = arith.constant 0 : i32
    %c0_i32_2 = arith.constant 0 : i32
    return %c0_i32, %c0_i32_0, %c0_i32_1 : i32, i32, i32
  }
  func.func @transform_8(%arg0: i32) -> (i32, i32, i32) {
    %c0_i32 = arith.constant 0 : i32
    %c0_i32_0 = arith.constant 0 : i32
    %c0_i32_1 = arith.constant 0 : i32
    %c0_i32_2 = arith.constant 0 : i32
    return %c0_i32, %c0_i32_0, %c0_i32_1 : i32, i32, i32
  }
  func.func @transform_9(%arg0: i32) -> (i32, i32, i32) {
    %c0_i32 = arith.constant 0 : i32
    %c0_i32_0 = arith.constant 0 : i32
    %c0_i32_1 = arith.constant 0 : i32
    %c0_i32_2 = arith.constant 0 : i32
    return %c0_i32, %c0_i32_0, %c0_i32_1 : i32, i32, i32
  }
  func.func @transform_10(%arg0: i32) -> (i32, i32, i32) {
    %c0_i32 = arith.constant 0 : i32
    %c0_i32_0 = arith.constant 0 : i32
    %c0_i32_1 = arith.constant 0 : i32
    %c0_i32_2 = arith.constant 0 : i32
    return %c0_i32, %c0_i32_0, %c0_i32_1 : i32, i32, i32
  }
  func.func @transform_11(%arg0: i32) -> (i32, i32) {
    %c0_i32 = arith.constant 0 : i32
    %c0_i32_0 = arith.constant 0 : i32
    %c0_i32_1 = arith.constant 0 : i32
    return %c0_i32, %c0_i32_0 : i32, i32
  }
  func.func @transform_12(%arg0: i32) -> (i32, i32) {
    %c0_i32 = arith.constant 0 : i32
    %c0_i32_0 = arith.constant 0 : i32
    %c0_i32_1 = arith.constant 0 : i32
    return %c0_i32, %c0_i32_0 : i32, i32
  }
  func.func @transform_13(%arg0: i32) -> (i32, i32, i32) {
    %c0_i32 = arith.constant 0 : i32
    %c0_i32_0 = arith.constant 0 : i32
    %c0_i32_1 = arith.constant 0 : i32
    return %arg0, %c0_i32, %c0_i32_0 : i32, i32, i32
  }
}

</mosaic_0001>

<llo_original>
// kernel: tpu_custom_call.1
$region0: #{tpu_custom_call.1}
  #allocation0 [shape = 'u32[]', space=smem, size = 0x4, offset = 0x4, fixed_abs, tag = 'smem constant byte address 0x4 - core index']
  #allocation1 [shape = 'u32[144,128]{1,0:T(1,128)}', space=vmem, size = 0x12000, scoped, tag = 'internal scratch']
  #allocation2 [shape = 'f32[1,1]{1,0:T(1,128)S(1)}', space=vmem, size = 0x200, scoped, tag = 'scoped memory for tpu_custom_call.1']
  %s0 = inlined_call_operand.vmem [shape: f32[2,8,1], index: 0, kind: input, shape index: {}]
  %s1 = inlined_call_operand.vmem [shape: f32[1,32], index: 1, kind: input, shape index: {}]
  %s2 = inlined_call_operand.vmem [shape: f32[1,32], index: 2, kind: input, shape index: {}]
  %s3 = inlined_call_operand.vmem [shape: f32[8,32], index: 3, kind: input, shape index: {}]
  %s4 = inlined_call_operand.vmem [shape: f32[6,4,32,8], index: 4, kind: input, shape index: {}]
  %s5 = inlined_call_operand.vmem [shape: f32[6,4,1,8], index: 5, kind: input, shape index: {}]
  %s6 = inlined_call_operand.vmem [shape: f32[2,4,8,32], index: 6, kind: input, shape index: {}]
  %s7 = inlined_call_operand.vmem [shape: f32[2,32,64], index: 7, kind: input, shape index: {}]
  %s8 = inlined_call_operand.vmem [shape: f32[2,1,64], index: 8, kind: input, shape index: {}]
  %s9 = inlined_call_operand.vmem [shape: f32[2,64,32], index: 9, kind: input, shape index: {}]
  %s10 = inlined_call_operand.vmem [shape: f32[12,1,32], index: 10, kind: input, shape index: {}]
  %s11 = inlined_call_operand.vmem [shape: f32[32,1], index: 11, kind: input, shape index: {}]
  %s12 = inlined_call_operand.<no memory space> [shape: f32[1,1], index: 12, kind: input, shape index: {}]
  %s13 = inlined_call_operand.vmem [shape: f32[2,8,1], index: 13, kind: output, shape index: {}]
  %s14 = sld [smem:[#allocation0]]
  $region85: #{tpu_custom_call.1} parent=0
    _
  %s16 = ssub.s32 1, %s14
  %s17 = scalar_select 0, %s16, %s14
  %v18 = vstv %s12
  %19 = vst [vmem:[#allocation2] sm:$0x1] %v18
  loop: start=0, step=1, limit=4
  $region2: #{tpu_custom_call.1} parent=0 // loop_pre_header
    _
  $region3: #{tpu_custom_call.1} parent=0 // loop_header
    %s21 = sphi 0, %s25
    %p22 = scmp.ge.s32.totalorder %s21, 4
    %s31 = sphi 0, %s33
    %s34 = sphi 0, %s31
    %s35 = sphi 0, %s34
    %s51 = sphi 0, %s35
    %s55 = sphi 0, %s55
    %s57 = sphi 0, %s55
    %s58 = sphi 0, %s57
    %s72 = sphi 0, %s58
    %s76 = sphi 0, %s76
    %s78 = sphi 0, %s76
    %s79 = sphi 0, %s78
    %s93 = sphi 0, %s79
    %s97 = sphi 0, %s97
    %s99 = sphi 0, %s97
    %s100 = sphi 0, %s99
    %s114 = sphi 0, %s100
    %s118 = sphi 0, %s118
    %s120 = sphi 0, %s118
    %s121 = sphi 0, %s120
    %s135 = sphi 0, %s121
    %s139 = sphi 0, %s139
    %s141 = sphi 0, %s139
    %s142 = sphi 0, %s141
    %s156 = sphi 0, %s142
    %s160 = sphi 0, %s160
    %s162 = sphi 0, %s160
    %s163 = sphi 0, %s162
    %s177 = sphi 0, %s163
    %s181 = sphi 0, %s181
    %s183 = sphi 0, %s181
    %s184 = sphi 0, %s183
    %s198 = sphi 0, %s184
    %s202 = sphi 0, %s202
    %s204 = sphi 0, %s202
    %s205 = sphi 0, %s204
    %s219 = sphi 0, %s205
    %s223 = sphi 0, %s223
    %s225 = sphi 0, %s223
    %s226 = sphi 0, %s225
    %s240 = sphi 0, %s226
    %s244 = sphi 0, %s244
    %s246 = sphi 0, %s244
    %s247 = sphi 0, %s246
    %s261 = sphi 0, %s247
    %s265 = sphi 0, %s265
    %s267 = sphi 0, %s265
    %s268 = sphi 0, %s267
    %s282 = sphi 0, %s268
    %s286 = sphi 0, %s286
    %s288 = sphi 0, %s286
    %s289 = sphi 0, %s288
    %s303 = sphi 0, %s289
    %s309 = sphi 0, %s311
    %s312 = sphi 0, %s309
    %s313 = sphi 0, %s312
    %s329 = sphi 0, %s313
  $region4: #{tpu_custom_call.1} parent=0 // loop_header_branch
    %24 = sbr.rel (%p22) target = $region8
  $region5: #{tpu_custom_call.1} parent=0 // loop_body
    %s26 = ssub.s32 %s21, 1
    %s27 = ssub.s32 %s21, 2
    %s28 = sadd.s32 %s21, 1
    %s29 = ssub.s32 %s21, %s28
    %p30 = scmp.eq.s32.totalorder %s29, 0
    %s32 = sadd.s32 %s31, 1
    %s33 = scalar_select %p30, %s31, %s32
    %p36 = pneg %p30
    %p37 = scmp.eq.s32.totalorder %s21, 1
    %p38 = por %p36, %p37
    %p39 = scmp.ne.s32.totalorder %s31, %s34
    %p40 = scmp.eq.s32.totalorder %s21, 0
    %p41 = por %p39, %p40
    %p42 = scmp.ne.s32.totalorder %s31, %s34
    %p43 = scmp.eq.s32.totalorder %s26, 1
    %p44 = por %p42, %p43
    %p45 = scmp.ne.s32.totalorder %s34, %s35
    %p46 = scmp.eq.s32.totalorder %s26, 0
    %p47 = por %p45, %p46
    %p48 = scmp.ne.s32.totalorder %s34, %s35
    %p49 = scmp.eq.s32.totalorder %s27, 1
    %p50 = por %p48, %p49
    %p52 = scmp.ne.s32.totalorder %s35, %s51
    %p53 = scmp.eq.s32.totalorder %s27, 0
    %p54 = por %p52, %p53
    %s56 = sadd.s32 %s55, 1
    %p59 = scmp.eq.s32.totalorder %s21, 1
    %p60 = scmp.ne.s32.totalorder %s55, %s57
    %p61 = scmp.eq.s32.totalorder %s21, 0
    %p62 = por %p60, %p61
    %p63 = scmp.ne.s32.totalorder %s55, %s57
    %p64 = scmp.eq.s32.totalorder %s26, 1
    %p65 = por %p63, %p64
    %p66 = scmp.ne.s32.totalorder %s57, %s58
    %p67 = scmp.eq.s32.totalorder %s26, 0
    %p68 = por %p66, %p67
    %p69 = scmp.ne.s32.totalorder %s57, %s58
    %p70 = scmp.eq.s32.totalorder %s27, 1
    %p71 = por %p69, %p70
    %p73 = scmp.ne.s32.totalorder %s58, %s72
    %p74 = scmp.eq.s32.totalorder %s27, 0
    %p75 = por %p73, %p74
    %s77 = sadd.s32 %s76, 1
    %p80 = scmp.eq.s32.totalorder %s21, 1
    %p81 = scmp.ne.s32.totalorder %s76, %s78
    %p82 = scmp.eq.s32.totalorder %s21, 0
    %p83 = por %p81, %p82
    %p84 = scmp.ne.s32.totalorder %s76, %s78
    %p85 = scmp.eq.s32.totalorder %s26, 1
    %p86 = por %p84, %p85
    %p87 = scmp.ne.s32.totalorder %s78, %s79
    %p88 = scmp.eq.s32.totalorder %s26, 0
    %p89 = por %p87, %p88
    %p90 = scmp.ne.s32.totalorder %s78, %s79
    %p91 = scmp.eq.s32.totalorder %s27, 1
    %p92 = por %p90, %p91
    %p94 = scmp.ne.s32.totalorder %s79, %s93
    %p95 = scmp.eq.s32.totalorder %s27, 0
    %p96 = por %p94, %p95
    %s98 = sadd.s32 %s97, 1
    %p101 = scmp.eq.s32.totalorder %s21, 1
    %p102 = scmp.ne.s32.totalorder %s97, %s99
    %p103 = scmp.eq.s32.totalorder %s21, 0
    %p104 = por %p102, %p103
    %p105 = scmp.ne.s32.totalorder %s97, %s99
    %p106 = scmp.eq.s32.totalorder %s26, 1
    %p107 = por %p105, %p106
    %p108 = scmp.ne.s32.totalorder %s99, %s100
    %p109 = scmp.eq.s32.totalorder %s26, 0
    %p110 = por %p108, %p109
    %p111 = scmp.ne.s32.totalorder %s99, %s100
    %p112 = scmp.eq.s32.totalorder %s27, 1
    %p113 = por %p111, %p112
    %p115 = scmp.ne.s32.totalorder %s100, %s114
    %p116 = scmp.eq.s32.totalorder %s27, 0
    %p117 = por %p115, %p116
    %s119 = sadd.s32 %s118, 1
    %p122 = scmp.eq.s32.totalorder %s21, 1
    %p123 = scmp.ne.s32.totalorder %s118, %s120
    %p124 = scmp.eq.s32.totalorder %s21, 0
    %p125 = por %p123, %p124
    %p126 = scmp.ne.s32.totalorder %s118, %s120
    %p127 = scmp.eq.s32.totalorder %s26, 1
    %p128 = por %p126, %p127
    %p129 = scmp.ne.s32.totalorder %s120, %s121
    %p130 = scmp.eq.s32.totalorder %s26, 0
    %p131 = por %p129, %p130
    %p132 = scmp.ne.s32.totalorder %s120, %s121
    %p133 = scmp.eq.s32.totalorder %s27, 1
    %p134 = por %p132, %p133
    %p136 = scmp.ne.s32.totalorder %s121, %s135
    %p137 = scmp.eq.s32.totalorder %s27, 0
    %p138 = por %p136, %p137
    %s140 = sadd.s32 %s139, 1
    %p143 = scmp.eq.s32.totalorder %s21, 1
    %p144 = scmp.ne.s32.totalorder %s139, %s141
    %p145 = scmp.eq.s32.totalorder %s21, 0
    %p146 = por %p144, %p145
    %p147 = scmp.ne.s32.totalorder %s139, %s141
    %p148 = scmp.eq.s32.totalorder %s26, 1
    %p149 = por %p147, %p148
    %p150 = scmp.ne.s32.totalorder %s141, %s142
    %p151 = scmp.eq.s32.totalorder %s26, 0
    %p152 = por %p150, %p151
    %p153 = scmp.ne.s32.totalorder %s141, %s142
    %p154 = scmp.eq.s32.totalorder %s27, 1
    %p155 = por %p153, %p154
    %p157 = scmp.ne.s32.totalorder %s142, %s156
    %p158 = scmp.eq.s32.totalorder %s27, 0
    %p159 = por %p157, %p158
    %s161 = sadd.s32 %s160, 1
    %p164 = scmp.eq.s32.totalorder %s21, 1
    %p165 = scmp.ne.s32.totalorder %s160, %s162
    %p166 = scmp.eq.s32.totalorder %s21, 0
    %p167 = por %p165, %p166
    %p168 = scmp.ne.s32.totalorder %s160, %s162
    %p169 = scmp.eq.s32.totalorder %s26, 1
    %p170 = por %p168, %p169
    %p171 = scmp.ne.s32.totalorder %s162, %s163
    %p172 = scmp.eq.s32.totalorder %s26, 0
    %p173 = por %p171, %p172
    %p174 = scmp.ne.s32.totalorder %s162, %s163
    %p175 = scmp.eq.s32.totalorder %s27, 1
    %p176 = por %p174, %p175
    %p178 = scmp.ne.s32.totalorder %s163, %s177
    %p179 = scmp.eq.s32.totalorder %s27, 0
    %p180 = por %p178, %p179
    %s182 = sadd.s32 %s181, 1
    %p185 = scmp.eq.s32.totalorder %s21, 1
    %p186 = scmp.ne.s32.totalorder %s181, %s183
    %p187 = scmp.eq.s32.totalorder %s21, 0
    %p188 = por %p186, %p187
    %p189 = scmp.ne.s32.totalorder %s181, %s183
    %p190 = scmp.eq.s32.totalorder %s26, 1
    %p191 = por %p189, %p190
    %p192 = scmp.ne.s32.totalorder %s183, %s184
    %p193 = scmp.eq.s32.totalorder %s26, 0
    %p194 = por %p192, %p193
    %p195 = scmp.ne.s32.totalorder %s183, %s184
    %p196 = scmp.eq.s32.totalorder %s27, 1
    %p197 = por %p195, %p196
    %p199 = scmp.ne.s32.totalorder %s184, %s198
    %p200 = scmp.eq.s32.totalorder %s27, 0
    %p201 = por %p199, %p200
    %s203 = sadd.s32 %s202, 1
    %p206 = scmp.eq.s32.totalorder %s21, 1
    %p207 = scmp.ne.s32.totalorder %s202, %s204
    %p208 = scmp.eq.s32.totalorder %s21, 0
    %p209 = por %p207, %p208
    %p210 = scmp.ne.s32.totalorder %s202, %s204
    %p211 = scmp.eq.s32.totalorder %s26, 1
    %p212 = por %p210, %p211
    %p213 = scmp.ne.s32.totalorder %s204, %s205
    %p214 = scmp.eq.s32.totalorder %s26, 0
    %p215 = por %p213, %p214
    %p216 = scmp.ne.s32.totalorder %s204, %s205
    %p217 = scmp.eq.s32.totalorder %s27, 1
    %p218 = por %p216, %p217
    %p220 = scmp.ne.s32.totalorder %s205, %s219
    %p221 = scmp.eq.s32.totalorder %s27, 0
    %p222 = por %p220, %p221
    %s224 = sadd.s32 %s223, 1
    %p227 = scmp.eq.s32.totalorder %s21, 1
    %p228 = scmp.ne.s32.totalorder %s223, %s225
    %p229 = scmp.eq.s32.totalorder %s21, 0
    %p230 = por %p228, %p229
    %p231 = scmp.ne.s32.totalorder %s223, %s225
    %p232 = scmp.eq.s32.totalorder %s26, 1
    %p233 = por %p231, %p232
    %p234 = scmp.ne.s32.totalorder %s225, %s226
    %p235 = scmp.eq.s32.totalorder %s26, 0
    %p236 = por %p234, %p235
    %p237 = scmp.ne.s32.totalorder %s225, %s226
    %p238 = scmp.eq.s32.totalorder %s27, 1
    %p239 = por %p237, %p238
    %p241 = scmp.ne.s32.totalorder %s226, %s240
    %p242 = scmp.eq.s32.totalorder %s27, 0
    %p243 = por %p241, %p242
    %s245 = sadd.s32 %s244, 1
    %p248 = scmp.eq.s32.totalorder %s21, 1
    %p249 = scmp.ne.s32.totalorder %s244, %s246
    %p250 = scmp.eq.s32.totalorder %s21, 0
    %p251 = por %p249, %p250
    %p252 = scmp.ne.s32.totalorder %s244, %s246
    %p253 = scmp.eq.s32.totalorder %s26, 1
    %p254 = por %p252, %p253
    %p255 = scmp.ne.s32.totalorder %s246, %s247
    %p256 = scmp.eq.s32.totalorder %s26, 0
    %p257 = por %p255, %p256
    %p258 = scmp.ne.s32.totalorder %s246, %s247
    %p259 = scmp.eq.s32.totalorder %s27, 1
    %p260 = por %p258, %p259
    %p262 = scmp.ne.s32.totalorder %s247, %s261
    %p263 = scmp.eq.s32.totalorder %s27, 0
    %p264 = por %p262, %p263
    %s266 = sadd.s32 %s265, 1
    %p269 = scmp.eq.s32.totalorder %s21, 1
    %p270 = scmp.ne.s32.totalorder %s265, %s267
    %p271 = scmp.eq.s32.totalorder %s21, 0
    %p272 = por %p270, %p271
    %p273 = scmp.ne.s32.totalorder %s265, %s267
    %p274 = scmp.eq.s32.totalorder %s26, 1
    %p275 = por %p273, %p274
    %p276 = scmp.ne.s32.totalorder %s267, %s268
    %p277 = scmp.eq.s32.totalorder %s26, 0
    %p278 = por %p276, %p277
    %p279 = scmp.ne.s32.totalorder %s267, %s268
    %p280 = scmp.eq.s32.totalorder %s27, 1
    %p281 = por %p279, %p280
    %p283 = scmp.ne.s32.totalorder %s268, %s282
    %p284 = scmp.eq.s32.totalorder %s27, 0
    %p285 = por %p283, %p284
    %s287 = sadd.s32 %s286, 1
    %p290 = scmp.eq.s32.totalorder %s21, 1
    %p291 = scmp.ne.s32.totalorder %s286, %s288
    %p292 = scmp.eq.s32.totalorder %s21, 0
    %p293 = por %p291, %p292
    %p294 = scmp.ne.s32.totalorder %s286, %s288
    %p295 = scmp.eq.s32.totalorder %s26, 1
    %p296 = por %p294, %p295
    %p297 = scmp.ne.s32.totalorder %s288, %s289
    %p298 = scmp.eq.s32.totalorder %s26, 0
    %p299 = por %p297, %p298
    %p300 = scmp.ne.s32.totalorder %s288, %s289
    %p301 = scmp.eq.s32.totalorder %s27, 1
    %p302 = por %p300, %p301
    %p304 = scmp.ne.s32.totalorder %s289, %s303
    %p305 = scmp.eq.s32.totalorder %s27, 0
    %p306 = por %p304, %p305
    %s307 = ssub.s32 %s21, %s28
    %p308 = scmp.eq.s32.totalorder %s307, 0
    %s310 = sadd.s32 %s309, 1
    %s311 = scalar_select %p308, %s309, %s310
    %p314 = pneg %p308
    %p315 = scmp.eq.s32.totalorder %s21, 1
    %p316 = por %p314, %p315
    %p317 = scmp.ne.s32.totalorder %s309, %s312
    %p318 = scmp.eq.s32.totalorder %s21, 0
    %p319 = por %p317, %p318
    %p320 = scmp.ne.s32.totalorder %s309, %s312
    %p321 = scmp.eq.s32.totalorder %s26, 1
    %p322 = por %p320, %p321
    %p323 = scmp.ne.s32.totalorder %s312, %s313
    %p324 = scmp.eq.s32.totalorder %s26, 0
    %p325 = por %p323, %p324
    %p326 = scmp.ne.s32.totalorder %s312, %s313
    %p327 = scmp.eq.s32.totalorder %s27, 1
    %p328 = por %p326, %p327
    %p330 = scmp.ne.s32.totalorder %s313, %s329
    %p331 = scmp.eq.s32.totalorder %s27, 0
    %p332 = por %p330, %p331
    %p333 = scmp.le.s32.totalorder 1, %s21
    %p334 = scmp.lt.s32.totalorder %s21, 3
    %p335 = pnand %p333, %p334
    %p336 = pneg %p335
    // Predicated region
    $region9: #{tpu_custom_call.1} parent=5 // pred_check
      _
    $region10: #{tpu_custom_call.1} parent=5 // pred_check_branch
      %338 = sbr.rel (%p335) target = $region12
    $region11: #{tpu_custom_call.1} parent=5 // pred_region
      %s339 = ssub.s32 %s21, 1
      // Predicated region
      $region13: #{tpu_custom_call.1} parent=11 // pred_check
        %p340 = pneg %p68
      $region14: #{tpu_custom_call.1} parent=11 // pred_check_branch
        %342 = sbr.rel (%p340) target = $region16
      $region15: #{tpu_custom_call.1} parent=11 // pred_region
        _
      $region16: #{tpu_custom_call.1} parent=11 // pred_fallthru
        _
      // Predicated region
      $region17: #{tpu_custom_call.1} parent=11 // pred_check
        %p343 = pneg %p89
      $region18: #{tpu_custom_call.1} parent=11 // pred_check_branch
        %345 = sbr.rel (%p343) target = $region20
      $region19: #{tpu_custom_call.1} parent=11 // pred_region
        _
      $region20: #{tpu_custom_call.1} parent=11 // pred_fallthru
        _
      // Predicated region
      $region21: #{tpu_custom_call.1} parent=11 // pred_check
        %p346 = pneg %p110
      $region22: #{tpu_custom_call.1} parent=11 // pred_check_branch
        %348 = sbr.rel (%p346) target = $region24
      $region23: #{tpu_custom_call.1} parent=11 // pred_region
        _
      $region24: #{tpu_custom_call.1} parent=11 // pred_fallthru
        _
      // Predicated region
      $region25: #{tpu_custom_call.1} parent=11 // pred_check
        %p349 = pneg %p131
      $region26: #{tpu_custom_call.1} parent=11 // pred_check_branch
        %351 = sbr.rel (%p349) target = $region28
      $region27: #{tpu_custom_call.1} parent=11 // pred_region
        _
      $region28: #{tpu_custom_call.1} parent=11 // pred_fallthru
        _
      // Predicated region
      $region29: #{tpu_custom_call.1} parent=11 // pred_check
        %p352 = pneg %p152
      $region30: #{tpu_custom_call.1} parent=11 // pred_check_branch
        %354 = sbr.rel (%p352) target = $region32
      $region31: #{tpu_custom_call.1} parent=11 // pred_region
        _
      $region32: #{tpu_custom_call.1} parent=11 // pred_fallthru
        _
      // Predicated region
      $region33: #{tpu_custom_call.1} parent=11 // pred_check
        %p355 = pneg %p173
      $region34: #{tpu_custom_call.1} parent=11 // pred_check_branch
        %357 = sbr.rel (%p355) target = $region36
      $region35: #{tpu_custom_call.1} parent=11 // pred_region
        _
      $region36: #{tpu_custom_call.1} parent=11 // pred_fallthru
        _
      // Predicated region
      $region37: #{tpu_custom_call.1} parent=11 // pred_check
        %p358 = pneg %p194
      $region38: #{tpu_custom_call.1} parent=11 // pred_check_branch
        %360 = sbr.rel (%p358) target = $region40
      $region39: #{tpu_custom_call.1} parent=11 // pred_region
        _
      $region40: #{tpu_custom_call.1} parent=11 // pred_fallthru
        _
      // Predicated region
      $region41: #{tpu_custom_call.1} parent=11 // pred_check
        %p361 = pneg %p215
      $region42: #{tpu_custom_call.1} parent=11 // pred_check_branch
        %363 = sbr.rel (%p361) target = $region44
      $region43: #{tpu_custom_call.1} parent=11 // pred_region
        _
      $region44: #{tpu_custom_call.1} parent=11 // pred_fallthru
        _
      // Predicated region
      $region45: #{tpu_custom_call.1} parent=11 // pred_check
        %p364 = pneg %p236
      $region46: #{tpu_custom_call.1} parent=11 // pred_check_branch
        %366 = sbr.rel (%p364) target = $region48
      $region47: #{tpu_custom_call.1} parent=11 // pred_region
        _
      $region48: #{tpu_custom_call.1} parent=11 // pred_fallthru
        _
      // Predicated region
      $region49: #{tpu_custom_call.1} parent=11 // pred_check
        %p367 = pneg %p257
      $region50: #{tpu_custom_call.1} parent=11 // pred_check_branch
        %369 = sbr.rel (%p367) target = $region52
      $region51: #{tpu_custom_call.1} parent=11 // pred_region
        _
      $region52: #{tpu_custom_call.1} parent=11 // pred_fallthru
        _
      // Predicated region
      $region53: #{tpu_custom_call.1} parent=11 // pred_check
        %p370 = pneg %p278
      $region54: #{tpu_custom_call.1} parent=11 // pred_check_branch
        %372 = sbr.rel (%p370) target = $region56
      $region55: #{tpu_custom_call.1} parent=11 // pred_region
        _
      $region56: #{tpu_custom_call.1} parent=11 // pred_fallthru
        _
      // Predicated region
      $region57: #{tpu_custom_call.1} parent=11 // pred_check
        %p373 = pneg %p299
      $region58: #{tpu_custom_call.1} parent=11 // pred_check_branch
        %375 = sbr.rel (%p373) target = $region60
      $region59: #{tpu_custom_call.1} parent=11 // pred_region
        _
      $region60: #{tpu_custom_call.1} parent=11 // pred_fallthru
        _
    $region12: #{tpu_custom_call.1} parent=5 // pred_fallthru
      _
    %p376 = scmp.lt.s32.totalorder %s21, 2
    // Predicated region
    $region61: #{tpu_custom_call.1} parent=5 // pred_check
      %p377 = pneg %p376
    $region62: #{tpu_custom_call.1} parent=5 // pred_check_branch
      %379 = sbr.rel (%p377) target = $region64
    $region63: #{tpu_custom_call.1} parent=5 // pred_region
      // Predicated region
      $region65: #{tpu_custom_call.1} parent=63 // pred_check
        %p380 = pneg %p41
      $region66: #{tpu_custom_call.1} parent=63 // pred_check_branch
        %382 = sbr.rel (%p380) target = $region68
      $region67: #{tpu_custom_call.1} parent=63 // pred_region
        %p383 = scmp.lt.s32.totalorder %s21, 1
        %s384 = scalar_select %p383, %s21, 1
        %s385 = smul.addr %s384, 8
        %s386 = scalar_lea.vmem %s0, %s385
      $region68: #{tpu_custom_call.1} parent=63 // pred_fallthru
        _
    $region64: #{tpu_custom_call.1} parent=5 // pred_fallthru
      _
    %p387 = scmp.le.s32.totalorder 1, %s21
    %p388 = scmp.lt.s32.totalorder %s21, 3
    %p389 = pnand %p387, %p388
    %p390 = pneg %p389
    // Predicated region
    $region69: #{tpu_custom_call.1} parent=5 // pred_check
      _
    $region70: #{tpu_custom_call.1} parent=5 // pred_check_branch
      %392 = sbr.rel (%p389) target = $region72
    $region71: #{tpu_custom_call.1} parent=5 // pred_region
      %s393 = ssub.s32 %s21, 1
      %p394 = scmp.lt.s32.totalorder %s26, 1
      %s395 = scalar_select %p394, %s26, 1
      %s396 = smul.addr %s395, 8
      %s397 = scalar_lea.vmem %s0, %s396
      %p398 = pneg %p47
      %p399 = pneg %p44
      %p400 = pneg %p68
      %p401 = pneg %p65
      %p402 = pneg %p89
      %p403 = pneg %p86
      %p404 = pneg %p110
      %p405 = pneg %p107
      %p406 = pneg %p131
      %p407 = pneg %p128
      %p408 = pneg %p152
      %p409 = pneg %p149
      %p410 = pneg %p173
      %p411 = pneg %p170
      %p412 = pneg %p194
      %p413 = pneg %p191
      %p414 = pneg %p215
      %p415 = pneg %p212
      %p416 = pneg %p236
      %p417 = pneg %p233
      %p418 = pneg %p257
      %p419 = pneg %p254
      %p420 = pneg %p278
      %p421 = pneg %p275
      %p422 = pneg %p299
      %p423 = pneg %p296
      %p424 = pneg %p325
      %p425 = pneg %p322
      %p426 = scmp.lt.s32.totalorder %s26, 1
      %s427 = scalar_select %p426, %s26, 1
      %s428 = smul.addr %s427, 8
      %s429 = scalar_lea.vmem %s13, %s428
      %p430 = scmp.lt.s32.totalorder %s26, 1
      %s431 = scalar_select %p430, %s26, 1
      %s432 = smul.addr %s431, 8
      %s433 = scalar_lea.vmem %s0, %s432
      %p434 = scmp.lt.s32.totalorder %s26, 1
      %s435 = scalar_select %p434, %s26, 1
      %s436 = smul.addr %s435, 8
      %s437 = scalar_lea.vmem %s13, %s436
      %v438 = vld [vmem:[%s433] sm:$0xff]
      %v439 = vld [vmem:[%s1] sm:$0x1]
      %441 = vset.pattern.permute.xlu0 0
      %442 = vperm.xlu0 %441, %v438
      %v443 = vpop.permute.xlu0 %442
      %v446 = vlaneseq
      %v447 = vshrl.u32 %v446, 7
      %v448 = vsub.s32 0, %v447
      %v449 = vrot.slane %v439, %v448
      %v451 = vmul.f32 %v443, %v449
      %v452 = vld [vmem:[%s2] sm:$0x1]
      %v454 = vlaneseq
      %v455 = vshrl.u32 %v454, 7
      %v456 = vsub.s32 0, %v455
      %v457 = vrot.slane %v452, %v456
      %v459 = vadd.f32 %v451, %v457
      %v460 = vld [vmem:[%s3] sm:$0xff]
      %v461 = vadd.f32 %v459, %v460
      %v462 = vld [vmem:[%s4] sm:$0xff]
      %v463 = vld [vmem:[%s4 + $0x8] sm:$0xff]
      %v464 = vld [vmem:[%s4 + $0x10] sm:$0xff]
      %v465 = vld [vmem:[%s4 + $0x18] sm:$0xff]
      %v466 = vld [vmem:[%s4 + $0x20] sm:$0xff]
      %v467 = vld [vmem:[%s4 + $0x28] sm:$0xff]
      %v468 = vld [vmem:[%s4 + $0x30] sm:$0xff]
      %v469 = vld [vmem:[%s4 + $0x38] sm:$0xff]
      %v470 = vld [vmem:[%s4 + $0x40] sm:$0xff]
      %v471 = vld [vmem:[%s4 + $0x48] sm:$0xff]
      %v472 = vld [vmem:[%s4 + $0x50] sm:$0xff]
      %v473 = vld [vmem:[%s4 + $0x58] sm:$0xff]
      %v474 = vld [vmem:[%s4 + $0x60] sm:$0xff]
      %v475 = vld [vmem:[%s4 + $0x68] sm:$0xff]
      %v476 = vld [vmem:[%s4 + $0x70] sm:$0xff]
      %v477 = vld [vmem:[%s4 + $0x78] sm:$0xff]
      %v478 = vld [vmem:[%s5] sm:$0x1]
      %v479 = vld [vmem:[%s5 + $0x1] sm:$0x1]
      %v480 = vld [vmem:[%s5 + $0x2] sm:$0x1]
      %v481 = vld [vmem:[%s5 + $0x3] sm:$0x1]
      %v486 = vlaneseq
      %v487 = vshrl.u32 %v486, 7
      %v488 = vsub.s32 0, %v487
      %v489 = vrot.slane %v478, %v488
      %v490 = vlaneseq
      %v491 = vshrl.u32 %v490, 7
      %v492 = vsub.s32 0, %v491
      %v493 = vrot.slane %v479, %v492
      %v494 = vlaneseq
      %v495 = vshrl.u32 %v494, 7
      %v496 = vsub.s32 0, %v495
      %v497 = vrot.slane %v480, %v496
      %v498 = vlaneseq
      %v499 = vshrl.u32 %v498, 7
      %v500 = vsub.s32 0, %v499
      %v501 = vrot.slane %v481, %v500
      %vm506 = vcmask 261120
      %v508 = vsel %vm506, %v461, 0
      %510 = vmatprep.subr.mxu0 0.0
      %511 = vmatpush1.msra.mxu0 0.0
      %512 = vmatprep.subr.mxu0 0.0
      %513 = vmatpush1.msra.mxu0 0.0
      %514 = vmatprep.subr.mxu0 0.0
      %515 = vmatpush1.msra.mxu0 0.0
      %516 = vmatprep.subr.mxu0 0.0
      %517 = vmatpush1.msra.mxu0 0.0
      %518 = vmatprep.subr.mxu0 0.0
      %519 = vmatpush1.msra.mxu0 0.0
      %520 = vmatprep.subr.mxu0 0.0
      %521 = vmatpush1.msra.mxu0 0.0
      %522 = vmatprep.subr.mxu0 0.0
      %523 = vmatpush1.msra.mxu0 0.0
      %524 = vmatprep.subr.mxu0 0.0
      %525 = vmatpush1.msra.mxu0 0.0
      %526 = vmatprep.subr.mxu0 0.0
      %527 = vmatpush1.msra.mxu0 0.0
      %528 = vmatprep.subr.mxu0 0.0
      %529 = vmatpush1.msra.mxu0 0.0
      %530 = vmatprep.subr.mxu0 0.0
      %531 = vmatpush1.msra.mxu0 0.0
      %532 = vmatprep.subr.mxu0 0.0
      %533 = vmatpush1.msra.mxu0 0.0
      %534 = vmatprep.subr.mxu0 0.0
      %535 = vmatpush1.msra.mxu0 %v465
      %536 = vmatprep.subr.mxu0 0.0
      %537 = vmatpush1.msra.mxu0 %v464
      %538 = vmatprep.subr.mxu0 0.0
      %539 = vmatpush1.msra.mxu0 %v463
      %540 = vmatprep.subr.mxu0 0.0
      %541 = vmatpush1.msra.mxu0 %v462
      %542 = vmatprep.subr.mxu0 0.0
      %543 = vmatpush2.msra.mxu0 0.0
      %544 = vmatprep.subr.mxu0 0.0
      %545 = vmatpush2.msra.mxu0 0.0
      %546 = vmatprep.subr.mxu0 0.0
      %547 = vmatpush2.msra.mxu0 0.0
      %548 = vmatprep.subr.mxu0 0.0
      %549 = vmatpush2.msra.mxu0 0.0
      %550 = vmatprep.subr.mxu0 0.0
      %551 = vmatpush2.msra.mxu0 0.0
      %552 = vmatprep.subr.mxu0 0.0
      %553 = vmatpush2.msra.mxu0 0.0
      %554 = vmatprep.subr.mxu0 0.0
      %555 = vmatpush2.msra.mxu0 0.0
      %556 = vmatprep.subr.mxu0 0.0
      %557 = vmatpush2.msra.mxu0 0.0
      %558 = vmatprep.subr.mxu0 0.0
      %559 = vmatpush2.msra.mxu0 0.0
      %560 = vmatprep.subr.mxu0 0.0
      %561 = vmatpush2.msra.mxu0 0.0
      %562 = vmatprep.subr.mxu0 0.0
      %563 = vmatpush2.msra.mxu0 0.0
      %564 = vmatprep.subr.mxu0 0.0
      %565 = vmatpush2.msra.mxu0 0.0
      %566 = vmatprep.subr.mxu0 0.0
      %567 = vmatpush2.msra.mxu0 0.0
      %568 = vmatprep.subr.mxu0 0.0
      %569 = vmatpush2.msra.mxu0 0.0
      %570 = vmatprep.subr.mxu0 0.0
      %571 = vmatpush2.msra.mxu0 0.0
      %572 = vmatprep.subr.mxu0 0.0
      %573 = vmatpush2.msra.mxu0 0.0
      %574 = vmatprep.mubr.f32.mxu0 0.0
      %575 = vmatmul.mubr.f32.gmra.mxu0 %v508
      %v576 = vpop.f32.mrf.mxu0
      %v577 = vadd.f32 %v489, %v576
      %v578 = vpop.f32.mrf.mxu0
      %579 = vdwg.mxu0
      %580 = vmatprep.subr.mxu0 0.0
      %581 = vmatpush1.msra.mxu0 0.0
      %582 = vmatprep.subr.mxu0 0.0
      %583 = vmatpush1.msra.mxu0 0.0
      %584 = vmatprep.subr.mxu0 0.0
      %585 = vmatpush1.msra.mxu0 0.0
      %586 = vmatprep.subr.mxu0 0.0
      %587 = vmatpush1.msra.mxu0 0.0
      %588 = vmatprep.subr.mxu0 0.0
      %589 = vmatpush1.msra.mxu0 0.0
      %590 = vmatprep.subr.mxu0 0.0
      %591 = vmatpush1.msra.mxu0 0.0
      %592 = vmatprep.subr.mxu0 0.0
      %593 = vmatpush1.msra.mxu0 0.0
      %594 = vmatprep.subr.mxu0 0.0
      %595 = vmatpush1.msra.mxu0 0.0
      %596 = vmatprep.subr.mxu0 0.0
      %597 = vmatpush1.msra.mxu0 0.0
      %598 = vmatprep.subr.mxu0 0.0
      %599 = vmatpush1.msra.mxu0 0.0
      %600 = vmatprep.subr.mxu0 0.0
      %601 = vmatpush1.msra.mxu0 0.0
      %602 = vmatprep.subr.mxu0 0.0
      %603 = vmatpush1.msra.mxu0 0.0
      %604 = vmatprep.subr.mxu0 0.0
      %605 = vmatpush1.msra.mxu0 %v469
      %606 = vmatprep.subr.mxu0 0.0
      %607 = vmatpush1.msra.mxu0 %v468
      %608 = vmatprep.subr.mxu0 0.0
      %609 = vmatpush1.msra.mxu0 %v467
      %610 = vmatprep.subr.mxu0 0.0
      %611 = vmatpush1.msra.mxu0 %v466
      %612 = vmatprep.subr.mxu0 0.0
      %613 = vmatpush2.msra.mxu0 0.0
      %614 = vmatprep.subr.mxu0 0.0
      %615 = vmatpush2.msra.mxu0 0.0
      %616 = vmatprep.subr.mxu0 0.0
      %617 = vmatpush2.msra.mxu0 0.0
      %618 = vmatprep.subr.mxu0 0.0
      %619 = vmatpush2.msra.mxu0 0.0
      %620 = vmatprep.subr.mxu0 0.0
      %621 = vmatpush2.msra.mxu0 0.0
      %622 = vmatprep.subr.mxu0 0.0
      %623 = vmatpush2.msra.mxu0 0.0
      %624 = vmatprep.subr.mxu0 0.0
      %625 = vmatpush2.msra.mxu0 0.0
      %626 = vmatprep.subr.mxu0 0.0
      %627 = vmatpush2.msra.mxu0 0.0
      %628 = vmatprep.subr.mxu0 0.0
      %629 = vmatpush2.msra.mxu0 0.0
      %630 = vmatprep.subr.mxu0 0.0
      %631 = vmatpush2.msra.mxu0 0.0
      %632 = vmatprep.subr.mxu0 0.0
      %633 = vmatpush2.msra.mxu0 0.0
      %634 = vmatprep.subr.mxu0 0.0
      %635 = vmatpush2.msra.mxu0 0.0
      %636 = vmatprep.subr.mxu0 0.0
      %637 = vmatpush2.msra.mxu0 0.0
      %638 = vmatprep.subr.mxu0 0.0
      %639 = vmatpush2.msra.mxu0 0.0
      %640 = vmatprep.subr.mxu0 0.0
      %641 = vmatpush2.msra.mxu0 0.0
      %642 = vmatprep.subr.mxu0 0.0
      %643 = vmatpush2.msra.mxu0 0.0
      %644 = vmatprep.mubr.f32.mxu0 0.0
      %645 = vmatmul.mubr.f32.gmra.mxu0 %v508
      %v646 = vpop.f32.mrf.mxu0
      %v647 = vadd.f32 %v493, %v646
      %v648 = vpop.f32.mrf.mxu0
      %649 = vdwg.mxu0
      %650 = vmatprep.subr.mxu0 0.0
      %651 = vmatpush1.msra.mxu0 0.0
      %652 = vmatprep.subr.mxu0 0.0
      %653 = vmatpush1.msra.mxu0 0.0
      %654 = vmatprep.subr.mxu0 0.0
      %655 = vmatpush1.msra.mxu0 0.0
      %656 = vmatprep.subr.mxu0 0.0
      %657 = vmatpush1.msra.mxu0 0.0
      %658 = vmatprep.subr.mxu0 0.0
      %659 = vmatpush1.msra.mxu0 0.0
      %660 = vmatprep.subr.mxu0 0.0
      %661 = vmatpush1.msra.mxu0 0.0
      %662 = vmatprep.subr.mxu0 0.0
      %663 = vmatpush1.msra.mxu0 0.0
      %664 = vmatprep.subr.mxu0 0.0
      %665 = vmatpush1.msra.mxu0 0.0
      %666 = vmatprep.subr.mxu0 0.0
      %667 = vmatpush1.msra.mxu0 0.0
      %668 = vmatprep.subr.mxu0 0.0
      %669 = vmatpush1.msra.mxu0 0.0
      %670 = vmatprep.subr.mxu0 0.0
      %671 = vmatpush1.msra.mxu0 0.0
      %672 = vmatprep.subr.mxu0 0.0
      %673 = vmatpush1.msra.mxu0 0.0
      %674 = vmatprep.subr.mxu0 0.0
      %675 = vmatpush1.msra.mxu0 %v473
      %676 = vmatprep.subr.mxu0 0.0
      %677 = vmatpush1.msra.mxu0 %v472
      %678 = vmatprep.subr.mxu0 0.0
      %679 = vmatpush1.msra.mxu0 %v471
      %680 = vmatprep.subr.mxu0 0.0
      %681 = vmatpush1.msra.mxu0 %v470
      %682 = vmatprep.subr.mxu0 0.0
      %683 = vmatpush2.msra.mxu0 0.0
      %684 = vmatprep.subr.mxu0 0.0
      %685 = vmatpush2.msra.mxu0 0.0
      %686 = vmatprep.subr.mxu0 0.0
      %687 = vmatpush2.msra.mxu0 0.0
      %688 = vmatprep.subr.mxu0 0.0
      %689 = vmatpush2.msra.mxu0 0.0
      %690 = vmatprep.subr.mxu0 0.0
      %691 = vmatpush2.msra.mxu0 0.0
      %692 = vmatprep.subr.mxu0 0.0
      %693 = vmatpush2.msra.mxu0 0.0
      %694 = vmatprep.subr.mxu0 0.0
      %695 = vmatpush2.msra.mxu0 0.0
      %696 = vmatprep.subr.mxu0 0.0
      %697 = vmatpush2.msra.mxu0 0.0
      %698 = vmatprep.subr.mxu0 0.0
      %699 = vmatpush2.msra.mxu0 0.0
      %700 = vmatprep.subr.mxu0 0.0
      %701 = vmatpush2.msra.mxu0 0.0
      %702 = vmatprep.subr.mxu0 0.0
      %703 = vmatpush2.msra.mxu0 0.0
      %704 = vmatprep.subr.mxu0 0.0
      %705 = vmatpush2.msra.mxu0 0.0
      %706 = vmatprep.subr.mxu0 0.0
      %707 = vmatpush2.msra.mxu0 0.0
      %708 = vmatprep.subr.mxu0 0.0
      %709 = vmatpush2.msra.mxu0 0.0
      %710 = vmatprep.subr.mxu0 0.0
      %711 = vmatpush2.msra.mxu0 0.0
      %712 = vmatprep.subr.mxu0 0.0
      %713 = vmatpush2.msra.mxu0 0.0
      %714 = vmatprep.mubr.f32.mxu0 0.0
      %715 = vmatmul.mubr.f32.gmra.mxu0 %v508
      %v716 = vpop.f32.mrf.mxu0
      %v717 = vadd.f32 %v497, %v716
      %v718 = vpop.f32.mrf.mxu0
      %719 = vdwg.mxu0
      %720 = vmatprep.subr.mxu0 0.0
      %721 = vmatpush1.msra.mxu0 0.0
      %722 = vmatprep.subr.mxu0 0.0
      %723 = vmatpush1.msra.mxu0 0.0
      %724 = vmatprep.subr.mxu0 0.0
      %725 = vmatpush1.msra.mxu0 0.0
      %726 = vmatprep.subr.mxu0 0.0
      %727 = vmatpush1.msra.mxu0 0.0
      %728 = vmatprep.subr.mxu0 0.0
      %729 = vmatpush1.msra.mxu0 0.0
      %730 = vmatprep.subr.mxu0 0.0
      %731 = vmatpush1.msra.mxu0 0.0
      %732 = vmatprep.subr.mxu0 0.0
      %733 = vmatpush1.msra.mxu0 0.0
      %734 = vmatprep.subr.mxu0 0.0
      %735 = vmatpush1.msra.mxu0 0.0
      %736 = vmatprep.subr.mxu0 0.0
      %737 = vmatpush1.msra.mxu0 0.0
      %738 = vmatprep.subr.mxu0 0.0
      %739 = vmatpush1.msra.mxu0 0.0
      %740 = vmatprep.subr.mxu0 0.0
      %741 = vmatpush1.msra.mxu0 0.0
      %742 = vmatprep.subr.mxu0 0.0
      %743 = vmatpush1.msra.mxu0 0.0
      %744 = vmatprep.subr.mxu0 0.0
      %745 = vmatpush1.msra.mxu0 %v477
      %746 = vmatprep.subr.mxu0 0.0
      %747 = vmatpush1.msra.mxu0 %v476
      %748 = vmatprep.subr.mxu0 0.0
      %749 = vmatpush1.msra.mxu0 %v475
      %750 = vmatprep.subr.mxu0 0.0
      %751 = vmatpush1.msra.mxu0 %v474
      %752 = vmatprep.subr.mxu0 0.0
      %753 = vmatpush2.msra.mxu0 0.0
      %754 = vmatprep.subr.mxu0 0.0
      %755 = vmatpush2.msra.mxu0 0.0
      %756 = vmatprep.subr.mxu0 0.0
      %757 = vmatpush2.msra.mxu0 0.0
      %758 = vmatprep.subr.mxu0 0.0
      %759 = vmatpush2.msra.mxu0 0.0
      %760 = vmatprep.subr.mxu0 0.0
      %761 = vmatpush2.msra.mxu0 0.0
      %762 = vmatprep.subr.mxu0 0.0
      %763 = vmatpush2.msra.mxu0 0.0
      %764 = vmatprep.subr.mxu0 0.0
      %765 = vmatpush2.msra.mxu0 0.0
      %766 = vmatprep.subr.mxu0 0.0
      %767 = vmatpush2.msra.mxu0 0.0
      %768 = vmatprep.subr.mxu0 0.0
      %769 = vmatpush2.msra.mxu0 0.0
      %770 = vmatprep.subr.mxu0 0.0
      %771 = vmatpush2.msra.mxu0 0.0
      %772 = vmatprep.subr.mxu0 0.0
      %773 = vmatpush2.msra.mxu0 0.0
      %774 = vmatprep.subr.mxu0 0.0
      %775 = vmatpush2.msra.mxu0 0.0
      %776 = vmatprep.subr.mxu0 0.0
      %777 = vmatpush2.msra.mxu0 0.0
      %778 = vmatprep.subr.mxu0 0.0
      %779 = vmatpush2.msra.mxu0 0.0
      %780 = vmatprep.subr.mxu0 0.0
      %781 = vmatpush2.msra.mxu0 0.0
      %782 = vmatprep.subr.mxu0 0.0
      %783 = vmatpush2.msra.mxu0 0.0
      %784 = vmatprep.mubr.f32.mxu0 0.0
      %785 = vmatmul.mubr.f32.gmra.mxu0 %v508
      %v786 = vpop.f32.mrf.mxu0
      %v787 = vadd.f32 %v501, %v786
      %v788 = vpop.f32.mrf.mxu0
      %789 = vdwg.mxu0
      %s790 = scalar_lea.vmem %s4, 128
      %v791 = vld [vmem:[%s790] sm:$0xff]
      %v792 = vld [vmem:[%s790 + $0x8] sm:$0xff]
      %v793 = vld [vmem:[%s790 + $0x10] sm:$0xff]
      %v794 = vld [vmem:[%s790 + $0x18] sm:$0xff]
      %v795 = vld [vmem:[%s790 + $0x20] sm:$0xff]
      %v796 = vld [vmem:[%s790 + $0x28] sm:$0xff]
      %v797 = vld [vmem:[%s790 + $0x30] sm:$0xff]
      %v798 = vld [vmem:[%s790 + $0x38] sm:$0xff]
      %v799 = vld [vmem:[%s790 + $0x40] sm:$0xff]
      %v800 = vld [vmem:[%s790 + $0x48] sm:$0xff]
      %v801 = vld [vmem:[%s790 + $0x50] sm:$0xff]
      %v802 = vld [vmem:[%s790 + $0x58] sm:$0xff]
      %v803 = vld [vmem:[%s790 + $0x60] sm:$0xff]
      %v804 = vld [vmem:[%s790 + $0x68] sm:$0xff]
      %v805 = vld [vmem:[%s790 + $0x70] sm:$0xff]
      %v806 = vld [vmem:[%s790 + $0x78] sm:$0xff]
      %s807 = scalar_lea.vmem %s5, 4
      %v808 = vld [vmem:[%s807] sm:$0x1]
      %v809 = vld [vmem:[%s807 + $0x1] sm:$0x1]
      %v810 = vld [vmem:[%s807 + $0x2] sm:$0x1]
      %v811 = vld [vmem:[%s807 + $0x3] sm:$0x1]
      %v816 = vlaneseq
      %v817 = vshrl.u32 %v816, 7
      %v818 = vsub.s32 0, %v817
      %v819 = vrot.slane %v808, %v818
      %v820 = vlaneseq
      %v821 = vshrl.u32 %v820, 7
      %v822 = vsub.s32 0, %v821
      %v823 = vrot.slane %v809, %v822
      %v824 = vlaneseq
      %v825 = vshrl.u32 %v824, 7
      %v826 = vsub.s32 0, %v825
      %v827 = vrot.slane %v810, %v826
      %v828 = vlaneseq
      %v829 = vshrl.u32 %v828, 7
      %v830 = vsub.s32 0, %v829
      %v831 = vrot.slane %v811, %v830
      %836 = vmatprep.subr.mxu0 0.0
      %837 = vmatpush1.msra.mxu0 0.0
      %838 = vmatprep.subr.mxu0 0.0
      %839 = vmatpush1.msra.mxu0 0.0
      %840 = vmatprep.subr.mxu0 0.0
      %841 = vmatpush1.msra.mxu0 0.0
      %842 = vmatprep.subr.mxu0 0.0
      %843 = vmatpush1.msra.mxu0 0.0
      %844 = vmatprep.subr.mxu0 0.0
      %845 = vmatpush1.msra.mxu0 0.0
      %846 = vmatprep.subr.mxu0 0.0
      %847 = vmatpush1.msra.mxu0 0.0
      %848 = vmatprep.subr.mxu0 0.0
      %849 = vmatpush1.msra.mxu0 0.0
      %850 = vmatprep.subr.mxu0 0.0
      %851 = vmatpush1.msra.mxu0 0.0
      %852 = vmatprep.subr.mxu0 0.0
      %853 = vmatpush1.msra.mxu0 0.0
      %854 = vmatprep.subr.mxu0 0.0
      %855 = vmatpush1.msra.mxu0 0.0
      %856 = vmatprep.subr.mxu0 0.0
      %857 = vmatpush1.msra.mxu0 0.0
      %858 = vmatprep.subr.mxu0 0.0
      %859 = vmatpush1.msra.mxu0 0.0
      %860 = vmatprep.subr.mxu0 0.0
      %861 = vmatpush1.msra.mxu0 %v794
      %862 = vmatprep.subr.mxu0 0.0
      %863 = vmatpush1.msra.mxu0 %v793
      %864 = vmatprep.subr.mxu0 0.0
      %865 = vmatpush1.msra.mxu0 %v792
      %866 = vmatprep.subr.mxu0 0.0
      %867 = vmatpush1.msra.mxu0 %v791
      %868 = vmatprep.subr.mxu0 0.0
      %869 = vmatpush2.msra.mxu0 0.0
      %870 = vmatprep.subr.mxu0 0.0
      %871 = vmatpush2.msra.mxu0 0.0
      %872 = vmatprep.subr.mxu0 0.0
      %873 = vmatpush2.msra.mxu0 0.0
      %874 = vmatprep.subr.mxu0 0.0
      %875 = vmatpush2.msra.mxu0 0.0
      %876 = vmatprep.subr.mxu0 0.0
      %877 = vmatpush2.msra.mxu0 0.0
      %878 = vmatprep.subr.mxu0 0.0
      %879 = vmatpush2.msra.mxu0 0.0
      %880 = vmatprep.subr.mxu0 0.0
      %881 = vmatpush2.msra.mxu0 0.0
      %882 = vmatprep.subr.mxu0 0.0
      %883 = vmatpush2.msra.mxu0 0.0
      %884 = vmatprep.subr.mxu0 0.0
      %885 = vmatpush2.msra.mxu0 0.0
      %886 = vmatprep.subr.mxu0 0.0
      %887 = vmatpush2.msra.mxu0 0.0
      %888 = vmatprep.subr.mxu0 0.0
      %889 = vmatpush2.msra.mxu0 0.0
      %890 = vmatprep.subr.mxu0 0.0
      %891 = vmatpush2.msra.mxu0 0.0
      %892 = vmatprep.subr.mxu0 0.0
      %893 = vmatpush2.msra.mxu0 0.0
      %894 = vmatprep.subr.mxu0 0.0
      %895 = vmatpush2.msra.mxu0 0.0
      %896 = vmatprep.subr.mxu0 0.0
      %897 = vmatpush2.msra.mxu0 0.0
      %898 = vmatprep.subr.mxu0 0.0
      %899 = vmatpush2.msra.mxu0 0.0
      %900 = vmatprep.mubr.f32.mxu0 0.0
      %901 = vmatmul.mubr.f32.gmra.mxu0 %v508
      %v902 = vpop.f32.mrf.mxu0
      %v903 = vadd.f32 %v819, %v902
      %v904 = vpop.f32.mrf.mxu0
      %905 = vdwg.mxu0
      %906 = vmatprep.subr.mxu0 0.0
      %907 = vmatpush1.msra.mxu0 0.0
      %908 = vmatprep.subr.mxu0 0.0
      %909 = vmatpush1.msra.mxu0 0.0
      %910 = vmatprep.subr.mxu0 0.0
      %911 = vmatpush1.msra.mxu0 0.0
      %912 = vmatprep.subr.mxu0 0.0
      %913 = vmatpush1.msra.mxu0 0.0
      %914 = vmatprep.subr.mxu0 0.0
      %915 = vmatpush1.msra.mxu0 0.0
      %916 = vmatprep.subr.mxu0 0.0
      %917 = vmatpush1.msra.mxu0 0.0
      %918 = vmatprep.subr.mxu0 0.0
      %919 = vmatpush1.msra.mxu0 0.0
      %920 = vmatprep.subr.mxu0 0.0
      %921 = vmatpush1.msra.mxu0 0.0
      %922 = vmatprep.subr.mxu0 0.0
      %923 = vmatpush1.msra.mxu0 0.0
      %924 = vmatprep.subr.mxu0 0.0
      %925 = vmatpush1.msra.mxu0 0.0
      %926 = vmatprep.subr.mxu0 0.0
      %927 = vmatpush1.msra.mxu0 0.0
      %928 = vmatprep.subr.mxu0 0.0
      %929 = vmatpush1.msra.mxu0 0.0
      %930 = vmatprep.subr.mxu0 0.0
      %931 = vmatpush1.msra.mxu0 %v798
      %932 = vmatprep.subr.mxu0 0.0
      %933 = vmatpush1.msra.mxu0 %v797
      %934 = vmatprep.subr.mxu0 0.0
      %935 = vmatpush1.msra.mxu0 %v796
      %936 = vmatprep.subr.mxu0 0.0
      %937 = vmatpush1.msra.mxu0 %v795
      %938 = vmatprep.subr.mxu0 0.0
      %939 = vmatpush2.msra.mxu0 0.0
      %940 = vmatprep.subr.mxu0 0.0
      %941 = vmatpush2.msra.mxu0 0.0
      %942 = vmatprep.subr.mxu0 0.0
      %943 = vmatpush2.msra.mxu0 0.0
      %944 = vmatprep.subr.mxu0 0.0
      %945 = vmatpush2.msra.mxu0 0.0
      %946 = vmatprep.subr.mxu0 0.0
      %947 = vmatpush2.msra.mxu0 0.0
      %948 = vmatprep.subr.mxu0 0.0
      %949 = vmatpush2.msra.mxu0 0.0
      %950 = vmatprep.subr.mxu0 0.0
      %951 = vmatpush2.msra.mxu0 0.0
      %952 = vmatprep.subr.mxu0 0.0
      %953 = vmatpush2.msra.mxu0 0.0
      %954 = vmatprep.subr.mxu0 0.0
      %955 = vmatpush2.msra.mxu0 0.0
      %956 = vmatprep.subr.mxu0 0.0
      %957 = vmatpush2.msra.mxu0 0.0
      %958 = vmatprep.subr.mxu0 0.0
      %959 = vmatpush2.msra.mxu0 0.0
      %960 = vmatprep.subr.mxu0 0.0
      %961 = vmatpush2.msra.mxu0 0.0
      %962 = vmatprep.subr.mxu0 0.0
      %963 = vmatpush2.msra.mxu0 0.0
      %964 = vmatprep.subr.mxu0 0.0
      %965 = vmatpush2.msra.mxu0 0.0
      %966 = vmatprep.subr.mxu0 0.0
      %967 = vmatpush2.msra.mxu0 0.0
      %968 = vmatprep.subr.mxu0 0.0
      %969 = vmatpush2.msra.mxu0 0.0
      %970 = vmatprep.mubr.f32.mxu0 0.0
      %971 = vmatmul.mubr.f32.gmra.mxu0 %v508
      %v972 = vpop.f32.mrf.mxu0
      %v973 = vadd.f32 %v823, %v972
      %v974 = vpop.f32.mrf.mxu0
      %975 = vdwg.mxu0
      %976 = vmatprep.subr.mxu0 0.0
      %977 = vmatpush1.msra.mxu0 0.0
      %978 = vmatprep.subr.mxu0 0.0
      %979 = vmatpush1.msra.mxu0 0.0
      %980 = vmatprep.subr.mxu0 0.0
      %981 = vmatpush1.msra.mxu0 0.0
      %982 = vmatprep.subr.mxu0 0.0
      %983 = vmatpush1.msra.mxu0 0.0
      %984 = vmatprep.subr.mxu0 0.0
      %985 = vmatpush1.msra.mxu0 0.0
      %986 = vmatprep.subr.mxu0 0.0
      %987 = vmatpush1.msra.mxu0 0.0
      %988 = vmatprep.subr.mxu0 0.0
      %989 = vmatpush1.msra.mxu0 0.0
      %990 = vmatprep.subr.mxu0 0.0
      %991 = vmatpush1.msra.mxu0 0.0
      %992 = vmatprep.subr.mxu0 0.0
      %993 = vmatpush1.msra.mxu0 0.0
      %994 = vmatprep.subr.mxu0 0.0
      %995 = vmatpush1.msra.mxu0 0.0
      %996 = vmatprep.subr.mxu0 0.0
      %997 = vmatpush1.msra.mxu0 0.0
      %998 = vmatprep.subr.mxu0 0.0
      %999 = vmatpush1.msra.mxu0 0.0
      %1000 = vmatprep.subr.mxu0 0.0
      %1001 = vmatpush1.msra.mxu0 %v802
      %1002 = vmatprep.subr.mxu0 0.0
      %1003 = vmatpush1.msra.mxu0 %v801
      %1004 = vmatprep.subr.mxu0 0.0
      %1005 = vmatpush1.msra.mxu0 %v800
      %1006 = vmatprep.subr.mxu0 0.0
      %1007 = vmatpush1.msra.mxu0 %v799
      %1008 = vmatprep.subr.mxu0 0.0
      %1009 = vmatpush2.msra.mxu0 0.0
      %1010 = vmatprep.subr.mxu0 0.0
      %1011 = vmatpush2.msra.mxu0 0.0
      %1012 = vmatprep.subr.mxu0 0.0
      %1013 = vmatpush2.msra.mxu0 0.0
      %1014 = vmatprep.subr.mxu0 0.0
      %1015 = vmatpush2.msra.mxu0 0.0
      %1016 = vmatprep.subr.mxu0 0.0
      %1017 = vmatpush2.msra.mxu0 0.0
      %1018 = vmatprep.subr.mxu0 0.0
      %1019 = vmatpush2.msra.mxu0 0.0
      %1020 = vmatprep.subr.mxu0 0.0
      %1021 = vmatpush2.msra.mxu0 0.0
      %1022 = vmatprep.subr.mxu0 0.0
      %1023 = vmatpush2.msra.mxu0 0.0
      %1024 = vmatprep.subr.mxu0 0.0
      %1025 = vmatpush2.msra.mxu0 0.0
      %1026 = vmatprep.subr.mxu0 0.0
      %1027 = vmatpush2.msra.mxu0 0.0
      %1028 = vmatprep.subr.mxu0 0.0
      %1029 = vmatpush2.msra.mxu0 0.0
      %1030 = vmatprep.subr.mxu0 0.0
      %1031 = vmatpush2.msra.mxu0 0.0
      %1032 = vmatprep.subr.mxu0 0.0
      %1033 = vmatpush2.msra.mxu0 0.0
      %1034 = vmatprep.subr.mxu0 0.0
      %1035 = vmatpush2.msra.mxu0 0.0
      %1036 = vmatprep.subr.mxu0 0.0
      %1037 = vmatpush2.msra.mxu0 0.0
      %1038 = vmatprep.subr.mxu0 0.0
      %1039 = vmatpush2.msra.mxu0 0.0
      %1040 = vmatprep.mubr.f32.mxu0 0.0
      %1041 = vmatmul.mubr.f32.gmra.mxu0 %v508
      %v1042 = vpop.f32.mrf.mxu0
      %v1043 = vadd.f32 %v827, %v1042
      %v1044 = vpop.f32.mrf.mxu0
      %1045 = vdwg.mxu0
      %1046 = vmatprep.subr.mxu0 0.0
      %1047 = vmatpush1.msra.mxu0 0.0
      %1048 = vmatprep.subr.mxu0 0.0
      %1049 = vmatpush1.msra.mxu0 0.0
      %1050 = vmatprep.subr.mxu0 0.0
      %1051 = vmatpush1.msra.mxu0 0.0
      %1052 = vmatprep.subr.mxu0 0.0
      %1053 = vmatpush1.msra.mxu0 0.0
      %1054 = vmatprep.subr.mxu0 0.0
      %1055 = vmatpush1.msra.mxu0 0.0
      %1056 = vmatprep.subr.mxu0 0.0
      %1057 = vmatpush1.msra.mxu0 0.0
      %1058 = vmatprep.subr.mxu0 0.0
      %1059 = vmatpush1.msra.mxu0 0.0
      %1060 = vmatprep.subr.mxu0 0.0
      %1061 = vmatpush1.msra.mxu0 0.0
      %1062 = vmatprep.subr.mxu0 0.0
      %1063 = vmatpush1.msra.mxu0 0.0
      %1064 = vmatprep.subr.mxu0 0.0
      %1065 = vmatpush1.msra.mxu0 0.0
      %1066 = vmatprep.subr.mxu0 0.0
      %1067 = vmatpush1.msra.mxu0 0.0
      %1068 = vmatprep.subr.mxu0 0.0
      %1069 = vmatpush1.msra.mxu0 0.0
      %1070 = vmatprep.subr.mxu0 0.0
      %1071 = vmatpush1.msra.mxu0 %v806
      %1072 = vmatprep.subr.mxu0 0.0
      %1073 = vmatpush1.msra.mxu0 %v805
      %1074 = vmatprep.subr.mxu0 0.0
      %1075 = vmatpush1.msra.mxu0 %v804
      %1076 = vmatprep.subr.mxu0 0.0
      %1077 = vmatpush1.msra.mxu0 %v803
      %1078 = vmatprep.subr.mxu0 0.0
      %1079 = vmatpush2.msra.mxu0 0.0
      %1080 = vmatprep.subr.mxu0 0.0
      %1081 = vmatpush2.msra.mxu0 0.0
      %1082 = vmatprep.subr.mxu0 0.0
      %1083 = vmatpush2.msra.mxu0 0.0
      %1084 = vmatprep.subr.mxu0 0.0
      %1085 = vmatpush2.msra.mxu0 0.0
      %1086 = vmatprep.subr.mxu0 0.0
      %1087 = vmatpush2.msra.mxu0 0.0
      %1088 = vmatprep.subr.mxu0 0.0
      %1089 = vmatpush2.msra.mxu0 0.0
      %1090 = vmatprep.subr.mxu0 0.0
      %1091 = vmatpush2.msra.mxu0 0.0
      %1092 = vmatprep.subr.mxu0 0.0
      %1093 = vmatpush2.msra.mxu0 0.0
      %1094 = vmatprep.subr.mxu0 0.0
      %1095 = vmatpush2.msra.mxu0 0.0
      %1096 = vmatprep.subr.mxu0 0.0
      %1097 = vmatpush2.msra.mxu0 0.0
      %1098 = vmatprep.subr.mxu0 0.0
      %1099 = vmatpush2.msra.mxu0 0.0
      %1100 = vmatprep.subr.mxu0 0.0
      %1101 = vmatpush2.msra.mxu0 0.0
      %1102 = vmatprep.subr.mxu0 0.0
      %1103 = vmatpush2.msra.mxu0 0.0
      %1104 = vmatprep.subr.mxu0 0.0
      %1105 = vmatpush2.msra.mxu0 0.0
      %1106 = vmatprep.subr.mxu0 0.0
      %1107 = vmatpush2.msra.mxu0 0.0
      %1108 = vmatprep.subr.mxu0 0.0
      %1109 = vmatpush2.msra.mxu0 0.0
      %1110 = vmatprep.mubr.f32.mxu0 0.0
      %1111 = vmatmul.mubr.f32.gmra.mxu0 %v508
      %v1112 = vpop.f32.mrf.mxu0
      %v1113 = vadd.f32 %v831, %v1112
      %v1114 = vpop.f32.mrf.mxu0
      %1115 = vdwg.mxu0
      %s1116 = scalar_lea.vmem %s4, 256
      %v1117 = vld [vmem:[%s1116] sm:$0xff]
      %v1118 = vld [vmem:[%s1116 + $0x8] sm:$0xff]
      %v1119 = vld [vmem:[%s1116 + $0x10] sm:$0xff]
      %v1120 = vld [vmem:[%s1116 + $0x18] sm:$0xff]
      %v1121 = vld [vmem:[%s1116 + $0x20] sm:$0xff]
      %v1122 = vld [vmem:[%s1116 + $0x28] sm:$0xff]
      %v1123 = vld [vmem:[%s1116 + $0x30] sm:$0xff]
      %v1124 = vld [vmem:[%s1116 + $0x38] sm:$0xff]
      %v1125 = vld [vmem:[%s1116 + $0x40] sm:$0xff]
      %v1126 = vld [vmem:[%s1116 + $0x48] sm:$0xff]
      %v1127 = vld [vmem:[%s1116 + $0x50] sm:$0xff]
      %v1128 = vld [vmem:[%s1116 + $0x58] sm:$0xff]
      %v1129 = vld [vmem:[%s1116 + $0x60] sm:$0xff]
      %v1130 = vld [vmem:[%s1116 + $0x68] sm:$0xff]
      %v1131 = vld [vmem:[%s1116 + $0x70] sm:$0xff]
      %v1132 = vld [vmem:[%s1116 + $0x78] sm:$0xff]
      %s1133 = scalar_lea.vmem %s5, 8
      %v1134 = vld [vmem:[%s1133] sm:$0x1]
      %v1135 = vld [vmem:[%s1133 + $0x1] sm:$0x1]
      %v1136 = vld [vmem:[%s1133 + $0x2] sm:$0x1]
      %v1137 = vld [vmem:[%s1133 + $0x3] sm:$0x1]
      %v1142 = vlaneseq
      %v1143 = vshrl.u32 %v1142, 7
      %v1144 = vsub.s32 0, %v1143
      %v1145 = vrot.slane %v1134, %v1144
      %v1146 = vlaneseq
      %v1147 = vshrl.u32 %v1146, 7
      %v1148 = vsub.s32 0, %v1147
      %v1149 = vrot.slane %v1135, %v1148
      %v1150 = vlaneseq
      %v1151 = vshrl.u32 %v1150, 7
      %v1152 = vsub.s32 0, %v1151
      %v1153 = vrot.slane %v1136, %v1152
      %v1154 = vlaneseq
      %v1155 = vshrl.u32 %v1154, 7
      %v1156 = vsub.s32 0, %v1155
      %v1157 = vrot.slane %v1137, %v1156
      %1162 = vmatprep.subr.mxu0 0.0
      %1163 = vmatpush1.msra.mxu0 0.0
      %1164 = vmatprep.subr.mxu0 0.0
      %1165 = vmatpush1.msra.mxu0 0.0
      %1166 = vmatprep.subr.mxu0 0.0
      %1167 = vmatpush1.msra.mxu0 0.0
      %1168 = vmatprep.subr.mxu0 0.0
      %1169 = vmatpush1.msra.mxu0 0.0
      %1170 = vmatprep.subr.mxu0 0.0
      %1171 = vmatpush1.msra.mxu0 0.0
      %1172 = vmatprep.subr.mxu0 0.0
      %1173 = vmatpush1.msra.mxu0 0.0
      %1174 = vmatprep.subr.mxu0 0.0
      %1175 = vmatpush1.msra.mxu0 0.0
      %1176 = vmatprep.subr.mxu0 0.0
      %1177 = vmatpush1.msra.mxu0 0.0
      %1178 = vmatprep.subr.mxu0 0.0
      %1179 = vmatpush1.msra.mxu0 0.0
      %1180 = vmatprep.subr.mxu0 0.0
      %1181 = vmatpush1.msra.mxu0 0.0
      %1182 = vmatprep.subr.mxu0 0.0
      %1183 = vmatpush1.msra.mxu0 0.0
      %1184 = vmatprep.subr.mxu0 0.0
      %1185 = vmatpush1.msra.mxu0 0.0
      %1186 = vmatprep.subr.mxu0 0.0
      %1187 = vmatpush1.msra.mxu0 %v1120
      %1188 = vmatprep.subr.mxu0 0.0
      %1189 = vmatpush1.msra.mxu0 %v1119
      %1190 = vmatprep.subr.mxu0 0.0
      %1191 = vmatpush1.msra.mxu0 %v1118
      %1192 = vmatprep.subr.mxu0 0.0
      %1193 = vmatpush1.msra.mxu0 %v1117
      %1194 = vmatprep.subr.mxu0 0.0
      %1195 = vmatpush2.msra.mxu0 0.0
      %1196 = vmatprep.subr.mxu0 0.0
      %1197 = vmatpush2.msra.mxu0 0.0
      %1198 = vmatprep.subr.mxu0 0.0
      %1199 = vmatpush2.msra.mxu0 0.0
      %1200 = vmatprep.subr.mxu0 0.0
      %1201 = vmatpush2.msra.mxu0 0.0
      %1202 = vmatprep.subr.mxu0 0.0
      %1203 = vmatpush2.msra.mxu0 0.0
      %1204 = vmatprep.subr.mxu0 0.0
      %1205 = vmatpush2.msra.mxu0 0.0
      %1206 = vmatprep.subr.mxu0 0.0
      %1207 = vmatpush2.msra.mxu0 0.0
      %1208 = vmatprep.subr.mxu0 0.0
      %1209 = vmatpush2.msra.mxu0 0.0
      %1210 = vmatprep.subr.mxu0 0.0
      %1211 = vmatpush2.msra.mxu0 0.0
      %1212 = vmatprep.subr.mxu0 0.0
      %1213 = vmatpush2.msra.mxu0 0.0
      %1214 = vmatprep.subr.mxu0 0.0
      %1215 = vmatpush2.msra.mxu0 0.0
      %1216 = vmatprep.subr.mxu0 0.0
      %1217 = vmatpush2.msra.mxu0 0.0
      %1218 = vmatprep.subr.mxu0 0.0
      %1219 = vmatpush2.msra.mxu0 0.0
      %1220 = vmatprep.subr.mxu0 0.0
      %1221 = vmatpush2.msra.mxu0 0.0
      %1222 = vmatprep.subr.mxu0 0.0
      %1223 = vmatpush2.msra.mxu0 0.0
      %1224 = vmatprep.subr.mxu0 0.0
      %1225 = vmatpush2.msra.mxu0 0.0
      %1226 = vmatprep.mubr.f32.mxu0 0.0
      %1227 = vmatmul.mubr.f32.gmra.mxu0 %v508
      %v1228 = vpop.f32.mrf.mxu0
      %v1229 = vadd.f32 %v1145, %v1228
      %v1230 = vpop.f32.mrf.mxu0
      %1231 = vdwg.mxu0
      %1232 = vmatprep.subr.mxu0 0.0
      %1233 = vmatpush1.msra.mxu0 0.0
      %1234 = vmatprep.subr.mxu0 0.0
      %1235 = vmatpush1.msra.mxu0 0.0
      %1236 = vmatprep.subr.mxu0 0.0
      %1237 = vmatpush1.msra.mxu0 0.0
      %1238 = vmatprep.subr.mxu0 0.0
      %1239 = vmatpush1.msra.mxu0 0.0
      %1240 = vmatprep.subr.mxu0 0.0
      %1241 = vmatpush1.msra.mxu0 0.0
      %1242 = vmatprep.subr.mxu0 0.0
      %1243 = vmatpush1.msra.mxu0 0.0
      %1244 = vmatprep.subr.mxu0 0.0
      %1245 = vmatpush1.msra.mxu0 0.0
      %1246 = vmatprep.subr.mxu0 0.0
      %1247 = vmatpush1.msra.mxu0 0.0
      %1248 = vmatprep.subr.mxu0 0.0
      %1249 = vmatpush1.msra.mxu0 0.0
      %1250 = vmatprep.subr.mxu0 0.0
      %1251 = vmatpush1.msra.mxu0 0.0
      %1252 = vmatprep.subr.mxu0 0.0
      %1253 = vmatpush1.msra.mxu0 0.0
      %1254 = vmatprep.subr.mxu0 0.0
      %1255 = vmatpush1.msra.mxu0 0.0
      %1256 = vmatprep.subr.mxu0 0.0
      %1257 = vmatpush1.msra.mxu0 %v1124
      %1258 = vmatprep.subr.mxu0 0.0
      %1259 = vmatpush1.msra.mxu0 %v1123
      %1260 = vmatprep.subr.mxu0 0.0
      %1261 = vmatpush1.msra.mxu0 %v1122
      %1262 = vmatprep.subr.mxu0 0.0
      %1263 = vmatpush1.msra.mxu0 %v1121
      %1264 = vmatprep.subr.mxu0 0.0
      %1265 = vmatpush2.msra.mxu0 0.0
      %1266 = vmatprep.subr.mxu0 0.0
      %1267 = vmatpush2.msra.mxu0 0.0
      %1268 = vmatprep.subr.mxu0 0.0
      %1269 = vmatpush2.msra.mxu0 0.0
      %1270 = vmatprep.subr.mxu0 0.0
      %1271 = vmatpush2.msra.mxu0 0.0
      %1272 = vmatprep.subr.mxu0 0.0
      %1273 = vmatpush2.msra.mxu0 0.0
      %1274 = vmatprep.subr.mxu0 0.0
      %1275 = vmatpush2.msra.mxu0 0.0
      %1276 = vmatprep.subr.mxu0 0.0
      %1277 = vmatpush2.msra.mxu0 0.0
      %1278 = vmatprep.subr.mxu0 0.0
      %1279 = vmatpush2.msra.mxu0 0.0
      %1280 = vmatprep.subr.mxu0 0.0
      %1281 = vmatpush2.msra.mxu0 0.0
      %1282 = vmatprep.subr.mxu0 0.0
      %1283 = vmatpush2.msra.mxu0 0.0
      %1284 = vmatprep.subr.mxu0 0.0
      %1285 = vmatpush2.msra.mxu0 0.0
      %1286 = vmatprep.subr.mxu0 0.0
      %1287 = vmatpush2.msra.mxu0 0.0
      %1288 = vmatprep.subr.mxu0 0.0
      %1289 = vmatpush2.msra.mxu0 0.0
      %1290 = vmatprep.subr.mxu0 0.0
      %1291 = vmatpush2.msra.mxu0 0.0
      %1292 = vmatprep.subr.mxu0 0.0
      %1293 = vmatpush2.msra.mxu0 0.0
      %1294 = vmatprep.subr.mxu0 0.0
      %1295 = vmatpush2.msra.mxu0 0.0
      %1296 = vmatprep.mubr.f32.mxu0 0.0
      %1297 = vmatmul.mubr.f32.gmra.mxu0 %v508
      %v1298 = vpop.f32.mrf.mxu0
      %v1299 = vadd.f32 %v1149, %v1298
      %v1300 = vpop.f32.mrf.mxu0
      %1301 = vdwg.mxu0
      %1302 = vmatprep.subr.mxu0 0.0
      %1303 = vmatpush1.msra.mxu0 0.0
      %1304 = vmatprep.subr.mxu0 0.0
      %1305 = vmatpush1.msra.mxu0 0.0
      %1306 = vmatprep.subr.mxu0 0.0
      %1307 = vmatpush1.msra.mxu0 0.0
      %1308 = vmatprep.subr.mxu0 0.0
      %1309 = vmatpush1.msra.mxu0 0.0
      %1310 = vmatprep.subr.mxu0 0.0
      %1311 = vmatpush1.msra.mxu0 0.0
      %1312 = vmatprep.subr.mxu0 0.0
      %1313 = vmatpush1.msra.mxu0 0.0
      %1314 = vmatprep.subr.mxu0 0.0
      %1315 = vmatpush1.msra.mxu0 0.0
      %1316 = vmatprep.subr.mxu0 0.0
      %1317 = vmatpush1.msra.mxu0 0.0
      %1318 = vmatprep.subr.mxu0 0.0
      %1319 = vmatpush1.msra.mxu0 0.0
      %1320 = vmatprep.subr.mxu0 0.0
      %1321 = vmatpush1.msra.mxu0 0.0
      %1322 = vmatprep.subr.mxu0 0.0
      %1323 = vmatpush1.msra.mxu0 0.0
      %1324 = vmatprep.subr.mxu0 0.0
      %1325 = vmatpush1.msra.mxu0 0.0
      %1326 = vmatprep.subr.mxu0 0.0
      %1327 = vmatpush1.msra.mxu0 %v1128
      %1328 = vmatprep.subr.mxu0 0.0
      %1329 = vmatpush1.msra.mxu0 %v1127
      %1330 = vmatprep.subr.mxu0 0.0
      %1331 = vmatpush1.msra.mxu0 %v1126
      %1332 = vmatprep.subr.mxu0 0.0
      %1333 = vmatpush1.msra.mxu0 %v1125
      %1334 = vmatprep.subr.mxu0 0.0
      %1335 = vmatpush2.msra.mxu0 0.0
      %1336 = vmatprep.subr.mxu0 0.0
      %1337 = vmatpush2.msra.mxu0 0.0
      %1338 = vmatprep.subr.mxu0 0.0
      %1339 = vmatpush2.msra.mxu0 0.0
      %1340 = vmatprep.subr.mxu0 0.0
      %1341 = vmatpush2.msra.mxu0 0.0
      %1342 = vmatprep.subr.mxu0 0.0
      %1343 = vmatpush2.msra.mxu0 0.0
      %1344 = vmatprep.subr.mxu0 0.0
      %1345 = vmatpush2.msra.mxu0 0.0
      %1346 = vmatprep.subr.mxu0 0.0
      %1347 = vmatpush2.msra.mxu0 0.0
      %1348 = vmatprep.subr.mxu0 0.0
      %1349 = vmatpush2.msra.mxu0 0.0
      %1350 = vmatprep.subr.mxu0 0.0
      %1351 = vmatpush2.msra.mxu0 0.0
      %1352 = vmatprep.subr.mxu0 0.0
      %1353 = vmatpush2.msra.mxu0 0.0
      %1354 = vmatprep.subr.mxu0 0.0
      %1355 = vmatpush2.msra.mxu0 0.0
      %1356 = vmatprep.subr.mxu0 0.0
      %1357 = vmatpush2.msra.mxu0 0.0
      %1358 = vmatprep.subr.mxu0 0.0
      %1359 = vmatpush2.msra.mxu0 0.0
      %1360 = vmatprep.subr.mxu0 0.0
      %1361 = vmatpush2.msra.mxu0 0.0
      %1362 = vmatprep.subr.mxu0 0.0
      %1363 = vmatpush2.msra.mxu0 0.0
      %1364 = vmatprep.subr.mxu0 0.0
      %1365 = vmatpush2.msra.mxu0 0.0
      %1366 = vmatprep.mubr.f32.mxu0 0.0
      %1367 = vmatmul.mubr.f32.gmra.mxu0 %v508
      %v1368 = vpop.f32.mrf.mxu0
      %v1369 = vadd.f32 %v1153, %v1368
      %v1370 = vpop.f32.mrf.mxu0
      %1371 = vdwg.mxu0
      %1372 = vmatprep.subr.mxu0 0.0
      %1373 = vmatpush1.msra.mxu0 0.0
      %1374 = vmatprep.subr.mxu0 0.0
      %1375 = vmatpush1.msra.mxu0 0.0
      %1376 = vmatprep.subr.mxu0 0.0
      %1377 = vmatpush1.msra.mxu0 0.0
      %1378 = vmatprep.subr.mxu0 0.0
      %1379 = vmatpush1.msra.mxu0 0.0
      %1380 = vmatprep.subr.mxu0 0.0
      %1381 = vmatpush1.msra.mxu0 0.0
      %1382 = vmatprep.subr.mxu0 0.0
      %1383 = vmatpush1.msra.mxu0 0.0
      %1384 = vmatprep.subr.mxu0 0.0
      %1385 = vmatpush1.msra.mxu0 0.0
      %1386 = vmatprep.subr.mxu0 0.0
      %1387 = vmatpush1.msra.mxu0 0.0
      %1388 = vmatprep.subr.mxu0 0.0
      %1389 = vmatpush1.msra.mxu0 0.0
      %1390 = vmatprep.subr.mxu0 0.0
      %1391 = vmatpush1.msra.mxu0 0.0
      %1392 = vmatprep.subr.mxu0 0.0
      %1393 = vmatpush1.msra.mxu0 0.0
      %1394 = vmatprep.subr.mxu0 0.0
      %1395 = vmatpush1.msra.mxu0 0.0
      %1396 = vmatprep.subr.mxu0 0.0
      %1397 = vmatpush1.msra.mxu0 %v1132
      %1398 = vmatprep.subr.mxu0 0.0
      %1399 = vmatpush1.msra.mxu0 %v1131
      %1400 = vmatprep.subr.mxu0 0.0
      %1401 = vmatpush1.msra.mxu0 %v1130
      %1402 = vmatprep.subr.mxu0 0.0
      %1403 = vmatpush1.msra.mxu0 %v1129
      %1404 = vmatprep.subr.mxu0 0.0
      %1405 = vmatpush2.msra.mxu0 0.0
      %1406 = vmatprep.subr.mxu0 0.0
      %1407 = vmatpush2.msra.mxu0 0.0
      %1408 = vmatprep.subr.mxu0 0.0
      %1409 = vmatpush2.msra.mxu0 0.0
      %1410 = vmatprep.subr.mxu0 0.0
      %1411 = vmatpush2.msra.mxu0 0.0
      %1412 = vmatprep.subr.mxu0 0.0
      %1413 = vmatpush2.msra.mxu0 0.0
      %1414 = vmatprep.subr.mxu0 0.0
      %1415 = vmatpush2.msra.mxu0 0.0
      %1416 = vmatprep.subr.mxu0 0.0
      %1417 = vmatpush2.msra.mxu0 0.0
      %1418 = vmatprep.subr.mxu0 0.0
      %1419 = vmatpush2.msra.mxu0 0.0
      %1420 = vmatprep.subr.mxu0 0.0
      %1421 = vmatpush2.msra.mxu0 0.0
      %1422 = vmatprep.subr.mxu0 0.0
      %1423 = vmatpush2.msra.mxu0 0.0
      %1424 = vmatprep.subr.mxu0 0.0
      %1425 = vmatpush2.msra.mxu0 0.0
      %1426 = vmatprep.subr.mxu0 0.0
      %1427 = vmatpush2.msra.mxu0 0.0
      %1428 = vmatprep.subr.mxu0 0.0
      %1429 = vmatpush2.msra.mxu0 0.0
      %1430 = vmatprep.subr.mxu0 0.0
      %1431 = vmatpush2.msra.mxu0 0.0
      %1432 = vmatprep.subr.mxu0 0.0
      %1433 = vmatpush2.msra.mxu0 0.0
      %1434 = vmatprep.subr.mxu0 0.0
      %1435 = vmatpush2.msra.mxu0 0.0
      %1436 = vmatprep.mubr.f32.mxu0 0.0
      %1437 = vmatmul.mubr.f32.gmra.mxu0 %v508
      %v1438 = vpop.f32.mrf.mxu0
      %v1439 = vadd.f32 %v1157, %v1438
      %v1440 = vpop.f32.mrf.mxu0
      %1441 = vdwg.mxu0
      %v1442 = vmul.f32 %v577, 0.35355338
      %v1443 = vmul.f32 %v647, 0.35355338
      %v1444 = vmul.f32 %v717, 0.35355338
      %v1445 = vmul.f32 %v787, 0.35355338
      %vm1446 = vcmask 64512
      %v1448 = vsel %vm1446, %v1442, 0
      %v1451 = vsel %vm1446, %v903, 0
      %1453 = vmatprep.subr.mxu0 0.0
      %1454 = vmatpush1.xpose.msra.mxu0 0.0
      %1455 = vmatprep.subr.mxu0 0.0
      %1456 = vmatpush1.xpose.msra.mxu0 0.0
      %1457 = vmatprep.subr.mxu0 0.0
      %1458 = vmatpush1.xpose.msra.mxu0 0.0
      %1459 = vmatprep.subr.mxu0 0.0
      %1460 = vmatpush1.xpose.msra.mxu0 0.0
      %1461 = vmatprep.subr.mxu0 0.0
      %1462 = vmatpush1.xpose.msra.mxu0 0.0
      %1463 = vmatprep.subr.mxu0 0.0
      %1464 = vmatpush1.xpose.msra.mxu0 0.0
      %1465 = vmatprep.subr.mxu0 0.0
      %1466 = vmatpush1.xpose.msra.mxu0 0.0
      %1467 = vmatprep.subr.mxu0 0.0
      %1468 = vmatpush1.xpose.msra.mxu0 0.0
      %1469 = vmatprep.subr.mxu0 0.0
      %1470 = vmatpush1.xpose.msra.mxu0 0.0
      %1471 = vmatprep.subr.mxu0 0.0
      %1472 = vmatpush1.xpose.msra.mxu0 0.0
      %1473 = vmatprep.subr.mxu0 0.0
      %1474 = vmatpush1.xpose.msra.mxu0 0.0
      %1475 = vmatprep.subr.mxu0 0.0
      %1476 = vmatpush1.xpose.msra.mxu0 0.0
      %1477 = vmatprep.subr.mxu0 0.0
      %1478 = vmatpush1.xpose.msra.mxu0 0.0
      %1479 = vmatprep.subr.mxu0 0.0
      %1480 = vmatpush1.xpose.msra.mxu0 0.0
      %1481 = vmatprep.subr.mxu0 0.0
      %1482 = vmatpush1.xpose.msra.mxu0 0.0
      %1483 = vmatprep.subr.mxu0 0.0
      %1484 = vmatpush1.xpose.msra.mxu0 %v1451
      %1485 = vmatprep.subr.mxu0 0.0
      %1486 = vmatpush2.xpose.msra.mxu0 0.0
      %1487 = vmatprep.subr.mxu0 0.0
      %1488 = vmatpush2.xpose.msra.mxu0 0.0
      %1489 = vmatprep.subr.mxu0 0.0
      %1490 = vmatpush2.xpose.msra.mxu0 0.0
      %1491 = vmatprep.subr.mxu0 0.0
      %1492 = vmatpush2.xpose.msra.mxu0 0.0
      %1493 = vmatprep.subr.mxu0 0.0
      %1494 = vmatpush2.xpose.msra.mxu0 0.0
      %1495 = vmatprep.subr.mxu0 0.0
      %1496 = vmatpush2.xpose.msra.mxu0 0.0
      %1497 = vmatprep.subr.mxu0 0.0
      %1498 = vmatpush2.xpose.msra.mxu0 0.0
      %1499 = vmatprep.subr.mxu0 0.0
      %1500 = vmatpush2.xpose.msra.mxu0 0.0
      %1501 = vmatprep.subr.mxu0 0.0
      %1502 = vmatpush2.xpose.msra.mxu0 0.0
      %1503 = vmatprep.subr.mxu0 0.0
      %1504 = vmatpush2.xpose.msra.mxu0 0.0
      %1505 = vmatprep.subr.mxu0 0.0
      %1506 = vmatpush2.xpose.msra.mxu0 0.0
      %1507 = vmatprep.subr.mxu0 0.0
      %1508 = vmatpush2.xpose.msra.mxu0 0.0
      %1509 = vmatprep.subr.mxu0 0.0
      %1510 = vmatpush2.xpose.msra.mxu0 0.0
      %1511 = vmatprep.subr.mxu0 0.0
      %1512 = vmatpush2.xpose.msra.mxu0 0.0
      %1513 = vmatprep.subr.mxu0 0.0
      %1514 = vmatpush2.xpose.msra.mxu0 0.0
      %1515 = vmatprep.subr.mxu0 0.0
      %1516 = vmatpush2.xpose.msra.mxu0 0.0
      %1517 = vmatprep.mubr.f32.mxu0 0.0
      %1518 = vmatmul.mubr.f32.gmra.mxu0 %v1448
      %v1519 = vpop.f32.mrf.mxu0
      %v1520 = vadd.f32 0.0, %v1519
      %v1521 = vpop.f32.mrf.mxu0
      %1522 = vdwg.mxu0
      %v1524 = vsel %vm1446, %v1443, 0
      %v1527 = vsel %vm1446, %v973, 0
      %1529 = vmatprep.subr.mxu0 0.0
      %1530 = vmatpush1.xpose.msra.mxu0 0.0
      %1531 = vmatprep.subr.mxu0 0.0
      %1532 = vmatpush1.xpose.msra.mxu0 0.0
      %1533 = vmatprep.subr.mxu0 0.0
      %1534 = vmatpush1.xpose.msra.mxu0 0.0
      %1535 = vmatprep.subr.mxu0 0.0
      %1536 = vmatpush1.xpose.msra.mxu0 0.0
      %1537 = vmatprep.subr.mxu0 0.0
      %1538 = vmatpush1.xpose.msra.mxu0 0.0
      %1539 = vmatprep.subr.mxu0 0.0
      %1540 = vmatpush1.xpose.msra.mxu0 0.0
      %1541 = vmatprep.subr.mxu0 0.0
      %1542 = vmatpush1.xpose.msra.mxu0 0.0
      %1543 = vmatprep.subr.mxu0 0.0
      %1544 = vmatpush1.xpose.msra.mxu0 0.0
      %1545 = vmatprep.subr.mxu0 0.0
      %1546 = vmatpush1.xpose.msra.mxu0 0.0
      %1547 = vmatprep.subr.mxu0 0.0
      %1548 = vmatpush1.xpose.msra.mxu0 0.0
      %1549 = vmatprep.subr.mxu0 0.0
      %1550 = vmatpush1.xpose.msra.mxu0 0.0
      %1551 = vmatprep.subr.mxu0 0.0
      %1552 = vmatpush1.xpose.msra.mxu0 0.0
      %1553 = vmatprep.subr.mxu0 0.0
      %1554 = vmatpush1.xpose.msra.mxu0 0.0
      %1555 = vmatprep.subr.mxu0 0.0
      %1556 = vmatpush1.xpose.msra.mxu0 0.0
      %1557 = vmatprep.subr.mxu0 0.0
      %1558 = vmatpush1.xpose.msra.mxu0 0.0
      %1559 = vmatprep.subr.mxu0 0.0
      %1560 = vmatpush1.xpose.msra.mxu0 %v1527
      %1561 = vmatprep.subr.mxu0 0.0
      %1562 = vmatpush2.xpose.msra.mxu0 0.0
      %1563 = vmatprep.subr.mxu0 0.0
      %1564 = vmatpush2.xpose.msra.mxu0 0.0
      %1565 = vmatprep.subr.mxu0 0.0
      %1566 = vmatpush2.xpose.msra.mxu0 0.0
      %1567 = vmatprep.subr.mxu0 0.0
      %1568 = vmatpush2.xpose.msra.mxu0 0.0
      %1569 = vmatprep.subr.mxu0 0.0
      %1570 = vmatpush2.xpose.msra.mxu0 0.0
      %1571 = vmatprep.subr.mxu0 0.0
      %1572 = vmatpush2.xpose.msra.mxu0 0.0
      %1573 = vmatprep.subr.mxu0 0.0
      %1574 = vmatpush2.xpose.msra.mxu0 0.0
      %1575 = vmatprep.subr.mxu0 0.0
      %1576 = vmatpush2.xpose.msra.mxu0 0.0
      %1577 = vmatprep.subr.mxu0 0.0
      %1578 = vmatpush2.xpose.msra.mxu0 0.0
      %1579 = vmatprep.subr.mxu0 0.0
      %1580 = vmatpush2.xpose.msra.mxu0 0.0
      %1581 = vmatprep.subr.mxu0 0.0
      %1582 = vmatpush2.xpose.msra.mxu0 0.0
      %1583 = vmatprep.subr.mxu0 0.0
      %1584 = vmatpush2.xpose.msra.mxu0 0.0
      %1585 = vmatprep.subr.mxu0 0.0
      %1586 = vmatpush2.xpose.msra.mxu0 0.0
      %1587 = vmatprep.subr.mxu0 0.0
      %1588 = vmatpush2.xpose.msra.mxu0 0.0
      %1589 = vmatprep.subr.mxu0 0.0
      %1590 = vmatpush2.xpose.msra.mxu0 0.0
      %1591 = vmatprep.subr.mxu0 0.0
      %1592 = vmatpush2.xpose.msra.mxu0 0.0
      %1593 = vmatprep.mubr.f32.mxu0 0.0
      %1594 = vmatmul.mubr.f32.gmra.mxu0 %v1524
      %v1595 = vpop.f32.mrf.mxu0
      %v1596 = vadd.f32 0.0, %v1595
      %v1597 = vpop.f32.mrf.mxu0
      %1598 = vdwg.mxu0
      %v1600 = vsel %vm1446, %v1444, 0
      %v1603 = vsel %vm1446, %v1043, 0
      %1605 = vmatprep.subr.mxu0 0.0
      %1606 = vmatpush1.xpose.msra.mxu0 0.0
      %1607 = vmatprep.subr.mxu0 0.0
      %1608 = vmatpush1.xpose.msra.mxu0 0.0
      %1609 = vmatprep.subr.mxu0 0.0
      %1610 = vmatpush1.xpose.msra.mxu0 0.0
      %1611 = vmatprep.subr.mxu0 0.0
      %1612 = vmatpush1.xpose.msra.mxu0 0.0
      %1613 = vmatprep.subr.mxu0 0.0
      %1614 = vmatpush1.xpose.msra.mxu0 0.0
      %1615 = vmatprep.subr.mxu0 0.0
      %1616 = vmatpush1.xpose.msra.mxu0 0.0
      %1617 = vmatprep.subr.mxu0 0.0
      %1618 = vmatpush1.xpose.msra.mxu0 0.0
      %1619 = vmatprep.subr.mxu0 0.0
      %1620 = vmatpush1.xpose.msra.mxu0 0.0
      %1621 = vmatprep.subr.mxu0 0.0
      %1622 = vmatpush1.xpose.msra.mxu0 0.0
      %1623 = vmatprep.subr.mxu0 0.0
      %1624 = vmatpush1.xpose.msra.mxu0 0.0
      %1625 = vmatprep.subr.mxu0 0.0
      %1626 = vmatpush1.xpose.msra.mxu0 0.0
      %1627 = vmatprep.subr.mxu0 0.0
      %1628 = vmatpush1.xpose.msra.mxu0 0.0
      %1629 = vmatprep.subr.mxu0 0.0
      %1630 = vmatpush1.xpose.msra.mxu0 0.0
      %1631 = vmatprep.subr.mxu0 0.0
      %1632 = vmatpush1.xpose.msra.mxu0 0.0
      %1633 = vmatprep.subr.mxu0 0.0
      %1634 = vmatpush1.xpose.msra.mxu0 0.0
      %1635 = vmatprep.subr.mxu0 0.0
      %1636 = vmatpush1.xpose.msra.mxu0 %v1603
      %1637 = vmatprep.subr.mxu0 0.0
      %1638 = vmatpush2.xpose.msra.mxu0 0.0
      %1639 = vmatprep.subr.mxu0 0.0
      %1640 = vmatpush2.xpose.msra.mxu0 0.0
      %1641 = vmatprep.subr.mxu0 0.0
      %1642 = vmatpush2.xpose.msra.mxu0 0.0
      %1643 = vmatprep.subr.mxu0 0.0
      %1644 = vmatpush2.xpose.msra.mxu0 0.0
      %1645 = vmatprep.subr.mxu0 0.0
      %1646 = vmatpush2.xpose.msra.mxu0 0.0
      %1647 = vmatprep.subr.mxu0 0.0
      %1648 = vmatpush2.xpose.msra.mxu0 0.0
      %1649 = vmatprep.subr.mxu0 0.0
      %1650 = vmatpush2.xpose.msra.mxu0 0.0
      %1651 = vmatprep.subr.mxu0 0.0
      %1652 = vmatpush2.xpose.msra.mxu0 0.0
      %1653 = vmatprep.subr.mxu0 0.0
      %1654 = vmatpush2.xpose.msra.mxu0 0.0
      %1655 = vmatprep.subr.mxu0 0.0
      %1656 = vmatpush2.xpose.msra.mxu0 0.0
      %1657 = vmatprep.subr.mxu0 0.0
      %1658 = vmatpush2.xpose.msra.mxu0 0.0
      %1659 = vmatprep.subr.mxu0 0.0
      %1660 = vmatpush2.xpose.msra.mxu0 0.0
      %1661 = vmatprep.subr.mxu0 0.0
      %1662 = vmatpush2.xpose.msra.mxu0 0.0
      %1663 = vmatprep.subr.mxu0 0.0
      %1664 = vmatpush2.xpose.msra.mxu0 0.0
      %1665 = vmatprep.subr.mxu0 0.0
      %1666 = vmatpush2.xpose.msra.mxu0 0.0
      %1667 = vmatprep.subr.mxu0 0.0
      %1668 = vmatpush2.xpose.msra.mxu0 0.0
      %1669 = vmatprep.mubr.f32.mxu0 0.0
      %1670 = vmatmul.mubr.f32.gmra.mxu0 %v1600
      %v1671 = vpop.f32.mrf.mxu0
      %v1672 = vadd.f32 0.0, %v1671
      %v1673 = vpop.f32.mrf.mxu0
      %1674 = vdwg.mxu0
      %v1676 = vsel %vm1446, %v1445, 0
      %v1679 = vsel %vm1446, %v1113, 0
      %1681 = vmatprep.subr.mxu0 0.0
      %1682 = vmatpush1.xpose.msra.mxu0 0.0
      %1683 = vmatprep.subr.mxu0 0.0
      %1684 = vmatpush1.xpose.msra.mxu0 0.0
      %1685 = vmatprep.subr.mxu0 0.0
      %1686 = vmatpush1.xpose.msra.mxu0 0.0
      %1687 = vmatprep.subr.mxu0 0.0
      %1688 = vmatpush1.xpose.msra.mxu0 0.0
      %1689 = vmatprep.subr.mxu0 0.0
      %1690 = vmatpush1.xpose.msra.mxu0 0.0
      %1691 = vmatprep.subr.mxu0 0.0
      %1692 = vmatpush1.xpose.msra.mxu0 0.0
      %1693 = vmatprep.subr.mxu0 0.0
      %1694 = vmatpush1.xpose.msra.mxu0 0.0
      %1695 = vmatprep.subr.mxu0 0.0
      %1696 = vmatpush1.xpose.msra.mxu0 0.0
      %1697 = vmatprep.subr.mxu0 0.0
      %1698 = vmatpush1.xpose.msra.mxu0 0.0
      %1699 = vmatprep.subr.mxu0 0.0
      %1700 = vmatpush1.xpose.msra.mxu0 0.0
      %1701 = vmatprep.subr.mxu0 0.0
      %1702 = vmatpush1.xpose.msra.mxu0 0.0
      %1703 = vmatprep.subr.mxu0 0.0
      %1704 = vmatpush1.xpose.msra.mxu0 0.0
      %1705 = vmatprep.subr.mxu0 0.0
      %1706 = vmatpush1.xpose.msra.mxu0 0.0
      %1707 = vmatprep.subr.mxu0 0.0
      %1708 = vmatpush1.xpose.msra.mxu0 0.0
      %1709 = vmatprep.subr.mxu0 0.0
      %1710 = vmatpush1.xpose.msra.mxu0 0.0
      %1711 = vmatprep.subr.mxu0 0.0
      %1712 = vmatpush1.xpose.msra.mxu0 %v1679
      %1713 = vmatprep.subr.mxu0 0.0
      %1714 = vmatpush2.xpose.msra.mxu0 0.0
      %1715 = vmatprep.subr.mxu0 0.0
      %1716 = vmatpush2.xpose.msra.mxu0 0.0
      %1717 = vmatprep.subr.mxu0 0.0
      %1718 = vmatpush2.xpose.msra.mxu0 0.0
      %1719 = vmatprep.subr.mxu0 0.0
      %1720 = vmatpush2.xpose.msra.mxu0 0.0
      %1721 = vmatprep.subr.mxu0 0.0
      %1722 = vmatpush2.xpose.msra.mxu0 0.0
      %1723 = vmatprep.subr.mxu0 0.0
      %1724 = vmatpush2.xpose.msra.mxu0 0.0
      %1725 = vmatprep.subr.mxu0 0.0
      %1726 = vmatpush2.xpose.msra.mxu0 0.0
      %1727 = vmatprep.subr.mxu0 0.0
      %1728 = vmatpush2.xpose.msra.mxu0 0.0
      %1729 = vmatprep.subr.mxu0 0.0
      %1730 = vmatpush2.xpose.msra.mxu0 0.0
      %1731 = vmatprep.subr.mxu0 0.0
      %1732 = vmatpush2.xpose.msra.mxu0 0.0
      %1733 = vmatprep.subr.mxu0 0.0
      %1734 = vmatpush2.xpose.msra.mxu0 0.0
      %1735 = vmatprep.subr.mxu0 0.0
      %1736 = vmatpush2.xpose.msra.mxu0 0.0
      %1737 = vmatprep.subr.mxu0 0.0
      %1738 = vmatpush2.xpose.msra.mxu0 0.0
      %1739 = vmatprep.subr.mxu0 0.0
      %1740 = vmatpush2.xpose.msra.mxu0 0.0
      %1741 = vmatprep.subr.mxu0 0.0
      %1742 = vmatpush2.xpose.msra.mxu0 0.0
      %1743 = vmatprep.subr.mxu0 0.0
      %1744 = vmatpush2.xpose.msra.mxu0 0.0
      %1745 = vmatprep.mubr.f32.mxu0 0.0
      %1746 = vmatmul.mubr.f32.gmra.mxu0 %v1676
      %v1747 = vpop.f32.mrf.mxu0
      %v1748 = vadd.f32 0.0, %v1747
      %v1749 = vpop.f32.mrf.mxu0
      %1750 = vdwg.mxu0
      %v1751 = vsel %vm1446, %v1520, -inf
      %1752 = vmax.xlane.f32.xlu0 %v1751
      %v1753 = vpop.xlane.xlu0 %1752
      %v1754 = vsel %vm1446, %v1596, -inf
      %1755 = vmax.xlane.f32.xlu0 %v1754
      %v1756 = vpop.xlane.xlu0 %1755
      %v1757 = vsel %vm1446, %v1672, -inf
      %1758 = vmax.xlane.f32.xlu0 %v1757
      %v1759 = vpop.xlane.xlu0 %1758
      %v1760 = vsel %vm1446, %v1748, -inf
      %1761 = vmax.xlane.f32.xlu0 %v1760
      %v1762 = vpop.xlane.xlu0 %1761
      %v1763 = vsub.f32 %v1520, %v1753
      %v1764 = vsub.f32 %v1596, %v1756
      %v1765 = vsub.f32 %v1672, %v1759
      %v1766 = vsub.f32 %v1748, %v1762
      %v1767 = vmul.f32 %v1763, 1.442695
      %v1768 = vpow.pop %v1767
      %v1769 = vmul.f32 %v1764, 1.442695
      %v1770 = vpow.pop %v1769
      %v1771 = vmul.f32 %v1765, 1.442695
      %v1772 = vpow.pop %v1771
      %v1773 = vmul.f32 %v1766, 1.442695
      %v1774 = vpow.pop %v1773
      %v1775 = vsel %vm1446, %v1768, 0.0
      %1776 = vadd.xlane.f32.xlu0 %v1775
      %v1777 = vpop.xlane.xlu0 %1776
      %v1778 = vsel %vm1446, %v1770, 0.0
      %1779 = vadd.xlane.f32.xlu0 %v1778
      %v1780 = vpop.xlane.xlu0 %1779
      %v1781 = vsel %vm1446, %v1772, 0.0
      %1782 = vadd.xlane.f32.xlu0 %v1781
      %v1783 = vpop.xlane.xlu0 %1782
      %v1784 = vsel %vm1446, %v1774, 0.0
      %1785 = vadd.xlane.f32.xlu0 %v1784
      %v1786 = vpop.xlane.xlu0 %1785
      %v1787 = vrcp.pop %v1777
      %v1788 = vrcp.pop %v1780
      %v1789 = vrcp.pop %v1783
      %v1790 = vrcp.pop %v1786
      %v1791 = vmul.f32 %v1768, %v1787
      %v1792 = vmul.f32 %v1770, %v1788
      %v1793 = vmul.f32 %v1772, %v1789
      %v1794 = vmul.f32 %v1774, %v1790
      %v1796 = vsel %vm1446, %v1791, 0
      %1798 = vmatprep.subr.mxu0 0.0
      %1799 = vmatpush1.msra.mxu0 0.0
      %1800 = vmatprep.subr.mxu0 0.0
      %1801 = vmatpush1.msra.mxu0 0.0
      %1802 = vmatprep.subr.mxu0 0.0
      %1803 = vmatpush1.msra.mxu0 0.0
      %1804 = vmatprep.subr.mxu0 0.0
      %1805 = vmatpush1.msra.mxu0 0.0
      %1806 = vmatprep.subr.mxu0 0.0
      %1807 = vmatpush1.msra.mxu0 0.0
      %1808 = vmatprep.subr.mxu0 0.0
      %1809 = vmatpush1.msra.mxu0 0.0
      %1810 = vmatprep.subr.mxu0 0.0
      %1811 = vmatpush1.msra.mxu0 0.0
      %1812 = vmatprep.subr.mxu0 0.0
      %1813 = vmatpush1.msra.mxu0 0.0
      %1814 = vmatprep.subr.mxu0 0.0
      %1815 = vmatpush1.msra.mxu0 0.0
      %1816 = vmatprep.subr.mxu0 0.0
      %1817 = vmatpush1.msra.mxu0 0.0
      %1818 = vmatprep.subr.mxu0 0.0
      %1819 = vmatpush1.msra.mxu0 0.0
      %1820 = vmatprep.subr.mxu0 0.0
      %1821 = vmatpush1.msra.mxu0 0.0
      %1822 = vmatprep.subr.mxu0 0.0
      %1823 = vmatpush1.msra.mxu0 0.0
      %1824 = vmatprep.subr.mxu0 0.0
      %1825 = vmatpush1.msra.mxu0 0.0
      %1826 = vmatprep.subr.mxu0 0.0
      %1827 = vmatpush1.msra.mxu0 0.0
      %1828 = vmatprep.subr.mxu0 0.0
      %1829 = vmatpush1.msra.mxu0 %v1229
      %1830 = vmatprep.subr.mxu0 0.0
      %1831 = vmatpush2.msra.mxu0 0.0
      %1832 = vmatprep.subr.mxu0 0.0
      %1833 = vmatpush2.msra.mxu0 0.0
      %1834 = vmatprep.subr.mxu0 0.0
      %1835 = vmatpush2.msra.mxu0 0.0
      %1836 = vmatprep.subr.mxu0 0.0
      %1837 = vmatpush2.msra.mxu0 0.0
      %1838 = vmatprep.subr.mxu0 0.0
      %1839 = vmatpush2.msra.mxu0 0.0
      %1840 = vmatprep.subr.mxu0 0.0
      %1841 = vmatpush2.msra.mxu0 0.0
      %1842 = vmatprep.subr.mxu0 0.0
      %1843 = vmatpush2.msra.mxu0 0.0
      %1844 = vmatprep.subr.mxu0 0.0
      %1845 = vmatpush2.msra.mxu0 0.0
      %1846 = vmatprep.subr.mxu0 0.0
      %1847 = vmatpush2.msra.mxu0 0.0
      %1848 = vmatprep.subr.mxu0 0.0
      %1849 = vmatpush2.msra.mxu0 0.0
      %1850 = vmatprep.subr.mxu0 0.0
      %1851 = vmatpush2.msra.mxu0 0.0
      %1852 = vmatprep.subr.mxu0 0.0
      %1853 = vmatpush2.msra.mxu0 0.0
      %1854 = vmatprep.subr.mxu0 0.0
      %1855 = vmatpush2.msra.mxu0 0.0
      %1856 = vmatprep.subr.mxu0 0.0
      %1857 = vmatpush2.msra.mxu0 0.0
      %1858 = vmatprep.subr.mxu0 0.0
      %1859 = vmatpush2.msra.mxu0 0.0
      %1860 = vmatprep.subr.mxu0 0.0
      %1861 = vmatpush2.msra.mxu0 0.0
      %1862 = vmatprep.mubr.f32.mxu0 0.0
      %1863 = vmatmul.mubr.f32.gmra.mxu0 %v1796
      %v1864 = vpop.f32.mrf.mxu0
      %v1865 = vadd.f32 0.0, %v1864
      %v1866 = vpop.f32.mrf.mxu0
      %1867 = vdwg.mxu0
      %v1869 = vsel %vm1446, %v1792, 0
      %1871 = vmatprep.subr.mxu0 0.0
      %1872 = vmatpush1.msra.mxu0 0.0
      %1873 = vmatprep.subr.mxu0 0.0
      %1874 = vmatpush1.msra.mxu0 0.0
      %1875 = vmatprep.subr.mxu0 0.0
      %1876 = vmatpush1.msra.mxu0 0.0
      %1877 = vmatprep.subr.mxu0 0.0
      %1878 = vmatpush1.msra.mxu0 0.0
      %1879 = vmatprep.subr.mxu0 0.0
      %1880 = vmatpush1.msra.mxu0 0.0
      %1881 = vmatprep.subr.mxu0 0.0
      %1882 = vmatpush1.msra.mxu0 0.0
      %1883 = vmatprep.subr.mxu0 0.0
      %1884 = vmatpush1.msra.mxu0 0.0
      %1885 = vmatprep.subr.mxu0 0.0
      %1886 = vmatpush1.msra.mxu0 0.0
      %1887 = vmatprep.subr.mxu0 0.0
      %1888 = vmatpush1.msra.mxu0 0.0
      %1889 = vmatprep.subr.mxu0 0.0
      %1890 = vmatpush1.msra.mxu0 0.0
      %1891 = vmatprep.subr.mxu0 0.0
      %1892 = vmatpush1.msra.mxu0 0.0
      %1893 = vmatprep.subr.mxu0 0.0
      %1894 = vmatpush1.msra.mxu0 0.0
      %1895 = vmatprep.subr.mxu0 0.0
      %1896 = vmatpush1.msra.mxu0 0.0
      %1897 = vmatprep.subr.mxu0 0.0
      %1898 = vmatpush1.msra.mxu0 0.0
      %1899 = vmatprep.subr.mxu0 0.0
      %1900 = vmatpush1.msra.mxu0 0.0
      %1901 = vmatprep.subr.mxu0 0.0
      %1902 = vmatpush1.msra.mxu0 %v1299
      %1903 = vmatprep.subr.mxu0 0.0
      %1904 = vmatpush2.msra.mxu0 0.0
      %1905 = vmatprep.subr.mxu0 0.0
      %1906 = vmatpush2.msra.mxu0 0.0
      %1907 = vmatprep.subr.mxu0 0.0
      %1908 = vmatpush2.msra.mxu0 0.0
      %1909 = vmatprep.subr.mxu0 0.0
      %1910 = vmatpush2.msra.mxu0 0.0
      %1911 = vmatprep.subr.mxu0 0.0
      %1912 = vmatpush2.msra.mxu0 0.0
      %1913 = vmatprep.subr.mxu0 0.0
      %1914 = vmatpush2.msra.mxu0 0.0
      %1915 = vmatprep.subr.mxu0 0.0
      %1916 = vmatpush2.msra.mxu0 0.0
      %1917 = vmatprep.subr.mxu0 0.0
      %1918 = vmatpush2.msra.mxu0 0.0
      %1919 = vmatprep.subr.mxu0 0.0
      %1920 = vmatpush2.msra.mxu0 0.0
      %1921 = vmatprep.subr.mxu0 0.0
      %1922 = vmatpush2.msra.mxu0 0.0
      %1923 = vmatprep.subr.mxu0 0.0
      %1924 = vmatpush2.msra.mxu0 0.0
      %1925 = vmatprep.subr.mxu0 0.0
      %1926 = vmatpush2.msra.mxu0 0.0
      %1927 = vmatprep.subr.mxu0 0.0
      %1928 = vmatpush2.msra.mxu0 0.0
      %1929 = vmatprep.subr.mxu0 0.0
      %1930 = vmatpush2.msra.mxu0 0.0
      %1931 = vmatprep.subr.mxu0 0.0
      %1932 = vmatpush2.msra.mxu0 0.0
      %1933 = vmatprep.subr.mxu0 0.0
      %1934 = vmatpush2.msra.mxu0 0.0
      %1935 = vmatprep.mubr.f32.mxu0 0.0
      %1936 = vmatmul.mubr.f32.gmra.mxu0 %v1869
      %v1937 = vpop.f32.mrf.mxu0
      %v1938 = vadd.f32 0.0, %v1937
      %v1939 = vpop.f32.mrf.mxu0
      %1940 = vdwg.mxu0
      %v1942 = vsel %vm1446, %v1793, 0
      %1944 = vmatprep.subr.mxu0 0.0
      %1945 = vmatpush1.msra.mxu0 0.0
      %1946 = vmatprep.subr.mxu0 0.0
      %1947 = vmatpush1.msra.mxu0 0.0
      %1948 = vmatprep.subr.mxu0 0.0
      %1949 = vmatpush1.msra.mxu0 0.0
      %1950 = vmatprep.subr.mxu0 0.0
      %1951 = vmatpush1.msra.mxu0 0.0
      %1952 = vmatprep.subr.mxu0 0.0
      %1953 = vmatpush1.msra.mxu0 0.0
      %1954 = vmatprep.subr.mxu0 0.0
      %1955 = vmatpush1.msra.mxu0 0.0
      %1956 = vmatprep.subr.mxu0 0.0
      %1957 = vmatpush1.msra.mxu0 0.0
      %1958 = vmatprep.subr.mxu0 0.0
      %1959 = vmatpush1.msra.mxu0 0.0
      %1960 = vmatprep.subr.mxu0 0.0
      %1961 = vmatpush1.msra.mxu0 0.0
      %1962 = vmatprep.subr.mxu0 0.0
      %1963 = vmatpush1.msra.mxu0 0.0
      %1964 = vmatprep.subr.mxu0 0.0
      %1965 = vmatpush1.msra.mxu0 0.0
      %1966 = vmatprep.subr.mxu0 0.0
      %1967 = vmatpush1.msra.mxu0 0.0
      %1968 = vmatprep.subr.mxu0 0.0
      %1969 = vmatpush1.msra.mxu0 0.0
      %1970 = vmatprep.subr.mxu0 0.0
      %1971 = vmatpush1.msra.mxu0 0.0
      %1972 = vmatprep.subr.mxu0 0.0
      %1973 = vmatpush1.msra.mxu0 0.0
      %1974 = vmatprep.subr.mxu0 0.0
      %1975 = vmatpush1.msra.mxu0 %v1369
      %1976 = vmatprep.subr.mxu0 0.0
      %1977 = vmatpush2.msra.mxu0 0.0
      %1978 = vmatprep.subr.mxu0 0.0
      %1979 = vmatpush2.msra.mxu0 0.0
      %1980 = vmatprep.subr.mxu0 0.0
      %1981 = vmatpush2.msra.mxu0 0.0
      %1982 = vmatprep.subr.mxu0 0.0
      %1983 = vmatpush2.msra.mxu0 0.0
      %1984 = vmatprep.subr.mxu0 0.0
      %1985 = vmatpush2.msra.mxu0 0.0
      %1986 = vmatprep.subr.mxu0 0.0
      %1987 = vmatpush2.msra.mxu0 0.0
      %1988 = vmatprep.subr.mxu0 0.0
      %1989 = vmatpush2.msra.mxu0 0.0
      %1990 = vmatprep.subr.mxu0 0.0
      %1991 = vmatpush2.msra.mxu0 0.0
      %1992 = vmatprep.subr.mxu0 0.0
      %1993 = vmatpush2.msra.mxu0 0.0
      %1994 = vmatprep.subr.mxu0 0.0
      %1995 = vmatpush2.msra.mxu0 0.0
      %1996 = vmatprep.subr.mxu0 0.0
      %1997 = vmatpush2.msra.mxu0 0.0
      %1998 = vmatprep.subr.mxu0 0.0
      %1999 = vmatpush2.msra.mxu0 0.0
      %2000 = vmatprep.subr.mxu0 0.0
      %2001 = vmatpush2.msra.mxu0 0.0
      %2002 = vmatprep.subr.mxu0 0.0
      %2003 = vmatpush2.msra.mxu0 0.0
      %2004 = vmatprep.subr.mxu0 0.0
      %2005 = vmatpush2.msra.mxu0 0.0
      %2006 = vmatprep.subr.mxu0 0.0
      %2007 = vmatpush2.msra.mxu0 0.0
      %2008 = vmatprep.mubr.f32.mxu0 0.0
      %2009 = vmatmul.mubr.f32.gmra.mxu0 %v1942
      %v2010 = vpop.f32.mrf.mxu0
      %v2011 = vadd.f32 0.0, %v2010
      %v2012 = vpop.f32.mrf.mxu0
      %2013 = vdwg.mxu0
      %v2015 = vsel %vm1446, %v1794, 0
      %2017 = vmatprep.subr.mxu0 0.0
      %2018 = vmatpush1.msra.mxu0 0.0
      %2019 = vmatprep.subr.mxu0 0.0
      %2020 = vmatpush1.msra.mxu0 0.0
      %2021 = vmatprep.subr.mxu0 0.0
      %2022 = vmatpush1.msra.mxu0 0.0
      %2023 = vmatprep.subr.mxu0 0.0
      %2024 = vmatpush1.msra.mxu0 0.0
      %2025 = vmatprep.subr.mxu0 0.0
      %2026 = vmatpush1.msra.mxu0 0.0
      %2027 = vmatprep.subr.mxu0 0.0
      %2028 = vmatpush1.msra.mxu0 0.0
      %2029 = vmatprep.subr.mxu0 0.0
      %2030 = vmatpush1.msra.mxu0 0.0
      %2031 = vmatprep.subr.mxu0 0.0
      %2032 = vmatpush1.msra.mxu0 0.0
      %2033 = vmatprep.subr.mxu0 0.0
      %2034 = vmatpush1.msra.mxu0 0.0
      %2035 = vmatprep.subr.mxu0 0.0
      %2036 = vmatpush1.msra.mxu0 0.0
      %2037 = vmatprep.subr.mxu0 0.0
      %2038 = vmatpush1.msra.mxu0 0.0
      %2039 = vmatprep.subr.mxu0 0.0
      %2040 = vmatpush1.msra.mxu0 0.0
      %2041 = vmatprep.subr.mxu0 0.0
      %2042 = vmatpush1.msra.mxu0 0.0
      %2043 = vmatprep.subr.mxu0 0.0
      %2044 = vmatpush1.msra.mxu0 0.0
      %2045 = vmatprep.subr.mxu0 0.0
      %2046 = vmatpush1.msra.mxu0 0.0
      %2047 = vmatprep.subr.mxu0 0.0
      %2048 = vmatpush1.msra.mxu0 %v1439
      %2049 = vmatprep.subr.mxu0 0.0
      %2050 = vmatpush2.msra.mxu0 0.0
      %2051 = vmatprep.subr.mxu0 0.0
      %2052 = vmatpush2.msra.mxu0 0.0
      %2053 = vmatprep.subr.mxu0 0.0
      %2054 = vmatpush2.msra.mxu0 0.0
      %2055 = vmatprep.subr.mxu0 0.0
      %2056 = vmatpush2.msra.mxu0 0.0
      %2057 = vmatprep.subr.mxu0 0.0
      %2058 = vmatpush2.msra.mxu0 0.0
      %2059 = vmatprep.subr.mxu0 0.0
      %2060 = vmatpush2.msra.mxu0 0.0
      %2061 = vmatprep.subr.mxu0 0.0
      %2062 = vmatpush2.msra.mxu0 0.0
      %2063 = vmatprep.subr.mxu0 0.0
      %2064 = vmatpush2.msra.mxu0 0.0
      %2065 = vmatprep.subr.mxu0 0.0
      %2066 = vmatpush2.msra.mxu0 0.0
      %2067 = vmatprep.subr.mxu0 0.0
      %2068 = vmatpush2.msra.mxu0 0.0
      %2069 = vmatprep.subr.mxu0 0.0
      %2070 = vmatpush2.msra.mxu0 0.0
      %2071 = vmatprep.subr.mxu0 0.0
      %2072 = vmatpush2.msra.mxu0 0.0
      %2073 = vmatprep.subr.mxu0 0.0
      %2074 = vmatpush2.msra.mxu0 0.0
      %2075 = vmatprep.subr.mxu0 0.0
      %2076 = vmatpush2.msra.mxu0 0.0
      %2077 = vmatprep.subr.mxu0 0.0
      %2078 = vmatpush2.msra.mxu0 0.0
      %2079 = vmatprep.subr.mxu0 0.0
      %2080 = vmatpush2.msra.mxu0 0.0
      %2081 = vmatprep.mubr.f32.mxu0 0.0
      %2082 = vmatmul.mubr.f32.gmra.mxu0 %v2015
      %v2083 = vpop.f32.mrf.mxu0
      %v2084 = vadd.f32 0.0, %v2083
      %v2085 = vpop.f32.mrf.mxu0
      %2086 = vdwg.mxu0
      %v2087 = vld [vmem:[%s6] sm:$0xff]
      %v2088 = vld [vmem:[%s6 + $0x8] sm:$0xff]
      %v2089 = vld [vmem:[%s6 + $0x10] sm:$0xff]
      %v2090 = vld [vmem:[%s6 + $0x18] sm:$0xff]
      %v2092 = vsel %vm1446, %v1865, 0
      %2094 = vmatprep.subr.mxu0 0.0
      %2095 = vmatpush1.msra.mxu0 0.0
      %2096 = vmatprep.subr.mxu0 0.0
      %2097 = vmatpush1.msra.mxu0 0.0
      %2098 = vmatprep.subr.mxu0 0.0
      %2099 = vmatpush1.msra.mxu0 0.0
      %2100 = vmatprep.subr.mxu0 0.0
      %2101 = vmatpush1.msra.mxu0 0.0
      %2102 = vmatprep.subr.mxu0 0.0
      %2103 = vmatpush1.msra.mxu0 0.0
      %2104 = vmatprep.subr.mxu0 0.0
      %2105 = vmatpush1.msra.mxu0 0.0
      %2106 = vmatprep.subr.mxu0 0.0
      %2107 = vmatpush1.msra.mxu0 0.0
      %2108 = vmatprep.subr.mxu0 0.0
      %2109 = vmatpush1.msra.mxu0 0.0
      %2110 = vmatprep.subr.mxu0 0.0
      %2111 = vmatpush1.msra.mxu0 0.0
      %2112 = vmatprep.subr.mxu0 0.0
      %2113 = vmatpush1.msra.mxu0 0.0
      %2114 = vmatprep.subr.mxu0 0.0
      %2115 = vmatpush1.msra.mxu0 0.0
      %2116 = vmatprep.subr.mxu0 0.0
      %2117 = vmatpush1.msra.mxu0 0.0
      %2118 = vmatprep.subr.mxu0 0.0
      %2119 = vmatpush1.msra.mxu0 0.0
      %2120 = vmatprep.subr.mxu0 0.0
      %2121 = vmatpush1.msra.mxu0 0.0
      %2122 = vmatprep.subr.mxu0 0.0
      %2123 = vmatpush1.msra.mxu0 0.0
      %2124 = vmatprep.subr.mxu0 0.0
      %2125 = vmatpush1.msra.mxu0 %v2087
      %2126 = vmatprep.subr.mxu0 0.0
      %2127 = vmatpush2.msra.mxu0 0.0
      %2128 = vmatprep.subr.mxu0 0.0
      %2129 = vmatpush2.msra.mxu0 0.0
      %2130 = vmatprep.subr.mxu0 0.0
      %2131 = vmatpush2.msra.mxu0 0.0
      %2132 = vmatprep.subr.mxu0 0.0
      %2133 = vmatpush2.msra.mxu0 0.0
      %2134 = vmatprep.subr.mxu0 0.0
      %2135 = vmatpush2.msra.mxu0 0.0
      %2136 = vmatprep.subr.mxu0 0.0
      %2137 = vmatpush2.msra.mxu0 0.0
      %2138 = vmatprep.subr.mxu0 0.0
      %2139 = vmatpush2.msra.mxu0 0.0
      %2140 = vmatprep.subr.mxu0 0.0
      %2141 = vmatpush2.msra.mxu0 0.0
      %2142 = vmatprep.subr.mxu0 0.0
      %2143 = vmatpush2.msra.mxu0 0.0
      %2144 = vmatprep.subr.mxu0 0.0
      %2145 = vmatpush2.msra.mxu0 0.0
      %2146 = vmatprep.subr.mxu0 0.0
      %2147 = vmatpush2.msra.mxu0 0.0
      %2148 = vmatprep.subr.mxu0 0.0
      %2149 = vmatpush2.msra.mxu0 0.0
      %2150 = vmatprep.subr.mxu0 0.0
      %2151 = vmatpush2.msra.mxu0 0.0
      %2152 = vmatprep.subr.mxu0 0.0
      %2153 = vmatpush2.msra.mxu0 0.0
      %2154 = vmatprep.subr.mxu0 0.0
      %2155 = vmatpush2.msra.mxu0 0.0
      %2156 = vmatprep.subr.mxu0 0.0
      %2157 = vmatpush2.msra.mxu0 0.0
      %2158 = vmatprep.mubr.f32.mxu0 0.0
      %2159 = vmatmul.mubr.f32.gmra.mxu0 %v2092
      %v2160 = vpop.f32.mrf.mxu0
      %v2161 = vadd.f32 0.0, %v2160
      %v2162 = vpop.f32.mrf.mxu0
      %2163 = vdwg.mxu0
      %v2165 = vsel %vm1446, %v1938, 0
      %2167 = vmatprep.subr.mxu0 0.0
      %2168 = vmatpush1.msra.mxu0 0.0
      %2169 = vmatprep.subr.mxu0 0.0
      %2170 = vmatpush1.msra.mxu0 0.0
      %2171 = vmatprep.subr.mxu0 0.0
      %2172 = vmatpush1.msra.mxu0 0.0
      %2173 = vmatprep.subr.mxu0 0.0
      %2174 = vmatpush1.msra.mxu0 0.0
      %2175 = vmatprep.subr.mxu0 0.0
      %2176 = vmatpush1.msra.mxu0 0.0
      %2177 = vmatprep.subr.mxu0 0.0
      %2178 = vmatpush1.msra.mxu0 0.0
      %2179 = vmatprep.subr.mxu0 0.0
      %2180 = vmatpush1.msra.mxu0 0.0
      %2181 = vmatprep.subr.mxu0 0.0
      %2182 = vmatpush1.msra.mxu0 0.0
      %2183 = vmatprep.subr.mxu0 0.0
      %2184 = vmatpush1.msra.mxu0 0.0
      %2185 = vmatprep.subr.mxu0 0.0
      %2186 = vmatpush1.msra.mxu0 0.0
      %2187 = vmatprep.subr.mxu0 0.0
      %2188 = vmatpush1.msra.mxu0 0.0
      %2189 = vmatprep.subr.mxu0 0.0
      %2190 = vmatpush1.msra.mxu0 0.0
      %2191 = vmatprep.subr.mxu0 0.0
      %2192 = vmatpush1.msra.mxu0 0.0
      %2193 = vmatprep.subr.mxu0 0.0
      %2194 = vmatpush1.msra.mxu0 0.0
      %2195 = vmatprep.subr.mxu0 0.0
      %2196 = vmatpush1.msra.mxu0 0.0
      %2197 = vmatprep.subr.mxu0 0.0
      %2198 = vmatpush1.msra.mxu0 %v2088
      %2199 = vmatprep.subr.mxu0 0.0
      %2200 = vmatpush2.msra.mxu0 0.0
      %2201 = vmatprep.subr.mxu0 0.0
      %2202 = vmatpush2.msra.mxu0 0.0
      %2203 = vmatprep.subr.mxu0 0.0
      %2204 = vmatpush2.msra.mxu0 0.0
      %2205 = vmatprep.subr.mxu0 0.0
      %2206 = vmatpush2.msra.mxu0 0.0
      %2207 = vmatprep.subr.mxu0 0.0
      %2208 = vmatpush2.msra.mxu0 0.0
      %2209 = vmatprep.subr.mxu0 0.0
      %2210 = vmatpush2.msra.mxu0 0.0
      %2211 = vmatprep.subr.mxu0 0.0
      %2212 = vmatpush2.msra.mxu0 0.0
      %2213 = vmatprep.subr.mxu0 0.0
      %2214 = vmatpush2.msra.mxu0 0.0
      %2215 = vmatprep.subr.mxu0 0.0
      %2216 = vmatpush2.msra.mxu0 0.0
      %2217 = vmatprep.subr.mxu0 0.0
      %2218 = vmatpush2.msra.mxu0 0.0
      %2219 = vmatprep.subr.mxu0 0.0
      %2220 = vmatpush2.msra.mxu0 0.0
      %2221 = vmatprep.subr.mxu0 0.0
      %2222 = vmatpush2.msra.mxu0 0.0
      %2223 = vmatprep.subr.mxu0 0.0
      %2224 = vmatpush2.msra.mxu0 0.0
      %2225 = vmatprep.subr.mxu0 0.0
      %2226 = vmatpush2.msra.mxu0 0.0
      %2227 = vmatprep.subr.mxu0 0.0
      %2228 = vmatpush2.msra.mxu0 0.0
      %2229 = vmatprep.subr.mxu0 0.0
      %2230 = vmatpush2.msra.mxu0 0.0
      %2231 = vmatprep.mubr.f32.mxu0 0.0
      %2232 = vmatmul.mubr.f32.gmra.mxu0 %v2165
      %v2233 = vpop.f32.mrf.mxu0
      %v2234 = vadd.f32 0.0, %v2233
      %v2235 = vpop.f32.mrf.mxu0
      %2236 = vdwg.mxu0
      %v2238 = vsel %vm1446, %v2011, 0
      %2240 = vmatprep.subr.mxu0 0.0
      %2241 = vmatpush1.msra.mxu0 0.0
      %2242 = vmatprep.subr.mxu0 0.0
      %2243 = vmatpush1.msra.mxu0 0.0
      %2244 = vmatprep.subr.mxu0 0.0
      %2245 = vmatpush1.msra.mxu0 0.0
      %2246 = vmatprep.subr.mxu0 0.0
      %2247 = vmatpush1.msra.mxu0 0.0
      %2248 = vmatprep.subr.mxu0 0.0
      %2249 = vmatpush1.msra.mxu0 0.0
      %2250 = vmatprep.subr.mxu0 0.0
      %2251 = vmatpush1.msra.mxu0 0.0
      %2252 = vmatprep.subr.mxu0 0.0
      %2253 = vmatpush1.msra.mxu0 0.0
      %2254 = vmatprep.subr.mxu0 0.0
      %2255 = vmatpush1.msra.mxu0 0.0
      %2256 = vmatprep.subr.mxu0 0.0
      %2257 = vmatpush1.msra.mxu0 0.0
      %2258 = vmatprep.subr.mxu0 0.0
      %2259 = vmatpush1.msra.mxu0 0.0
      %2260 = vmatprep.subr.mxu0 0.0
      %2261 = vmatpush1.msra.mxu0 0.0
      %2262 = vmatprep.subr.mxu0 0.0
      %2263 = vmatpush1.msra.mxu0 0.0
      %2264 = vmatprep.subr.mxu0 0.0
      %2265 = vmatpush1.msra.mxu0 0.0
      %2266 = vmatprep.subr.mxu0 0.0
      %2267 = vmatpush1.msra.mxu0 0.0
      %2268 = vmatprep.subr.mxu0 0.0
      %2269 = vmatpush1.msra.mxu0 0.0
      %2270 = vmatprep.subr.mxu0 0.0
      %2271 = vmatpush1.msra.mxu0 %v2089
      %2272 = vmatprep.subr.mxu0 0.0
      %2273 = vmatpush2.msra.mxu0 0.0
      %2274 = vmatprep.subr.mxu0 0.0
      %2275 = vmatpush2.msra.mxu0 0.0
      %2276 = vmatprep.subr.mxu0 0.0
      %2277 = vmatpush2.msra.mxu0 0.0
      %2278 = vmatprep.subr.mxu0 0.0
      %2279 = vmatpush2.msra.mxu0 0.0
      %2280 = vmatprep.subr.mxu0 0.0
      %2281 = vmatpush2.msra.mxu0 0.0
      %2282 = vmatprep.subr.mxu0 0.0
      %2283 = vmatpush2.msra.mxu0 0.0
      %2284 = vmatprep.subr.mxu0 0.0
      %2285 = vmatpush2.msra.mxu0 0.0
      %2286 = vmatprep.subr.mxu0 0.0
      %2287 = vmatpush2.msra.mxu0 0.0
      %2288 = vmatprep.subr.mxu0 0.0
      %2289 = vmatpush2.msra.mxu0 0.0
      %2290 = vmatprep.subr.mxu0 0.0
      %2291 = vmatpush2.msra.mxu0 0.0
      %2292 = vmatprep.subr.mxu0 0.0
      %2293 = vmatpush2.msra.mxu0 0.0
      %2294 = vmatprep.subr.mxu0 0.0
      %2295 = vmatpush2.msra.mxu0 0.0
      %2296 = vmatprep.subr.mxu0 0.0
      %2297 = vmatpush2.msra.mxu0 0.0
      %2298 = vmatprep.subr.mxu0 0.0
      %2299 = vmatpush2.msra.mxu0 0.0
      %2300 = vmatprep.subr.mxu0 0.0
      %2301 = vmatpush2.msra.mxu0 0.0
      %2302 = vmatprep.subr.mxu0 0.0
      %2303 = vmatpush2.msra.mxu0 0.0
      %2304 = vmatprep.mubr.f32.mxu0 0.0
      %2305 = vmatmul.mubr.f32.gmra.mxu0 %v2238
      %v2306 = vpop.f32.mrf.mxu0
      %v2307 = vadd.f32 0.0, %v2306
      %v2308 = vpop.f32.mrf.mxu0
      %2309 = vdwg.mxu0
      %v2311 = vsel %vm1446, %v2084, 0
      %2313 = vmatprep.subr.mxu0 0.0
      %2314 = vmatpush1.msra.mxu0 0.0
      %2315 = vmatprep.subr.mxu0 0.0
      %2316 = vmatpush1.msra.mxu0 0.0
      %2317 = vmatprep.subr.mxu0 0.0
      %2318 = vmatpush1.msra.mxu0 0.0
      %2319 = vmatprep.subr.mxu0 0.0
      %2320 = vmatpush1.msra.mxu0 0.0
      %2321 = vmatprep.subr.mxu0 0.0
      %2322 = vmatpush1.msra.mxu0 0.0
      %2323 = vmatprep.subr.mxu0 0.0
      %2324 = vmatpush1.msra.mxu0 0.0
      %2325 = vmatprep.subr.mxu0 0.0
      %2326 = vmatpush1.msra.mxu0 0.0
      %2327 = vmatprep.subr.mxu0 0.0
      %2328 = vmatpush1.msra.mxu0 0.0
      %2329 = vmatprep.subr.mxu0 0.0
      %2330 = vmatpush1.msra.mxu0 0.0
      %2331 = vmatprep.subr.mxu0 0.0
      %2332 = vmatpush1.msra.mxu0 0.0
      %2333 = vmatprep.subr.mxu0 0.0
      %2334 = vmatpush1.msra.mxu0 0.0
      %2335 = vmatprep.subr.mxu0 0.0
      %2336 = vmatpush1.msra.mxu0 0.0
      %2337 = vmatprep.subr.mxu0 0.0
      %2338 = vmatpush1.msra.mxu0 0.0
      %2339 = vmatprep.subr.mxu0 0.0
      %2340 = vmatpush1.msra.mxu0 0.0
      %2341 = vmatprep.subr.mxu0 0.0
      %2342 = vmatpush1.msra.mxu0 0.0
      %2343 = vmatprep.subr.mxu0 0.0
      %2344 = vmatpush1.msra.mxu0 %v2090
      %2345 = vmatprep.subr.mxu0 0.0
      %2346 = vmatpush2.msra.mxu0 0.0
      %2347 = vmatprep.subr.mxu0 0.0
      %2348 = vmatpush2.msra.mxu0 0.0
      %2349 = vmatprep.subr.mxu0 0.0
      %2350 = vmatpush2.msra.mxu0 0.0
      %2351 = vmatprep.subr.mxu0 0.0
      %2352 = vmatpush2.msra.mxu0 0.0
      %2353 = vmatprep.subr.mxu0 0.0
      %2354 = vmatpush2.msra.mxu0 0.0
      %2355 = vmatprep.subr.mxu0 0.0
      %2356 = vmatpush2.msra.mxu0 0.0
      %2357 = vmatprep.subr.mxu0 0.0
      %2358 = vmatpush2.msra.mxu0 0.0
      %2359 = vmatprep.subr.mxu0 0.0
      %2360 = vmatpush2.msra.mxu0 0.0
      %2361 = vmatprep.subr.mxu0 0.0
      %2362 = vmatpush2.msra.mxu0 0.0
      %2363 = vmatprep.subr.mxu0 0.0
      %2364 = vmatpush2.msra.mxu0 0.0
      %2365 = vmatprep.subr.mxu0 0.0
      %2366 = vmatpush2.msra.mxu0 0.0
      %2367 = vmatprep.subr.mxu0 0.0
      %2368 = vmatpush2.msra.mxu0 0.0
      %2369 = vmatprep.subr.mxu0 0.0
      %2370 = vmatpush2.msra.mxu0 0.0
      %2371 = vmatprep.subr.mxu0 0.0
      %2372 = vmatpush2.msra.mxu0 0.0
      %2373 = vmatprep.subr.mxu0 0.0
      %2374 = vmatpush2.msra.mxu0 0.0
      %2375 = vmatprep.subr.mxu0 0.0
      %2376 = vmatpush2.msra.mxu0 0.0
      %2377 = vmatprep.mubr.f32.mxu0 0.0
      %2378 = vmatmul.mubr.f32.gmra.mxu0 %v2311
      %v2379 = vpop.f32.mrf.mxu0
      %v2380 = vadd.f32 0.0, %v2379
      %v2381 = vpop.f32.mrf.mxu0
      %2382 = vdwg.mxu0
      %v2383 = vsel %vm506, %v2161, 0.0
      %v2384 = vsel %vm506, %v2234, 0.0
      %v2385 = vadd.f32 %v2383, %v2384
      %v2386 = vsel %vm506, %v2307, 0.0
      %v2387 = vadd.f32 %v2385, %v2386
      %v2388 = vsel %vm506, %v2380, 0.0
      %v2389 = vadd.f32 %v2387, %v2388
      %v2390 = vld [vmem:[%s10] sm:$0x1]
      %v2392 = vlaneseq
      %v2393 = vshrl.u32 %v2392, 7
      %v2394 = vsub.s32 0, %v2393
      %v2395 = vrot.slane %v2390, %v2394
      %v2397 = vadd.f32 %v2389, %v2395
      %v2398 = vadd.f32 %v461, %v2397
      %s2399 = scalar_lea.vmem %s10, 1
      %v2400 = vld [vmem:[%s2399] sm:$0x1]
      %s2401 = scalar_lea.vmem %s10, 2
      %v2402 = vld [vmem:[%s2401] sm:$0x1]
      %v2403 = vsel %vm506, %v2398, 0.0
      %2404 = vadd.xlane.f32.xlu0 %v2403
      %v2405 = vpop.xlane.xlu0 %2404
      %v2406 = vrcp.pop 32.0
      %v2407 = vmul.f32 %v2405, %v2406
      %v2408 = vsub.f32 %v2398, %v2407
      %v2409 = vmul.f32 %v2408, %v2408
      %v2410 = vsel %vm506, %v2409, 0.0
      %2411 = vadd.xlane.f32.xlu0 %v2410
      %v2412 = vpop.xlane.xlu0 %2411
      %v2413 = vmul.f32 %v2412, %v2406
      %v2414 = vadd.f32 %v2413, 1e-05
      %v2415 = vrsqrt.pop %v2414
      %v2416 = vmul.f32 %v2408, %v2415
      %v2418 = vlaneseq
      %v2419 = vshrl.u32 %v2418, 7
      %v2420 = vsub.s32 0, %v2419
      %v2421 = vrot.slane %v2400, %v2420
      %v2423 = vmul.f32 %v2416, %v2421
      %v2425 = vlaneseq
      %v2426 = vshrl.u32 %v2425, 7
      %v2427 = vsub.s32 0, %v2426
      %v2428 = vrot.slane %v2402, %v2427
      %v2430 = vadd.f32 %v2423, %v2428
      %v2431 = vld [vmem:[%s7] sm:$0xff]
      %v2432 = vld [vmem:[%s7 + $0x8] sm:$0xff]
      %v2433 = vld [vmem:[%s7 + $0x10] sm:$0xff]
      %v2434 = vld [vmem:[%s7 + $0x18] sm:$0xff]
      %v2435 = vld [vmem:[%s8] sm:$0x1]
      %v2437 = vlaneseq
      %v2438 = vshrl.u32 %v2437, 7
      %v2439 = vsub.s32 0, %v2438
      %v2440 = vrot.slane %v2435, %v2439
      %v2443 = vsel %vm506, %v2430, 0
      %2445 = vmatprep.subr.mxu0 0.0
      %2446 = vmatpush1.msra.mxu0 0.0
      %2447 = vmatprep.subr.mxu0 0.0
      %2448 = vmatpush1.msra.mxu0 0.0
      %2449 = vmatprep.subr.mxu0 0.0
      %2450 = vmatpush1.msra.mxu0 0.0
      %2451 = vmatprep.subr.mxu0 0.0
      %2452 = vmatpush1.msra.mxu0 0.0
      %2453 = vmatprep.subr.mxu0 0.0
      %2454 = vmatpush1.msra.mxu0 0.0
      %2455 = vmatprep.subr.mxu0 0.0
      %2456 = vmatpush1.msra.mxu0 0.0
      %2457 = vmatprep.subr.mxu0 0.0
      %2458 = vmatpush1.msra.mxu0 0.0
      %2459 = vmatprep.subr.mxu0 0.0
      %2460 = vmatpush1.msra.mxu0 0.0
      %2461 = vmatprep.subr.mxu0 0.0
      %2462 = vmatpush1.msra.mxu0 0.0
      %2463 = vmatprep.subr.mxu0 0.0
      %2464 = vmatpush1.msra.mxu0 0.0
      %2465 = vmatprep.subr.mxu0 0.0
      %2466 = vmatpush1.msra.mxu0 0.0
      %2467 = vmatprep.subr.mxu0 0.0
      %2468 = vmatpush1.msra.mxu0 0.0
      %2469 = vmatprep.subr.mxu0 0.0
      %2470 = vmatpush1.msra.mxu0 %v2434
      %2471 = vmatprep.subr.mxu0 0.0
      %2472 = vmatpush1.msra.mxu0 %v2433
      %2473 = vmatprep.subr.mxu0 0.0
      %2474 = vmatpush1.msra.mxu0 %v2432
      %2475 = vmatprep.subr.mxu0 0.0
      %2476 = vmatpush1.msra.mxu0 %v2431
      %2477 = vmatprep.subr.mxu0 0.0
      %2478 = vmatpush2.msra.mxu0 0.0
      %2479 = vmatprep.subr.mxu0 0.0
      %2480 = vmatpush2.msra.mxu0 0.0
      %2481 = vmatprep.subr.mxu0 0.0
      %2482 = vmatpush2.msra.mxu0 0.0
      %2483 = vmatprep.subr.mxu0 0.0
      %2484 = vmatpush2.msra.mxu0 0.0
      %2485 = vmatprep.subr.mxu0 0.0
      %2486 = vmatpush2.msra.mxu0 0.0
      %2487 = vmatprep.subr.mxu0 0.0
      %2488 = vmatpush2.msra.mxu0 0.0
      %2489 = vmatprep.subr.mxu0 0.0
      %2490 = vmatpush2.msra.mxu0 0.0
      %2491 = vmatprep.subr.mxu0 0.0
      %2492 = vmatpush2.msra.mxu0 0.0
      %2493 = vmatprep.subr.mxu0 0.0
      %2494 = vmatpush2.msra.mxu0 0.0
      %2495 = vmatprep.subr.mxu0 0.0
      %2496 = vmatpush2.msra.mxu0 0.0
      %2497 = vmatprep.subr.mxu0 0.0
      %2498 = vmatpush2.msra.mxu0 0.0
      %2499 = vmatprep.subr.mxu0 0.0
      %2500 = vmatpush2.msra.mxu0 0.0
      %2501 = vmatprep.subr.mxu0 0.0
      %2502 = vmatpush2.msra.mxu0 0.0
      %2503 = vmatprep.subr.mxu0 0.0
      %2504 = vmatpush2.msra.mxu0 0.0
      %2505 = vmatprep.subr.mxu0 0.0
      %2506 = vmatpush2.msra.mxu0 0.0
      %2507 = vmatprep.subr.mxu0 0.0
      %2508 = vmatpush2.msra.mxu0 0.0
      %2509 = vmatprep.mubr.f32.mxu0 0.0
      %2510 = vmatmul.mubr.f32.gmra.mxu0 %v2443
      %v2511 = vpop.f32.mrf.mxu0
      %v2512 = vadd.f32 %v2440, %v2511
      %v2513 = vpop.f32.mrf.mxu0
      %2514 = vdwg.mxu0
      %v2515 = vmax.f32 %v2512, 0.0
      %v2516 = vld [vmem:[%s9] sm:$0xff]
      %v2517 = vld [vmem:[%s9 + $0x8] sm:$0xff]
      %v2518 = vld [vmem:[%s9 + $0x10] sm:$0xff]
      %v2519 = vld [vmem:[%s9 + $0x18] sm:$0xff]
      %v2520 = vld [vmem:[%s9 + $0x20] sm:$0xff]
      %v2521 = vld [vmem:[%s9 + $0x28] sm:$0xff]
      %v2522 = vld [vmem:[%s9 + $0x30] sm:$0xff]
      %v2523 = vld [vmem:[%s9 + $0x38] sm:$0xff]
      %s2524 = scalar_lea.vmem %s10, 3
      %v2525 = vld [vmem:[%s2524] sm:$0x1]
      %v2527 = vlaneseq
      %v2528 = vshrl.u32 %v2527, 7
      %v2529 = vsub.s32 0, %v2528
      %v2530 = vrot.slane %v2525, %v2529
      %vm2532 = vcmask 523264
      %v2534 = vsel %vm2532, %v2515, 0
      %2536 = vmatprep.subr.mxu0 0.0
      %2537 = vmatpush1.msra.mxu0 0.0
      %2538 = vmatprep.subr.mxu0 0.0
      %2539 = vmatpush1.msra.mxu0 0.0
      %2540 = vmatprep.subr.mxu0 0.0
      %2541 = vmatpush1.msra.mxu0 0.0
      %2542 = vmatprep.subr.mxu0 0.0
      %2543 = vmatpush1.msra.mxu0 0.0
      %2544 = vmatprep.subr.mxu0 0.0
      %2545 = vmatpush1.msra.mxu0 0.0
      %2546 = vmatprep.subr.mxu0 0.0
      %2547 = vmatpush1.msra.mxu0 0.0
      %2548 = vmatprep.subr.mxu0 0.0
      %2549 = vmatpush1.msra.mxu0 0.0
      %2550 = vmatprep.subr.mxu0 0.0
      %2551 = vmatpush1.msra.mxu0 0.0
      %2552 = vmatprep.subr.mxu0 0.0
      %2553 = vmatpush1.msra.mxu0 %v2523
      %2554 = vmatprep.subr.mxu0 0.0
      %2555 = vmatpush1.msra.mxu0 %v2522
      %2556 = vmatprep.subr.mxu0 0.0
      %2557 = vmatpush1.msra.mxu0 %v2521
      %2558 = vmatprep.subr.mxu0 0.0
      %2559 = vmatpush1.msra.mxu0 %v2520
      %2560 = vmatprep.subr.mxu0 0.0
      %2561 = vmatpush1.msra.mxu0 %v2519
      %2562 = vmatprep.subr.mxu0 0.0
      %2563 = vmatpush1.msra.mxu0 %v2518
      %2564 = vmatprep.subr.mxu0 0.0
      %2565 = vmatpush1.msra.mxu0 %v2517
      %2566 = vmatprep.subr.mxu0 0.0
      %2567 = vmatpush1.msra.mxu0 %v2516
      %2568 = vmatprep.subr.mxu0 0.0
      %2569 = vmatpush2.msra.mxu0 0.0
      %2570 = vmatprep.subr.mxu0 0.0
      %2571 = vmatpush2.msra.mxu0 0.0
      %2572 = vmatprep.subr.mxu0 0.0
      %2573 = vmatpush2.msra.mxu0 0.0
      %2574 = vmatprep.subr.mxu0 0.0
      %2575 = vmatpush2.msra.mxu0 0.0
      %2576 = vmatprep.subr.mxu0 0.0
      %2577 = vmatpush2.msra.mxu0 0.0
      %2578 = vmatprep.subr.mxu0 0.0
      %2579 = vmatpush2.msra.mxu0 0.0
      %2580 = vmatprep.subr.mxu0 0.0
      %2581 = vmatpush2.msra.mxu0 0.0
      %2582 = vmatprep.subr.mxu0 0.0
      %2583 = vmatpush2.msra.mxu0 0.0
      %2584 = vmatprep.subr.mxu0 0.0
      %2585 = vmatpush2.msra.mxu0 0.0
      %2586 = vmatprep.subr.mxu0 0.0
      %2587 = vmatpush2.msra.mxu0 0.0
      %2588 = vmatprep.subr.mxu0 0.0
      %2589 = vmatpush2.msra.mxu0 0.0
      %2590 = vmatprep.subr.mxu0 0.0
      %2591 = vmatpush2.msra.mxu0 0.0
      %2592 = vmatprep.subr.mxu0 0.0
      %2593 = vmatpush2.msra.mxu0 0.0
      %2594 = vmatprep.subr.mxu0 0.0
      %2595 = vmatpush2.msra.mxu0 0.0
      %2596 = vmatprep.subr.mxu0 0.0
      %2597 = vmatpush2.msra.mxu0 0.0
      %2598 = vmatprep.subr.mxu0 0.0
      %2599 = vmatpush2.msra.mxu0 0.0
      %2600 = vmatprep.mubr.f32.mxu0 0.0
      %2601 = vmatmul.mubr.f32.gmra.mxu0 %v2534
      %v2602 = vpop.f32.mrf.mxu0
      %v2603 = vadd.f32 %v2530, %v2602
      %v2604 = vpop.f32.mrf.mxu0
      %2605 = vdwg.mxu0
      %v2606 = vadd.f32 %v2430, %v2603
      %s2607 = scalar_lea.vmem %s10, 4
      %v2608 = vld [vmem:[%s2607] sm:$0x1]
      %s2609 = scalar_lea.vmem %s10, 5
      %v2610 = vld [vmem:[%s2609] sm:$0x1]
      %v2611 = vsel %vm506, %v2606, 0.0
      %2612 = vadd.xlane.f32.xlu0 %v2611
      %v2613 = vpop.xlane.xlu0 %2612
      %v2614 = vmul.f32 %v2613, %v2406
      %v2615 = vsub.f32 %v2606, %v2614
      %v2616 = vmul.f32 %v2615, %v2615
      %v2617 = vsel %vm506, %v2616, 0.0
      %2618 = vadd.xlane.f32.xlu0 %v2617
      %v2619 = vpop.xlane.xlu0 %2618
      %v2620 = vmul.f32 %v2619, %v2406
      %v2621 = vadd.f32 %v2620, 1e-05
      %v2622 = vrsqrt.pop %v2621
      %v2623 = vmul.f32 %v2615, %v2622
      %v2625 = vlaneseq
      %v2626 = vshrl.u32 %v2625, 7
      %v2627 = vsub.s32 0, %v2626
      %v2628 = vrot.slane %v2608, %v2627
      %v2630 = vmul.f32 %v2623, %v2628
      %v2632 = vlaneseq
      %v2633 = vshrl.u32 %v2632, 7
      %v2634 = vsub.s32 0, %v2633
      %v2635 = vrot.slane %v2610, %v2634
      %v2637 = vadd.f32 %v2630, %v2635
      %s2638 = scalar_lea.vmem %s4, 384
      %v2639 = vld [vmem:[%s2638] sm:$0xff]
      %v2640 = vld [vmem:[%s2638 + $0x8] sm:$0xff]
      %v2641 = vld [vmem:[%s2638 + $0x10] sm:$0xff]
      %v2642 = vld [vmem:[%s2638 + $0x18] sm:$0xff]
      %v2643 = vld [vmem:[%s2638 + $0x20] sm:$0xff]
      %v2644 = vld [vmem:[%s2638 + $0x28] sm:$0xff]
      %v2645 = vld [vmem:[%s2638 + $0x30] sm:$0xff]
      %v2646 = vld [vmem:[%s2638 + $0x38] sm:$0xff]
      %v2647 = vld [vmem:[%s2638 + $0x40] sm:$0xff]
      %v2648 = vld [vmem:[%s2638 + $0x48] sm:$0xff]
      %v2649 = vld [vmem:[%s2638 + $0x50] sm:$0xff]
      %v2650 = vld [vmem:[%s2638 + $0x58] sm:$0xff]
      %v2651 = vld [vmem:[%s2638 + $0x60] sm:$0xff]
      %v2652 = vld [vmem:[%s2638 + $0x68] sm:$0xff]
      %v2653 = vld [vmem:[%s2638 + $0x70] sm:$0xff]
      %v2654 = vld [vmem:[%s2638 + $0x78] sm:$0xff]
      %s2655 = scalar_lea.vmem %s5, 12
      %v2656 = vld [vmem:[%s2655] sm:$0x1]
      %v2657 = vld [vmem:[%s2655 + $0x1] sm:$0x1]
      %v2658 = vld [vmem:[%s2655 + $0x2] sm:$0x1]
      %v2659 = vld [vmem:[%s2655 + $0x3] sm:$0x1]
      %v2664 = vlaneseq
      %v2665 = vshrl.u32 %v2664, 7
      %v2666 = vsub.s32 0, %v2665
      %v2667 = vrot.slane %v2656, %v2666
      %v2668 = vlaneseq
      %v2669 = vshrl.u32 %v2668, 7
      %v2670 = vsub.s32 0, %v2669
      %v2671 = vrot.slane %v2657, %v2670
      %v2672 = vlaneseq
      %v2673 = vshrl.u32 %v2672, 7
      %v2674 = vsub.s32 0, %v2673
      %v2675 = vrot.slane %v2658, %v2674
      %v2676 = vlaneseq
      %v2677 = vshrl.u32 %v2676, 7
      %v2678 = vsub.s32 0, %v2677
      %v2679 = vrot.slane %v2659, %v2678
      %v2685 = vsel %vm506, %v2637, 0
      %2687 = vmatprep.subr.mxu0 0.0
      %2688 = vmatpush1.msra.mxu0 0.0
      %2689 = vmatprep.subr.mxu0 0.0
      %2690 = vmatpush1.msra.mxu0 0.0
      %2691 = vmatprep.subr.mxu0 0.0
      %2692 = vmatpush1.msra.mxu0 0.0
      %2693 = vmatprep.subr.mxu0 0.0
      %2694 = vmatpush1.msra.mxu0 0.0
      %2695 = vmatprep.subr.mxu0 0.0
      %2696 = vmatpush1.msra.mxu0 0.0
      %2697 = vmatprep.subr.mxu0 0.0
      %2698 = vmatpush1.msra.mxu0 0.0
      %2699 = vmatprep.subr.mxu0 0.0
      %2700 = vmatpush1.msra.mxu0 0.0
      %2701 = vmatprep.subr.mxu0 0.0
      %2702 = vmatpush1.msra.mxu0 0.0
      %2703 = vmatprep.subr.mxu0 0.0
      %2704 = vmatpush1.msra.mxu0 0.0
      %2705 = vmatprep.subr.mxu0 0.0
      %2706 = vmatpush1.msra.mxu0 0.0
      %2707 = vmatprep.subr.mxu0 0.0
      %2708 = vmatpush1.msra.mxu0 0.0
      %2709 = vmatprep.subr.mxu0 0.0
      %2710 = vmatpush1.msra.mxu0 0.0
      %2711 = vmatprep.subr.mxu0 0.0
      %2712 = vmatpush1.msra.mxu0 %v2642
      %2713 = vmatprep.subr.mxu0 0.0
      %2714 = vmatpush1.msra.mxu0 %v2641
      %2715 = vmatprep.subr.mxu0 0.0
      %2716 = vmatpush1.msra.mxu0 %v2640
      %2717 = vmatprep.subr.mxu0 0.0
      %2718 = vmatpush1.msra.mxu0 %v2639
      %2719 = vmatprep.subr.mxu0 0.0
      %2720 = vmatpush2.msra.mxu0 0.0
      %2721 = vmatprep.subr.mxu0 0.0
      %2722 = vmatpush2.msra.mxu0 0.0
      %2723 = vmatprep.subr.mxu0 0.0
      %2724 = vmatpush2.msra.mxu0 0.0
      %2725 = vmatprep.subr.mxu0 0.0
      %2726 = vmatpush2.msra.mxu0 0.0
      %2727 = vmatprep.subr.mxu0 0.0
      %2728 = vmatpush2.msra.mxu0 0.0
      %2729 = vmatprep.subr.mxu0 0.0
      %2730 = vmatpush2.msra.mxu0 0.0
      %2731 = vmatprep.subr.mxu0 0.0
      %2732 = vmatpush2.msra.mxu0 0.0
      %2733 = vmatprep.subr.mxu0 0.0
      %2734 = vmatpush2.msra.mxu0 0.0
      %2735 = vmatprep.subr.mxu0 0.0
      %2736 = vmatpush2.msra.mxu0 0.0
      %2737 = vmatprep.subr.mxu0 0.0
      %2738 = vmatpush2.msra.mxu0 0.0
      %2739 = vmatprep.subr.mxu0 0.0
      %2740 = vmatpush2.msra.mxu0 0.0
      %2741 = vmatprep.subr.mxu0 0.0
      %2742 = vmatpush2.msra.mxu0 0.0
      %2743 = vmatprep.subr.mxu0 0.0
      %2744 = vmatpush2.msra.mxu0 0.0
      %2745 = vmatprep.subr.mxu0 0.0
      %2746 = vmatpush2.msra.mxu0 0.0
      %2747 = vmatprep.subr.mxu0 0.0
      %2748 = vmatpush2.msra.mxu0 0.0
      %2749 = vmatprep.subr.mxu0 0.0
      %2750 = vmatpush2.msra.mxu0 0.0
      %2751 = vmatprep.mubr.f32.mxu0 0.0
      %2752 = vmatmul.mubr.f32.gmra.mxu0 %v2685
      %v2753 = vpop.f32.mrf.mxu0
      %v2754 = vadd.f32 %v2667, %v2753
      %v2755 = vpop.f32.mrf.mxu0
      %2756 = vdwg.mxu0
      %2757 = vmatprep.subr.mxu0 0.0
      %2758 = vmatpush1.msra.mxu0 0.0
      %2759 = vmatprep.subr.mxu0 0.0
      %2760 = vmatpush1.msra.mxu0 0.0
      %2761 = vmatprep.subr.mxu0 0.0
      %2762 = vmatpush1.msra.mxu0 0.0
      %2763 = vmatprep.subr.mxu0 0.0
      %2764 = vmatpush1.msra.mxu0 0.0
      %2765 = vmatprep.subr.mxu0 0.0
      %2766 = vmatpush1.msra.mxu0 0.0
      %2767 = vmatprep.subr.mxu0 0.0
      %2768 = vmatpush1.msra.mxu0 0.0
      %2769 = vmatprep.subr.mxu0 0.0
      %2770 = vmatpush1.msra.mxu0 0.0
      %2771 = vmatprep.subr.mxu0 0.0
      %2772 = vmatpush1.msra.mxu0 0.0
      %2773 = vmatprep.subr.mxu0 0.0
      %2774 = vmatpush1.msra.mxu0 0.0
      %2775 = vmatprep.subr.mxu0 0.0
      %2776 = vmatpush1.msra.mxu0 0.0
      %2777 = vmatprep.subr.mxu0 0.0
      %2778 = vmatpush1.msra.mxu0 0.0
      %2779 = vmatprep.subr.mxu0 0.0
      %2780 = vmatpush1.msra.mxu0 0.0
      %2781 = vmatprep.subr.mxu0 0.0
      %2782 = vmatpush1.msra.mxu0 %v2646
      %2783 = vmatprep.subr.mxu0 0.0
      %2784 = vmatpush1.msra.mxu0 %v2645
      %2785 = vmatprep.subr.mxu0 0.0
      %2786 = vmatpush1.msra.mxu0 %v2644
      %2787 = vmatprep.subr.mxu0 0.0
      %2788 = vmatpush1.msra.mxu0 %v2643
      %2789 = vmatprep.subr.mxu0 0.0
      %2790 = vmatpush2.msra.mxu0 0.0
      %2791 = vmatprep.subr.mxu0 0.0
      %2792 = vmatpush2.msra.mxu0 0.0
      %2793 = vmatprep.subr.mxu0 0.0
      %2794 = vmatpush2.msra.mxu0 0.0
      %2795 = vmatprep.subr.mxu0 0.0
      %2796 = vmatpush2.msra.mxu0 0.0
      %2797 = vmatprep.subr.mxu0 0.0
      %2798 = vmatpush2.msra.mxu0 0.0
      %2799 = vmatprep.subr.mxu0 0.0
      %2800 = vmatpush2.msra.mxu0 0.0
      %2801 = vmatprep.subr.mxu0 0.0
      %2802 = vmatpush2.msra.mxu0 0.0
      %2803 = vmatprep.subr.mxu0 0.0
      %2804 = vmatpush2.msra.mxu0 0.0
      %2805 = vmatprep.subr.mxu0 0.0
      %2806 = vmatpush2.msra.mxu0 0.0
      %2807 = vmatprep.subr.mxu0 0.0
      %2808 = vmatpush2.msra.mxu0 0.0
      %2809 = vmatprep.subr.mxu0 0.0
      %2810 = vmatpush2.msra.mxu0 0.0
      %2811 = vmatprep.subr.mxu0 0.0
      %2812 = vmatpush2.msra.mxu0 0.0
      %2813 = vmatprep.subr.mxu0 0.0
      %2814 = vmatpush2.msra.mxu0 0.0
      %2815 = vmatprep.subr.mxu0 0.0
      %2816 = vmatpush2.msra.mxu0 0.0
      %2817 = vmatprep.subr.mxu0 0.0
      %2818 = vmatpush2.msra.mxu0 0.0
      %2819 = vmatprep.subr.mxu0 0.0
      %2820 = vmatpush2.msra.mxu0 0.0
      %2821 = vmatprep.mubr.f32.mxu0 0.0
      %2822 = vmatmul.mubr.f32.gmra.mxu0 %v2685
      %v2823 = vpop.f32.mrf.mxu0
      %v2824 = vadd.f32 %v2671, %v2823
      %v2825 = vpop.f32.mrf.mxu0
      %2826 = vdwg.mxu0
      %2827 = vmatprep.subr.mxu0 0.0
      %2828 = vmatpush1.msra.mxu0 0.0
      %2829 = vmatprep.subr.mxu0 0.0
      %2830 = vmatpush1.msra.mxu0 0.0
      %2831 = vmatprep.subr.mxu0 0.0
      %2832 = vmatpush1.msra.mxu0 0.0
      %2833 = vmatprep.subr.mxu0 0.0
      %2834 = vmatpush1.msra.mxu0 0.0
      %2835 = vmatprep.subr.mxu0 0.0
      %2836 = vmatpush1.msra.mxu0 0.0
      %2837 = vmatprep.subr.mxu0 0.0
      %2838 = vmatpush1.msra.mxu0 0.0
      %2839 = vmatprep.subr.mxu0 0.0
      %2840 = vmatpush1.msra.mxu0 0.0
      %2841 = vmatprep.subr.mxu0 0.0
      %2842 = vmatpush1.msra.mxu0 0.0
      %2843 = vmatprep.subr.mxu0 0.0
      %2844 = vmatpush1.msra.mxu0 0.0
      %2845 = vmatprep.subr.mxu0 0.0
      %2846 = vmatpush1.msra.mxu0 0.0
      %2847 = vmatprep.subr.mxu0 0.0
      %2848 = vmatpush1.msra.mxu0 0.0
      %2849 = vmatprep.subr.mxu0 0.0
      %2850 = vmatpush1.msra.mxu0 0.0
      %2851 = vmatprep.subr.mxu0 0.0
      %2852 = vmatpush1.msra.mxu0 %v2650
      %2853 = vmatprep.subr.mxu0 0.0
      %2854 = vmatpush1.msra.mxu0 %v2649
      %2855 = vmatprep.subr.mxu0 0.0
      %2856 = vmatpush1.msra.mxu0 %v2648
      %2857 = vmatprep.subr.mxu0 0.0
      %2858 = vmatpush1.msra.mxu0 %v2647
      %2859 = vmatprep.subr.mxu0 0.0
      %2860 = vmatpush2.msra.mxu0 0.0
      %2861 = vmatprep.subr.mxu0 0.0
      %2862 = vmatpush2.msra.mxu0 0.0
      %2863 = vmatprep.subr.mxu0 0.0
      %2864 = vmatpush2.msra.mxu0 0.0
      %2865 = vmatprep.subr.mxu0 0.0
      %2866 = vmatpush2.msra.mxu0 0.0
      %2867 = vmatprep.subr.mxu0 0.0
      %2868 = vmatpush2.msra.mxu0 0.0
      %2869 = vmatprep.subr.mxu0 0.0
      %2870 = vmatpush2.msra.mxu0 0.0
      %2871 = vmatprep.subr.mxu0 0.0
      %2872 = vmatpush2.msra.mxu0 0.0
      %2873 = vmatprep.subr.mxu0 0.0
      %2874 = vmatpush2.msra.mxu0 0.0
      %2875 = vmatprep.subr.mxu0 0.0
      %2876 = vmatpush2.msra.mxu0 0.0
      %2877 = vmatprep.subr.mxu0 0.0
      %2878 = vmatpush2.msra.mxu0 0.0
      %2879 = vmatprep.subr.mxu0 0.0
      %2880 = vmatpush2.msra.mxu0 0.0
      %2881 = vmatprep.subr.mxu0 0.0
      %2882 = vmatpush2.msra.mxu0 0.0
      %2883 = vmatprep.subr.mxu0 0.0
      %2884 = vmatpush2.msra.mxu0 0.0
      %2885 = vmatprep.subr.mxu0 0.0
      %2886 = vmatpush2.msra.mxu0 0.0
      %2887 = vmatprep.subr.mxu0 0.0
      %2888 = vmatpush2.msra.mxu0 0.0
      %2889 = vmatprep.subr.mxu0 0.0
      %2890 = vmatpush2.msra.mxu0 0.0
      %2891 = vmatprep.mubr.f32.mxu0 0.0
      %2892 = vmatmul.mubr.f32.gmra.mxu0 %v2685
      %v2893 = vpop.f32.mrf.mxu0
      %v2894 = vadd.f32 %v2675, %v2893
      %v2895 = vpop.f32.mrf.mxu0
      %2896 = vdwg.mxu0
      %2897 = vmatprep.subr.mxu0 0.0
      %2898 = vmatpush1.msra.mxu0 0.0
      %2899 = vmatprep.subr.mxu0 0.0
      %2900 = vmatpush1.msra.mxu0 0.0
      %2901 = vmatprep.subr.mxu0 0.0
      %2902 = vmatpush1.msra.mxu0 0.0
      %2903 = vmatprep.subr.mxu0 0.0
      %2904 = vmatpush1.msra.mxu0 0.0
      %2905 = vmatprep.subr.mxu0 0.0
      %2906 = vmatpush1.msra.mxu0 0.0
      %2907 = vmatprep.subr.mxu0 0.0
      %2908 = vmatpush1.msra.mxu0 0.0
      %2909 = vmatprep.subr.mxu0 0.0
      %2910 = vmatpush1.msra.mxu0 0.0
      %2911 = vmatprep.subr.mxu0 0.0
      %2912 = vmatpush1.msra.mxu0 0.0
      %2913 = vmatprep.subr.mxu0 0.0
      %2914 = vmatpush1.msra.mxu0 0.0
      %2915 = vmatprep.subr.mxu0 0.0
      %2916 = vmatpush1.msra.mxu0 0.0
      %2917 = vmatprep.subr.mxu0 0.0
      %2918 = vmatpush1.msra.mxu0 0.0
      %2919 = vmatprep.subr.mxu0 0.0
      %2920 = vmatpush1.msra.mxu0 0.0
      %2921 = vmatprep.subr.mxu0 0.0
      %2922 = vmatpush1.msra.mxu0 %v2654
      %2923 = vmatprep.subr.mxu0 0.0
      %2924 = vmatpush1.msra.mxu0 %v2653
      %2925 = vmatprep.subr.mxu0 0.0
      %2926 = vmatpush1.msra.mxu0 %v2652
      %2927 = vmatprep.subr.mxu0 0.0
      %2928 = vmatpush1.msra.mxu0 %v2651
      %2929 = vmatprep.subr.mxu0 0.0
      %2930 = vmatpush2.msra.mxu0 0.0
      %2931 = vmatprep.subr.mxu0 0.0
      %2932 = vmatpush2.msra.mxu0 0.0
      %2933 = vmatprep.subr.mxu0 0.0
      %2934 = vmatpush2.msra.mxu0 0.0
      %2935 = vmatprep.subr.mxu0 0.0
      %2936 = vmatpush2.msra.mxu0 0.0
      %2937 = vmatprep.subr.mxu0 0.0
      %2938 = vmatpush2.msra.mxu0 0.0
      %2939 = vmatprep.subr.mxu0 0.0
      %2940 = vmatpush2.msra.mxu0 0.0
      %2941 = vmatprep.subr.mxu0 0.0
      %2942 = vmatpush2.msra.mxu0 0.0
      %2943 = vmatprep.subr.mxu0 0.0
      %2944 = vmatpush2.msra.mxu0 0.0
      %2945 = vmatprep.subr.mxu0 0.0
      %2946 = vmatpush2.msra.mxu0 0.0
      %2947 = vmatprep.subr.mxu0 0.0
      %2948 = vmatpush2.msra.mxu0 0.0
      %2949 = vmatprep.subr.mxu0 0.0
      %2950 = vmatpush2.msra.mxu0 0.0
      %2951 = vmatprep.subr.mxu0 0.0
      %2952 = vmatpush2.msra.mxu0 0.0
      %2953 = vmatprep.subr.mxu0 0.0
      %2954 = vmatpush2.msra.mxu0 0.0
      %2955 = vmatprep.subr.mxu0 0.0
      %2956 = vmatpush2.msra.mxu0 0.0
      %2957 = vmatprep.subr.mxu0 0.0
      %2958 = vmatpush2.msra.mxu0 0.0
      %2959 = vmatprep.subr.mxu0 0.0
      %2960 = vmatpush2.msra.mxu0 0.0
      %2961 = vmatprep.mubr.f32.mxu0 0.0
      %2962 = vmatmul.mubr.f32.gmra.mxu0 %v2685
      %v2963 = vpop.f32.mrf.mxu0
      %v2964 = vadd.f32 %v2679, %v2963
      %v2965 = vpop.f32.mrf.mxu0
      %2966 = vdwg.mxu0
      %s2967 = scalar_lea.vmem %s4, 512
      %v2968 = vld [vmem:[%s2967] sm:$0xff]
      %v2969 = vld [vmem:[%s2967 + $0x8] sm:$0xff]
      %v2970 = vld [vmem:[%s2967 + $0x10] sm:$0xff]
      %v2971 = vld [vmem:[%s2967 + $0x18] sm:$0xff]
      %v2972 = vld [vmem:[%s2967 + $0x20] sm:$0xff]
      %v2973 = vld [vmem:[%s2967 + $0x28] sm:$0xff]
      %v2974 = vld [vmem:[%s2967 + $0x30] sm:$0xff]
      %v2975 = vld [vmem:[%s2967 + $0x38] sm:$0xff]
      %v2976 = vld [vmem:[%s2967 + $0x40] sm:$0xff]
      %v2977 = vld [vmem:[%s2967 + $0x48] sm:$0xff]
      %v2978 = vld [vmem:[%s2967 + $0x50] sm:$0xff]
      %v2979 = vld [vmem:[%s2967 + $0x58] sm:$0xff]
      %v2980 = vld [vmem:[%s2967 + $0x60] sm:$0xff]
      %v2981 = vld [vmem:[%s2967 + $0x68] sm:$0xff]
      %v2982 = vld [vmem:[%s2967 + $0x70] sm:$0xff]
      %v2983 = vld [vmem:[%s2967 + $0x78] sm:$0xff]
      %s2984 = scalar_lea.vmem %s5, 16
      %v2985 = vld [vmem:[%s2984] sm:$0x1]
      %v2986 = vld [vmem:[%s2984 + $0x1] sm:$0x1]
      %v2987 = vld [vmem:[%s2984 + $0x2] sm:$0x1]
      %v2988 = vld [vmem:[%s2984 + $0x3] sm:$0x1]
      %v2993 = vlaneseq
      %v2994 = vshrl.u32 %v2993, 7
      %v2995 = vsub.s32 0, %v2994
      %v2996 = vrot.slane %v2985, %v2995
      %v2997 = vlaneseq
      %v2998 = vshrl.u32 %v2997, 7
      %v2999 = vsub.s32 0, %v2998
      %v3000 = vrot.slane %v2986, %v2999
      %v3001 = vlaneseq
      %v3002 = vshrl.u32 %v3001, 7
      %v3003 = vsub.s32 0, %v3002
      %v3004 = vrot.slane %v2987, %v3003
      %v3005 = vlaneseq
      %v3006 = vshrl.u32 %v3005, 7
      %v3007 = vsub.s32 0, %v3006
      %v3008 = vrot.slane %v2988, %v3007
      %3013 = vmatprep.subr.mxu0 0.0
      %3014 = vmatpush1.msra.mxu0 0.0
      %3015 = vmatprep.subr.mxu0 0.0
      %3016 = vmatpush1.msra.mxu0 0.0
      %3017 = vmatprep.subr.mxu0 0.0
      %3018 = vmatpush1.msra.mxu0 0.0
      %3019 = vmatprep.subr.mxu0 0.0
      %3020 = vmatpush1.msra.mxu0 0.0
      %3021 = vmatprep.subr.mxu0 0.0
      %3022 = vmatpush1.msra.mxu0 0.0
      %3023 = vmatprep.subr.mxu0 0.0
      %3024 = vmatpush1.msra.mxu0 0.0
      %3025 = vmatprep.subr.mxu0 0.0
      %3026 = vmatpush1.msra.mxu0 0.0
      %3027 = vmatprep.subr.mxu0 0.0
      %3028 = vmatpush1.msra.mxu0 0.0
      %3029 = vmatprep.subr.mxu0 0.0
      %3030 = vmatpush1.msra.mxu0 0.0
      %3031 = vmatprep.subr.mxu0 0.0
      %3032 = vmatpush1.msra.mxu0 0.0
      %3033 = vmatprep.subr.mxu0 0.0
      %3034 = vmatpush1.msra.mxu0 0.0
      %3035 = vmatprep.subr.mxu0 0.0
      %3036 = vmatpush1.msra.mxu0 0.0
      %3037 = vmatprep.subr.mxu0 0.0
      %3038 = vmatpush1.msra.mxu0 %v2971
      %3039 = vmatprep.subr.mxu0 0.0
      %3040 = vmatpush1.msra.mxu0 %v2970
      %3041 = vmatprep.subr.mxu0 0.0
      %3042 = vmatpush1.msra.mxu0 %v2969
      %3043 = vmatprep.subr.mxu0 0.0
      %3044 = vmatpush1.msra.mxu0 %v2968
      %3045 = vmatprep.subr.mxu0 0.0
      %3046 = vmatpush2.msra.mxu0 0.0
      %3047 = vmatprep.subr.mxu0 0.0
      %3048 = vmatpush2.msra.mxu0 0.0
      %3049 = vmatprep.subr.mxu0 0.0
      %3050 = vmatpush2.msra.mxu0 0.0
      %3051 = vmatprep.subr.mxu0 0.0
      %3052 = vmatpush2.msra.mxu0 0.0
      %3053 = vmatprep.subr.mxu0 0.0
      %3054 = vmatpush2.msra.mxu0 0.0
      %3055 = vmatprep.subr.mxu0 0.0
      %3056 = vmatpush2.msra.mxu0 0.0
      %3057 = vmatprep.subr.mxu0 0.0
      %3058 = vmatpush2.msra.mxu0 0.0
      %3059 = vmatprep.subr.mxu0 0.0
      %3060 = vmatpush2.msra.mxu0 0.0
      %3061 = vmatprep.subr.mxu0 0.0
      %3062 = vmatpush2.msra.mxu0 0.0
      %3063 = vmatprep.subr.mxu0 0.0
      %3064 = vmatpush2.msra.mxu0 0.0
      %3065 = vmatprep.subr.mxu0 0.0
      %3066 = vmatpush2.msra.mxu0 0.0
      %3067 = vmatprep.subr.mxu0 0.0
      %3068 = vmatpush2.msra.mxu0 0.0
      %3069 = vmatprep.subr.mxu0 0.0
      %3070 = vmatpush2.msra.mxu0 0.0
      %3071 = vmatprep.subr.mxu0 0.0
      %3072 = vmatpush2.msra.mxu0 0.0
      %3073 = vmatprep.subr.mxu0 0.0
      %3074 = vmatpush2.msra.mxu0 0.0
      %3075 = vmatprep.subr.mxu0 0.0
      %3076 = vmatpush2.msra.mxu0 0.0
      %3077 = vmatprep.mubr.f32.mxu0 0.0
      %3078 = vmatmul.mubr.f32.gmra.mxu0 %v2685
      %v3079 = vpop.f32.mrf.mxu0
      %v3080 = vadd.f32 %v2996, %v3079
      %v3081 = vpop.f32.mrf.mxu0
      %3082 = vdwg.mxu0
      %3083 = vmatprep.subr.mxu0 0.0
      %3084 = vmatpush1.msra.mxu0 0.0
      %3085 = vmatprep.subr.mxu0 0.0
      %3086 = vmatpush1.msra.mxu0 0.0
      %3087 = vmatprep.subr.mxu0 0.0
      %3088 = vmatpush1.msra.mxu0 0.0
      %3089 = vmatprep.subr.mxu0 0.0
      %3090 = vmatpush1.msra.mxu0 0.0
      %3091 = vmatprep.subr.mxu0 0.0
      %3092 = vmatpush1.msra.mxu0 0.0
      %3093 = vmatprep.subr.mxu0 0.0
      %3094 = vmatpush1.msra.mxu0 0.0
      %3095 = vmatprep.subr.mxu0 0.0
      %3096 = vmatpush1.msra.mxu0 0.0
      %3097 = vmatprep.subr.mxu0 0.0
      %3098 = vmatpush1.msra.mxu0 0.0
      %3099 = vmatprep.subr.mxu0 0.0
      %3100 = vmatpush1.msra.mxu0 0.0
      %3101 = vmatprep.subr.mxu0 0.0
      %3102 = vmatpush1.msra.mxu0 0.0
      %3103 = vmatprep.subr.mxu0 0.0
      %3104 = vmatpush1.msra.mxu0 0.0
      %3105 = vmatprep.subr.mxu0 0.0
      %3106 = vmatpush1.msra.mxu0 0.0
      %3107 = vmatprep.subr.mxu0 0.0
      %3108 = vmatpush1.msra.mxu0 %v2975
      %3109 = vmatprep.subr.mxu0 0.0
      %3110 = vmatpush1.msra.mxu0 %v2974
      %3111 = vmatprep.subr.mxu0 0.0
      %3112 = vmatpush1.msra.mxu0 %v2973
      %3113 = vmatprep.subr.mxu0 0.0
      %3114 = vmatpush1.msra.mxu0 %v2972
      %3115 = vmatprep.subr.mxu0 0.0
      %3116 = vmatpush2.msra.mxu0 0.0
      %3117 = vmatprep.subr.mxu0 0.0
      %3118 = vmatpush2.msra.mxu0 0.0
      %3119 = vmatprep.subr.mxu0 0.0
      %3120 = vmatpush2.msra.mxu0 0.0
      %3121 = vmatprep.subr.mxu0 0.0
      %3122 = vmatpush2.msra.mxu0 0.0
      %3123 = vmatprep.subr.mxu0 0.0
      %3124 = vmatpush2.msra.mxu0 0.0
      %3125 = vmatprep.subr.mxu0 0.0
      %3126 = vmatpush2.msra.mxu0 0.0
      %3127 = vmatprep.subr.mxu0 0.0
      %3128 = vmatpush2.msra.mxu0 0.0
      %3129 = vmatprep.subr.mxu0 0.0
      %3130 = vmatpush2.msra.mxu0 0.0
      %3131 = vmatprep.subr.mxu0 0.0
      %3132 = vmatpush2.msra.mxu0 0.0
      %3133 = vmatprep.subr.mxu0 0.0
      %3134 = vmatpush2.msra.mxu0 0.0
      %3135 = vmatprep.subr.mxu0 0.0
      %3136 = vmatpush2.msra.mxu0 0.0
      %3137 = vmatprep.subr.mxu0 0.0
      %3138 = vmatpush2.msra.mxu0 0.0
      %3139 = vmatprep.subr.mxu0 0.0
      %3140 = vmatpush2.msra.mxu0 0.0
      %3141 = vmatprep.subr.mxu0 0.0
      %3142 = vmatpush2.msra.mxu0 0.0
      %3143 = vmatprep.subr.mxu0 0.0
      %3144 = vmatpush2.msra.mxu0 0.0
      %3145 = vmatprep.subr.mxu0 0.0
      %3146 = vmatpush2.msra.mxu0 0.0
      %3147 = vmatprep.mubr.f32.mxu0 0.0
      %3148 = vmatmul.mubr.f32.gmra.mxu0 %v2685
      %v3149 = vpop.f32.mrf.mxu0
      %v3150 = vadd.f32 %v3000, %v3149
      %v3151 = vpop.f32.mrf.mxu0
      %3152 = vdwg.mxu0
      %3153 = vmatprep.subr.mxu0 0.0
      %3154 = vmatpush1.msra.mxu0 0.0
      %3155 = vmatprep.subr.mxu0 0.0
      %3156 = vmatpush1.msra.mxu0 0.0
      %3157 = vmatprep.subr.mxu0 0.0
      %3158 = vmatpush1.msra.mxu0 0.0
      %3159 = vmatprep.subr.mxu0 0.0
      %3160 = vmatpush1.msra.mxu0 0.0
      %3161 = vmatprep.subr.mxu0 0.0
      %3162 = vmatpush1.msra.mxu0 0.0
      %3163 = vmatprep.subr.mxu0 0.0
      %3164 = vmatpush1.msra.mxu0 0.0
      %3165 = vmatprep.subr.mxu0 0.0
      %3166 = vmatpush1.msra.mxu0 0.0
      %3167 = vmatprep.subr.mxu0 0.0
      %3168 = vmatpush1.msra.mxu0 0.0
      %3169 = vmatprep.subr.mxu0 0.0
      %3170 = vmatpush1.msra.mxu0 0.0
      %3171 = vmatprep.subr.mxu0 0.0
      %3172 = vmatpush1.msra.mxu0 0.0
      %3173 = vmatprep.subr.mxu0 0.0
      %3174 = vmatpush1.msra.mxu0 0.0
      %3175 = vmatprep.subr.mxu0 0.0
      %3176 = vmatpush1.msra.mxu0 0.0
      %3177 = vmatprep.subr.mxu0 0.0
      %3178 = vmatpush1.msra.mxu0 %v2979
      %3179 = vmatprep.subr.mxu0 0.0
      %3180 = vmatpush1.msra.mxu0 %v2978
      %3181 = vmatprep.subr.mxu0 0.0
      %3182 = vmatpush1.msra.mxu0 %v2977
      %3183 = vmatprep.subr.mxu0 0.0
      %3184 = vmatpush1.msra.mxu0 %v2976
      %3185 = vmatprep.subr.mxu0 0.0
      %3186 = vmatpush2.msra.mxu0 0.0
      %3187 = vmatprep.subr.mxu0 0.0
      %3188 = vmatpush2.msra.mxu0 0.0
      %3189 = vmatprep.subr.mxu0 0.0
      %3190 = vmatpush2.msra.mxu0 0.0
      %3191 = vmatprep.subr.mxu0 0.0
      %3192 = vmatpush2.msra.mxu0 0.0
      %3193 = vmatprep.subr.mxu0 0.0
      %3194 = vmatpush2.msra.mxu0 0.0
      %3195 = vmatprep.subr.mxu0 0.0
      %3196 = vmatpush2.msra.mxu0 0.0
      %3197 = vmatprep.subr.mxu0 0.0
      %3198 = vmatpush2.msra.mxu0 0.0
      %3199 = vmatprep.subr.mxu0 0.0
      %3200 = vmatpush2.msra.mxu0 0.0
      %3201 = vmatprep.subr.mxu0 0.0
      %3202 = vmatpush2.msra.mxu0 0.0
      %3203 = vmatprep.subr.mxu0 0.0
      %3204 = vmatpush2.msra.mxu0 0.0
      %3205 = vmatprep.subr.mxu0 0.0
      %3206 = vmatpush2.msra.mxu0 0.0
      %3207 = vmatprep.subr.mxu0 0.0
      %3208 = vmatpush2.msra.mxu0 0.0
      %3209 = vmatprep.subr.mxu0 0.0
      %3210 = vmatpush2.msra.mxu0 0.0
      %3211 = vmatprep.subr.mxu0 0.0
      %3212 = vmatpush2.msra.mxu0 0.0
      %3213 = vmatprep.subr.mxu0 0.0
      %3214 = vmatpush2.msra.mxu0 0.0
      %3215 = vmatprep.subr.mxu0 0.0
      %3216 = vmatpush2.msra.mxu0 0.0
      %3217 = vmatprep.mubr.f32.mxu0 0.0
      %3218 = vmatmul.mubr.f32.gmra.mxu0 %v2685
      %v3219 = vpop.f32.mrf.mxu0
      %v3220 = vadd.f32 %v3004, %v3219
      %v3221 = vpop.f32.mrf.mxu0
      %3222 = vdwg.mxu0
      %3223 = vmatprep.subr.mxu0 0.0
      %3224 = vmatpush1.msra.mxu0 0.0
      %3225 = vmatprep.subr.mxu0 0.0
      %3226 = vmatpush1.msra.mxu0 0.0
      %3227 = vmatprep.subr.mxu0 0.0
      %3228 = vmatpush1.msra.mxu0 0.0
      %3229 = vmatprep.subr.mxu0 0.0
      %3230 = vmatpush1.msra.mxu0 0.0
      %3231 = vmatprep.subr.mxu0 0.0
      %3232 = vmatpush1.msra.mxu0 0.0
      %3233 = vmatprep.subr.mxu0 0.0
      %3234 = vmatpush1.msra.mxu0 0.0
      %3235 = vmatprep.subr.mxu0 0.0
      %3236 = vmatpush1.msra.mxu0 0.0
      %3237 = vmatprep.subr.mxu0 0.0
      %3238 = vmatpush1.msra.mxu0 0.0
      %3239 = vmatprep.subr.mxu0 0.0
      %3240 = vmatpush1.msra.mxu0 0.0
      %3241 = vmatprep.subr.mxu0 0.0
      %3242 = vmatpush1.msra.mxu0 0.0
      %3243 = vmatprep.subr.mxu0 0.0
      %3244 = vmatpush1.msra.mxu0 0.0
      %3245 = vmatprep.subr.mxu0 0.0
      %3246 = vmatpush1.msra.mxu0 0.0
      %3247 = vmatprep.subr.mxu0 0.0
      %3248 = vmatpush1.msra.mxu0 %v2983
      %3249 = vmatprep.subr.mxu0 0.0
      %3250 = vmatpush1.msra.mxu0 %v2982
      %3251 = vmatprep.subr.mxu0 0.0
      %3252 = vmatpush1.msra.mxu0 %v2981
      %3253 = vmatprep.subr.mxu0 0.0
      %3254 = vmatpush1.msra.mxu0 %v2980
      %3255 = vmatprep.subr.mxu0 0.0
      %3256 = vmatpush2.msra.mxu0 0.0
      %3257 = vmatprep.subr.mxu0 0.0
      %3258 = vmatpush2.msra.mxu0 0.0
      %3259 = vmatprep.subr.mxu0 0.0
      %3260 = vmatpush2.msra.mxu0 0.0
      %3261 = vmatprep.subr.mxu0 0.0
      %3262 = vmatpush2.msra.mxu0 0.0
      %3263 = vmatprep.subr.mxu0 0.0
      %3264 = vmatpush2.msra.mxu0 0.0
      %3265 = vmatprep.subr.mxu0 0.0
      %3266 = vmatpush2.msra.mxu0 0.0
      %3267 = vmatprep.subr.mxu0 0.0
      %3268 = vmatpush2.msra.mxu0 0.0
      %3269 = vmatprep.subr.mxu0 0.0
      %3270 = vmatpush2.msra.mxu0 0.0
      %3271 = vmatprep.subr.mxu0 0.0
      %3272 = vmatpush2.msra.mxu0 0.0
      %3273 = vmatprep.subr.mxu0 0.0
      %3274 = vmatpush2.msra.mxu0 0.0
      %3275 = vmatprep.subr.mxu0 0.0
      %3276 = vmatpush2.msra.mxu0 0.0
      %3277 = vmatprep.subr.mxu0 0.0
      %3278 = vmatpush2.msra.mxu0 0.0
      %3279 = vmatprep.subr.mxu0 0.0
      %3280 = vmatpush2.msra.mxu0 0.0
      %3281 = vmatprep.subr.mxu0 0.0
      %3282 = vmatpush2.msra.mxu0 0.0
      %3283 = vmatprep.subr.mxu0 0.0
      %3284 = vmatpush2.msra.mxu0 0.0
      %3285 = vmatprep.subr.mxu0 0.0
      %3286 = vmatpush2.msra.mxu0 0.0
      %3287 = vmatprep.mubr.f32.mxu0 0.0
      %3288 = vmatmul.mubr.f32.gmra.mxu0 %v2685
      %v3289 = vpop.f32.mrf.mxu0
      %v3290 = vadd.f32 %v3008, %v3289
      %v3291 = vpop.f32.mrf.mxu0
      %3292 = vdwg.mxu0
      %s3293 = scalar_lea.vmem %s4, 640
      %v3294 = vld [vmem:[%s3293] sm:$0xff]
      %v3295 = vld [vmem:[%s3293 + $0x8] sm:$0xff]
      %v3296 = vld [vmem:[%s3293 + $0x10] sm:$0xff]
      %v3297 = vld [vmem:[%s3293 + $0x18] sm:$0xff]
      %v3298 = vld [vmem:[%s3293 + $0x20] sm:$0xff]
      %v3299 = vld [vmem:[%s3293 + $0x28] sm:$0xff]
      %v3300 = vld [vmem:[%s3293 + $0x30] sm:$0xff]
      %v3301 = vld [vmem:[%s3293 + $0x38] sm:$0xff]
      %v3302 = vld [vmem:[%s3293 + $0x40] sm:$0xff]
      %v3303 = vld [vmem:[%s3293 + $0x48] sm:$0xff]
      %v3304 = vld [vmem:[%s3293 + $0x50] sm:$0xff]
      %v3305 = vld [vmem:[%s3293 + $0x58] sm:$0xff]
      %v3306 = vld [vmem:[%s3293 + $0x60] sm:$0xff]
      %v3307 = vld [vmem:[%s3293 + $0x68] sm:$0xff]
      %v3308 = vld [vmem:[%s3293 + $0x70] sm:$0xff]
      %v3309 = vld [vmem:[%s3293 + $0x78] sm:$0xff]
      %s3310 = scalar_lea.vmem %s5, 20
      %v3311 = vld [vmem:[%s3310] sm:$0x1]
      %v3312 = vld [vmem:[%s3310 + $0x1] sm:$0x1]
      %v3313 = vld [vmem:[%s3310 + $0x2] sm:$0x1]
      %v3314 = vld [vmem:[%s3310 + $0x3] sm:$0x1]
      %v3319 = vlaneseq
      %v3320 = vshrl.u32 %v3319, 7
      %v3321 = vsub.s32 0, %v3320
      %v3322 = vrot.slane %v3311, %v3321
      %v3323 = vlaneseq
      %v3324 = vshrl.u32 %v3323, 7
      %v3325 = vsub.s32 0, %v3324
      %v3326 = vrot.slane %v3312, %v3325
      %v3327 = vlaneseq
      %v3328 = vshrl.u32 %v3327, 7
      %v3329 = vsub.s32 0, %v3328
      %v3330 = vrot.slane %v3313, %v3329
      %v3331 = vlaneseq
      %v3332 = vshrl.u32 %v3331, 7
      %v3333 = vsub.s32 0, %v3332
      %v3334 = vrot.slane %v3314, %v3333
      %3339 = vmatprep.subr.mxu0 0.0
      %3340 = vmatpush1.msra.mxu0 0.0
      %3341 = vmatprep.subr.mxu0 0.0
      %3342 = vmatpush1.msra.mxu0 0.0
      %3343 = vmatprep.subr.mxu0 0.0
      %3344 = vmatpush1.msra.mxu0 0.0
      %3345 = vmatprep.subr.mxu0 0.0
      %3346 = vmatpush1.msra.mxu0 0.0
      %3347 = vmatprep.subr.mxu0 0.0
      %3348 = vmatpush1.msra.mxu0 0.0
      %3349 = vmatprep.subr.mxu0 0.0
      %3350 = vmatpush1.msra.mxu0 0.0
      %3351 = vmatprep.subr.mxu0 0.0
      %3352 = vmatpush1.msra.mxu0 0.0
      %3353 = vmatprep.subr.mxu0 0.0
      %3354 = vmatpush1.msra.mxu0 0.0
      %3355 = vmatprep.subr.mxu0 0.0
      %3356 = vmatpush1.msra.mxu0 0.0
      %3357 = vmatprep.subr.mxu0 0.0
      %3358 = vmatpush1.msra.mxu0 0.0
      %3359 = vmatprep.subr.mxu0 0.0
      %3360 = vmatpush1.msra.mxu0 0.0
      %3361 = vmatprep.subr.mxu0 0.0
      %3362 = vmatpush1.msra.mxu0 0.0
      %3363 = vmatprep.subr.mxu0 0.0
      %3364 = vmatpush1.msra.mxu0 %v3297
      %3365 = vmatprep.subr.mxu0 0.0
      %3366 = vmatpush1.msra.mxu0 %v3296
      %3367 = vmatprep.subr.mxu0 0.0
      %3368 = vmatpush1.msra.mxu0 %v3295
      %3369 = vmatprep.subr.mxu0 0.0
      %3370 = vmatpush1.msra.mxu0 %v3294
      %3371 = vmatprep.subr.mxu0 0.0
      %3372 = vmatpush2.msra.mxu0 0.0
      %3373 = vmatprep.subr.mxu0 0.0
      %3374 = vmatpush2.msra.mxu0 0.0
      %3375 = vmatprep.subr.mxu0 0.0
      %3376 = vmatpush2.msra.mxu0 0.0
      %3377 = vmatprep.subr.mxu0 0.0
      %3378 = vmatpush2.msra.mxu0 0.0
      %3379 = vmatprep.subr.mxu0 0.0
      %3380 = vmatpush2.msra.mxu0 0.0
      %3381 = vmatprep.subr.mxu0 0.0
      %3382 = vmatpush2.msra.mxu0 0.0
      %3383 = vmatprep.subr.mxu0 0.0
      %3384 = vmatpush2.msra.mxu0 0.0
      %3385 = vmatprep.subr.mxu0 0.0
      %3386 = vmatpush2.msra.mxu0 0.0
      %3387 = vmatprep.subr.mxu0 0.0
      %3388 = vmatpush2.msra.mxu0 0.0
      %3389 = vmatprep.subr.mxu0 0.0
      %3390 = vmatpush2.msra.mxu0 0.0
      %3391 = vmatprep.subr.mxu0 0.0
      %3392 = vmatpush2.msra.mxu0 0.0
      %3393 = vmatprep.subr.mxu0 0.0
      %3394 = vmatpush2.msra.mxu0 0.0
      %3395 = vmatprep.subr.mxu0 0.0
      %3396 = vmatpush2.msra.mxu0 0.0
      %3397 = vmatprep.subr.mxu0 0.0
      %3398 = vmatpush2.msra.mxu0 0.0
      %3399 = vmatprep.subr.mxu0 0.0
      %3400 = vmatpush2.msra.mxu0 0.0
      %3401 = vmatprep.subr.mxu0 0.0
      %3402 = vmatpush2.msra.mxu0 0.0
      %3403 = vmatprep.mubr.f32.mxu0 0.0
      %3404 = vmatmul.mubr.f32.gmra.mxu0 %v2685
      %v3405 = vpop.f32.mrf.mxu0
      %v3406 = vadd.f32 %v3322, %v3405
      %v3407 = vpop.f32.mrf.mxu0
      %3408 = vdwg.mxu0
      %3409 = vmatprep.subr.mxu0 0.0
      %3410 = vmatpush1.msra.mxu0 0.0
      %3411 = vmatprep.subr.mxu0 0.0
      %3412 = vmatpush1.msra.mxu0 0.0
      %3413 = vmatprep.subr.mxu0 0.0
      %3414 = vmatpush1.msra.mxu0 0.0
      %3415 = vmatprep.subr.mxu0 0.0
      %3416 = vmatpush1.msra.mxu0 0.0
      %3417 = vmatprep.subr.mxu0 0.0
      %3418 = vmatpush1.msra.mxu0 0.0
      %3419 = vmatprep.subr.mxu0 0.0
      %3420 = vmatpush1.msra.mxu0 0.0
      %3421 = vmatprep.subr.mxu0 0.0
      %3422 = vmatpush1.msra.mxu0 0.0
      %3423 = vmatprep.subr.mxu0 0.0
      %3424 = vmatpush1.msra.mxu0 0.0
      %3425 = vmatprep.subr.mxu0 0.0
      %3426 = vmatpush1.msra.mxu0 0.0
      %3427 = vmatprep.subr.mxu0 0.0
      %3428 = vmatpush1.msra.mxu0 0.0
      %3429 = vmatprep.subr.mxu0 0.0
      %3430 = vmatpush1.msra.mxu0 0.0
      %3431 = vmatprep.subr.mxu0 0.0
      %3432 = vmatpush1.msra.mxu0 0.0
      %3433 = vmatprep.subr.mxu0 0.0
      %3434 = vmatpush1.msra.mxu0 %v3301
      %3435 = vmatprep.subr.mxu0 0.0
      %3436 = vmatpush1.msra.mxu0 %v3300
      %3437 = vmatprep.subr.mxu0 0.0
      %3438 = vmatpush1.msra.mxu0 %v3299
      %3439 = vmatprep.subr.mxu0 0.0
      %3440 = vmatpush1.msra.mxu0 %v3298
      %3441 = vmatprep.subr.mxu0 0.0
      %3442 = vmatpush2.msra.mxu0 0.0
      %3443 = vmatprep.subr.mxu0 0.0
      %3444 = vmatpush2.msra.mxu0 0.0
      %3445 = vmatprep.subr.mxu0 0.0
      %3446 = vmatpush2.msra.mxu0 0.0
      %3447 = vmatprep.subr.mxu0 0.0
      %3448 = vmatpush2.msra.mxu0 0.0
      %3449 = vmatprep.subr.mxu0 0.0
      %3450 = vmatpush2.msra.mxu0 0.0
      %3451 = vmatprep.subr.mxu0 0.0
      %3452 = vmatpush2.msra.mxu0 0.0
      %3453 = vmatprep.subr.mxu0 0.0
      %3454 = vmatpush2.msra.mxu0 0.0
      %3455 = vmatprep.subr.mxu0 0.0
      %3456 = vmatpush2.msra.mxu0 0.0
      %3457 = vmatprep.subr.mxu0 0.0
      %3458 = vmatpush2.msra.mxu0 0.0
      %3459 = vmatprep.subr.mxu0 0.0
      %3460 = vmatpush2.msra.mxu0 0.0
      %3461 = vmatprep.subr.mxu0 0.0
      %3462 = vmatpush2.msra.mxu0 0.0
      %3463 = vmatprep.subr.mxu0 0.0
      %3464 = vmatpush2.msra.mxu0 0.0
      %3465 = vmatprep.subr.mxu0 0.0
      %3466 = vmatpush2.msra.mxu0 0.0
      %3467 = vmatprep.subr.mxu0 0.0
      %3468 = vmatpush2.msra.mxu0 0.0
      %3469 = vmatprep.subr.mxu0 0.0
      %3470 = vmatpush2.msra.mxu0 0.0
      %3471 = vmatprep.subr.mxu0 0.0
      %3472 = vmatpush2.msra.mxu0 0.0
      %3473 = vmatprep.mubr.f32.mxu0 0.0
      %3474 = vmatmul.mubr.f32.gmra.mxu0 %v2685
      %v3475 = vpop.f32.mrf.mxu0
      %v3476 = vadd.f32 %v3326, %v3475
      %v3477 = vpop.f32.mrf.mxu0
      %3478 = vdwg.mxu0
      %3479 = vmatprep.subr.mxu0 0.0
      %3480 = vmatpush1.msra.mxu0 0.0
      %3481 = vmatprep.subr.mxu0 0.0
      %3482 = vmatpush1.msra.mxu0 0.0
      %3483 = vmatprep.subr.mxu0 0.0
      %3484 = vmatpush1.msra.mxu0 0.0
      %3485 = vmatprep.subr.mxu0 0.0
      %3486 = vmatpush1.msra.mxu0 0.0
      %3487 = vmatprep.subr.mxu0 0.0
      %3488 = vmatpush1.msra.mxu0 0.0
      %3489 = vmatprep.subr.mxu0 0.0
      %3490 = vmatpush1.msra.mxu0 0.0
      %3491 = vmatprep.subr.mxu0 0.0
      %3492 = vmatpush1.msra.mxu0 0.0
      %3493 = vmatprep.subr.mxu0 0.0
      %3494 = vmatpush1.msra.mxu0 0.0
      %3495 = vmatprep.subr.mxu0 0.0
      %3496 = vmatpush1.msra.mxu0 0.0
      %3497 = vmatprep.subr.mxu0 0.0
      %3498 = vmatpush1.msra.mxu0 0.0
      %3499 = vmatprep.subr.mxu0 0.0
      %3500 = vmatpush1.msra.mxu0 0.0
      %3501 = vmatprep.subr.mxu0 0.0
      %3502 = vmatpush1.msra.mxu0 0.0
      %3503 = vmatprep.subr.mxu0 0.0
      %3504 = vmatpush1.msra.mxu0 %v3305
      %3505 = vmatprep.subr.mxu0 0.0
      %3506 = vmatpush1.msra.mxu0 %v3304
      %3507 = vmatprep.subr.mxu0 0.0
      %3508 = vmatpush1.msra.mxu0 %v3303
      %3509 = vmatprep.subr.mxu0 0.0
      %3510 = vmatpush1.msra.mxu0 %v3302
      %3511 = vmatprep.subr.mxu0 0.0
      %3512 = vmatpush2.msra.mxu0 0.0
      %3513 = vmatprep.subr.mxu0 0.0
      %3514 = vmatpush2.msra.mxu0 0.0
      %3515 = vmatprep.subr.mxu0 0.0
      %3516 = vmatpush2.msra.mxu0 0.0
      %3517 = vmatprep.subr.mxu0 0.0
      %3518 = vmatpush2.msra.mxu0 0.0
      %3519 = vmatprep.subr.mxu0 0.0
      %3520 = vmatpush2.msra.mxu0 0.0
      %3521 = vmatprep.subr.mxu0 0.0
      %3522 = vmatpush2.msra.mxu0 0.0
      %3523 = vmatprep.subr.mxu0 0.0
      %3524 = vmatpush2.msra.mxu0 0.0
      %3525 = vmatprep.subr.mxu0 0.0
      %3526 = vmatpush2.msra.mxu0 0.0
      %3527 = vmatprep.subr.mxu0 0.0
      %3528 = vmatpush2.msra.mxu0 0.0
      %3529 = vmatprep.subr.mxu0 0.0
      %3530 = vmatpush2.msra.mxu0 0.0
      %3531 = vmatprep.subr.mxu0 0.0
      %3532 = vmatpush2.msra.mxu0 0.0
      %3533 = vmatprep.subr.mxu0 0.0
      %3534 = vmatpush2.msra.mxu0 0.0
      %3535 = vmatprep.subr.mxu0 0.0
      %3536 = vmatpush2.msra.mxu0 0.0
      %3537 = vmatprep.subr.mxu0 0.0
      %3538 = vmatpush2.msra.mxu0 0.0
      %3539 = vmatprep.subr.mxu0 0.0
      %3540 = vmatpush2.msra.mxu0 0.0
      %3541 = vmatprep.subr.mxu0 0.0
      %3542 = vmatpush2.msra.mxu0 0.0
      %3543 = vmatprep.mubr.f32.mxu0 0.0
      %3544 = vmatmul.mubr.f32.gmra.mxu0 %v2685
      %v3545 = vpop.f32.mrf.mxu0
      %v3546 = vadd.f32 %v3330, %v3545
      %v3547 = vpop.f32.mrf.mxu0
      %3548 = vdwg.mxu0
      %3549 = vmatprep.subr.mxu0 0.0
      %3550 = vmatpush1.msra.mxu0 0.0
      %3551 = vmatprep.subr.mxu0 0.0
      %3552 = vmatpush1.msra.mxu0 0.0
      %3553 = vmatprep.subr.mxu0 0.0
      %3554 = vmatpush1.msra.mxu0 0.0
      %3555 = vmatprep.subr.mxu0 0.0
      %3556 = vmatpush1.msra.mxu0 0.0
      %3557 = vmatprep.subr.mxu0 0.0
      %3558 = vmatpush1.msra.mxu0 0.0
      %3559 = vmatprep.subr.mxu0 0.0
      %3560 = vmatpush1.msra.mxu0 0.0
      %3561 = vmatprep.subr.mxu0 0.0
      %3562 = vmatpush1.msra.mxu0 0.0
      %3563 = vmatprep.subr.mxu0 0.0
      %3564 = vmatpush1.msra.mxu0 0.0
      %3565 = vmatprep.subr.mxu0 0.0
      %3566 = vmatpush1.msra.mxu0 0.0
      %3567 = vmatprep.subr.mxu0 0.0
      %3568 = vmatpush1.msra.mxu0 0.0
      %3569 = vmatprep.subr.mxu0 0.0
      %3570 = vmatpush1.msra.mxu0 0.0
      %3571 = vmatprep.subr.mxu0 0.0
      %3572 = vmatpush1.msra.mxu0 0.0
      %3573 = vmatprep.subr.mxu0 0.0
      %3574 = vmatpush1.msra.mxu0 %v3309
      %3575 = vmatprep.subr.mxu0 0.0
      %3576 = vmatpush1.msra.mxu0 %v3308
      %3577 = vmatprep.subr.mxu0 0.0
      %3578 = vmatpush1.msra.mxu0 %v3307
      %3579 = vmatprep.subr.mxu0 0.0
      %3580 = vmatpush1.msra.mxu0 %v3306
      %3581 = vmatprep.subr.mxu0 0.0
      %3582 = vmatpush2.msra.mxu0 0.0
      %3583 = vmatprep.subr.mxu0 0.0
      %3584 = vmatpush2.msra.mxu0 0.0
      %3585 = vmatprep.subr.mxu0 0.0
      %3586 = vmatpush2.msra.mxu0 0.0
      %3587 = vmatprep.subr.mxu0 0.0
      %3588 = vmatpush2.msra.mxu0 0.0
      %3589 = vmatprep.subr.mxu0 0.0
      %3590 = vmatpush2.msra.mxu0 0.0
      %3591 = vmatprep.subr.mxu0 0.0
      %3592 = vmatpush2.msra.mxu0 0.0
      %3593 = vmatprep.subr.mxu0 0.0
      %3594 = vmatpush2.msra.mxu0 0.0
      %3595 = vmatprep.subr.mxu0 0.0
      %3596 = vmatpush2.msra.mxu0 0.0
      %3597 = vmatprep.subr.mxu0 0.0
      %3598 = vmatpush2.msra.mxu0 0.0
      %3599 = vmatprep.subr.mxu0 0.0
      %3600 = vmatpush2.msra.mxu0 0.0
      %3601 = vmatprep.subr.mxu0 0.0
      %3602 = vmatpush2.msra.mxu0 0.0
      %3603 = vmatprep.subr.mxu0 0.0
      %3604 = vmatpush2.msra.mxu0 0.0
      %3605 = vmatprep.subr.mxu0 0.0
      %3606 = vmatpush2.msra.mxu0 0.0
      %3607 = vmatprep.subr.mxu0 0.0
      %3608 = vmatpush2.msra.mxu0 0.0
      %3609 = vmatprep.subr.mxu0 0.0
      %3610 = vmatpush2.msra.mxu0 0.0
      %3611 = vmatprep.subr.mxu0 0.0
      %3612 = vmatpush2.msra.mxu0 0.0
      %3613 = vmatprep.mubr.f32.mxu0 0.0
      %3614 = vmatmul.mubr.f32.gmra.mxu0 %v2685
      %v3615 = vpop.f32.mrf.mxu0
      %v3616 = vadd.f32 %v3334, %v3615
      %v3617 = vpop.f32.mrf.mxu0
      %3618 = vdwg.mxu0
      %v3619 = vmul.f32 %v2754, 0.35355338
      %v3620 = vmul.f32 %v2824, 0.35355338
      %v3621 = vmul.f32 %v2894, 0.35355338
      %v3622 = vmul.f32 %v2964, 0.35355338
      %v3624 = vsel %vm1446, %v3619, 0
      %v3627 = vsel %vm1446, %v3080, 0
      %3629 = vmatprep.subr.mxu0 0.0
      %3630 = vmatpush1.xpose.msra.mxu0 0.0
      %3631 = vmatprep.subr.mxu0 0.0
      %3632 = vmatpush1.xpose.msra.mxu0 0.0
      %3633 = vmatprep.subr.mxu0 0.0
      %3634 = vmatpush1.xpose.msra.mxu0 0.0
      %3635 = vmatprep.subr.mxu0 0.0
      %3636 = vmatpush1.xpose.msra.mxu0 0.0
      %3637 = vmatprep.subr.mxu0 0.0
      %3638 = vmatpush1.xpose.msra.mxu0 0.0
      %3639 = vmatprep.subr.mxu0 0.0
      %3640 = vmatpush1.xpose.msra.mxu0 0.0
      %3641 = vmatprep.subr.mxu0 0.0
      %3642 = vmatpush1.xpose.msra.mxu0 0.0
      %3643 = vmatprep.subr.mxu0 0.0
      %3644 = vmatpush1.xpose.msra.mxu0 0.0
      %3645 = vmatprep.subr.mxu0 0.0
      %3646 = vmatpush1.xpose.msra.mxu0 0.0
      %3647 = vmatprep.subr.mxu0 0.0
      %3648 = vmatpush1.xpose.msra.mxu0 0.0
      %3649 = vmatprep.subr.mxu0 0.0
      %3650 = vmatpush1.xpose.msra.mxu0 0.0
      %3651 = vmatprep.subr.mxu0 0.0
      %3652 = vmatpush1.xpose.msra.mxu0 0.0
      %3653 = vmatprep.subr.mxu0 0.0
      %3654 = vmatpush1.xpose.msra.mxu0 0.0
      %3655 = vmatprep.subr.mxu0 0.0
      %3656 = vmatpush1.xpose.msra.mxu0 0.0
      %3657 = vmatprep.subr.mxu0 0.0
      %3658 = vmatpush1.xpose.msra.mxu0 0.0
      %3659 = vmatprep.subr.mxu0 0.0
      %3660 = vmatpush1.xpose.msra.mxu0 %v3627
      %3661 = vmatprep.subr.mxu0 0.0
      %3662 = vmatpush2.xpose.msra.mxu0 0.0
      %3663 = vmatprep.subr.mxu0 0.0
      %3664 = vmatpush2.xpose.msra.mxu0 0.0
      %3665 = vmatprep.subr.mxu0 0.0
      %3666 = vmatpush2.xpose.msra.mxu0 0.0
      %3667 = vmatprep.subr.mxu0 0.0
      %3668 = vmatpush2.xpose.msra.mxu0 0.0
      %3669 = vmatprep.subr.mxu0 0.0
      %3670 = vmatpush2.xpose.msra.mxu0 0.0
      %3671 = vmatprep.subr.mxu0 0.0
      %3672 = vmatpush2.xpose.msra.mxu0 0.0
      %3673 = vmatprep.subr.mxu0 0.0
      %3674 = vmatpush2.xpose.msra.mxu0 0.0
      %3675 = vmatprep.subr.mxu0 0.0
      %3676 = vmatpush2.xpose.msra.mxu0 0.0
      %3677 = vmatprep.subr.mxu0 0.0
      %3678 = vmatpush2.xpose.msra.mxu0 0.0
      %3679 = vmatprep.subr.mxu0 0.0
      %3680 = vmatpush2.xpose.msra.mxu0 0.0
      %3681 = vmatprep.subr.mxu0 0.0
      %3682 = vmatpush2.xpose.msra.mxu0 0.0
      %3683 = vmatprep.subr.mxu0 0.0
      %3684 = vmatpush2.xpose.msra.mxu0 0.0
      %3685 = vmatprep.subr.mxu0 0.0
      %3686 = vmatpush2.xpose.msra.mxu0 0.0
      %3687 = vmatprep.subr.mxu0 0.0
      %3688 = vmatpush2.xpose.msra.mxu0 0.0
      %3689 = vmatprep.subr.mxu0 0.0
      %3690 = vmatpush2.xpose.msra.mxu0 0.0
      %3691 = vmatprep.subr.mxu0 0.0
      %3692 = vmatpush2.xpose.msra.mxu0 0.0
      %3693 = vmatprep.mubr.f32.mxu0 0.0
      %3694 = vmatmul.mubr.f32.gmra.mxu0 %v3624
      %v3695 = vpop.f32.mrf.mxu0
      %v3696 = vadd.f32 0.0, %v3695
      %v3697 = vpop.f32.mrf.mxu0
      %3698 = vdwg.mxu0
      %v3700 = vsel %vm1446, %v3620, 0
      %v3703 = vsel %vm1446, %v3150, 0
      %3705 = vmatprep.subr.mxu0 0.0
      %3706 = vmatpush1.xpose.msra.mxu0 0.0
      %3707 = vmatprep.subr.mxu0 0.0
      %3708 = vmatpush1.xpose.msra.mxu0 0.0
      %3709 = vmatprep.subr.mxu0 0.0
      %3710 = vmatpush1.xpose.msra.mxu0 0.0
      %3711 = vmatprep.subr.mxu0 0.0
      %3712 = vmatpush1.xpose.msra.mxu0 0.0
      %3713 = vmatprep.subr.mxu0 0.0
      %3714 = vmatpush1.xpose.msra.mxu0 0.0
      %3715 = vmatprep.subr.mxu0 0.0
      %3716 = vmatpush1.xpose.msra.mxu0 0.0
      %3717 = vmatprep.subr.mxu0 0.0
      %3718 = vmatpush1.xpose.msra.mxu0 0.0
      %3719 = vmatprep.subr.mxu0 0.0
      %3720 = vmatpush1.xpose.msra.mxu0 0.0
      %3721 = vmatprep.subr.mxu0 0.0
      %3722 = vmatpush1.xpose.msra.mxu0 0.0
      %3723 = vmatprep.subr.mxu0 0.0
      %3724 = vmatpush1.xpose.msra.mxu0 0.0
      %3725 = vmatprep.subr.mxu0 0.0
      %3726 = vmatpush1.xpose.msra.mxu0 0.0
      %3727 = vmatprep.subr.mxu0 0.0
      %3728 = vmatpush1.xpose.msra.mxu0 0.0
      %3729 = vmatprep.subr.mxu0 0.0
      %3730 = vmatpush1.xpose.msra.mxu0 0.0
      %3731 = vmatprep.subr.mxu0 0.0
      %3732 = vmatpush1.xpose.msra.mxu0 0.0
      %3733 = vmatprep.subr.mxu0 0.0
      %3734 = vmatpush1.xpose.msra.mxu0 0.0
      %3735 = vmatprep.subr.mxu0 0.0
      %3736 = vmatpush1.xpose.msra.mxu0 %v3703
      %3737 = vmatprep.subr.mxu0 0.0
      %3738 = vmatpush2.xpose.msra.mxu0 0.0
      %3739 = vmatprep.subr.mxu0 0.0
      %3740 = vmatpush2.xpose.msra.mxu0 0.0
      %3741 = vmatprep.subr.mxu0 0.0
      %3742 = vmatpush2.xpose.msra.mxu0 0.0
      %3743 = vmatprep.subr.mxu0 0.0
      %3744 = vmatpush2.xpose.msra.mxu0 0.0
      %3745 = vmatprep.subr.mxu0 0.0
      %3746 = vmatpush2.xpose.msra.mxu0 0.0
      %3747 = vmatprep.subr.mxu0 0.0
      %3748 = vmatpush2.xpose.msra.mxu0 0.0
      %3749 = vmatprep.subr.mxu0 0.0
      %3750 = vmatpush2.xpose.msra.mxu0 0.0
      %3751 = vmatprep.subr.mxu0 0.0
      %3752 = vmatpush2.xpose.msra.mxu0 0.0
      %3753 = vmatprep.subr.mxu0 0.0
      %3754 = vmatpush2.xpose.msra.mxu0 0.0
      %3755 = vmatprep.subr.mxu0 0.0
      %3756 = vmatpush2.xpose.msra.mxu0 0.0
      %3757 = vmatprep.subr.mxu0 0.0
      %3758 = vmatpush2.xpose.msra.mxu0 0.0
      %3759 = vmatprep.subr.mxu0 0.0
      %3760 = vmatpush2.xpose.msra.mxu0 0.0
      %3761 = vmatprep.subr.mxu0 0.0
      %3762 = vmatpush2.xpose.msra.mxu0 0.0
      %3763 = vmatprep.subr.mxu0 0.0
      %3764 = vmatpush2.xpose.msra.mxu0 0.0
      %3765 = vmatprep.subr.mxu0 0.0
      %3766 = vmatpush2.xpose.msra.mxu0 0.0
      %3767 = vmatprep.subr.mxu0 0.0
      %3768 = vmatpush2.xpose.msra.mxu0 0.0
      %3769 = vmatprep.mubr.f32.mxu0 0.0
      %3770 = vmatmul.mubr.f32.gmra.mxu0 %v3700
      %v3771 = vpop.f32.mrf.mxu0
      %v3772 = vadd.f32 0.0, %v3771
      %v3773 = vpop.f32.mrf.mxu0
      %3774 = vdwg.mxu0
      %v3776 = vsel %vm1446, %v3621, 0
      %v3779 = vsel %vm1446, %v3220, 0
      %3781 = vmatprep.subr.mxu0 0.0
      %3782 = vmatpush1.xpose.msra.mxu0 0.0
      %3783 = vmatprep.subr.mxu0 0.0
      %3784 = vmatpush1.xpose.msra.mxu0 0.0
      %3785 = vmatprep.subr.mxu0 0.0
      %3786 = vmatpush1.xpose.msra.mxu0 0.0
      %3787 = vmatprep.subr.mxu0 0.0
      %3788 = vmatpush1.xpose.msra.mxu0 0.0
      %3789 = vmatprep.subr.mxu0 0.0
      %3790 = vmatpush1.xpose.msra.mxu0 0.0
      %3791 = vmatprep.subr.mxu0 0.0
      %3792 = vmatpush1.xpose.msra.mxu0 0.0
      %3793 = vmatprep.subr.mxu0 0.0
      %3794 = vmatpush1.xpose.msra.mxu0 0.0
      %3795 = vmatprep.subr.mxu0 0.0
      %3796 = vmatpush1.xpose.msra.mxu0 0.0
      %3797 = vmatprep.subr.mxu0 0.0
      %3798 = vmatpush1.xpose.msra.mxu0 0.0
      %3799 = vmatprep.subr.mxu0 0.0
      %3800 = vmatpush1.xpose.msra.mxu0 0.0
      %3801 = vmatprep.subr.mxu0 0.0
      %3802 = vmatpush1.xpose.msra.mxu0 0.0
      %3803 = vmatprep.subr.mxu0 0.0
      %3804 = vmatpush1.xpose.msra.mxu0 0.0
      %3805 = vmatprep.subr.mxu0 0.0
      %3806 = vmatpush1.xpose.msra.mxu0 0.0
      %3807 = vmatprep.subr.mxu0 0.0
      %3808 = vmatpush1.xpose.msra.mxu0 0.0
      %3809 = vmatprep.subr.mxu0 0.0
      %3810 = vmatpush1.xpose.msra.mxu0 0.0
      %3811 = vmatprep.subr.mxu0 0.0
      %3812 = vmatpush1.xpose.msra.mxu0 %v3779
      %3813 = vmatprep.subr.mxu0 0.0
      %3814 = vmatpush2.xpose.msra.mxu0 0.0
      %3815 = vmatprep.subr.mxu0 0.0
      %3816 = vmatpush2.xpose.msra.mxu0 0.0
      %3817 = vmatprep.subr.mxu0 0.0
      %3818 = vmatpush2.xpose.msra.mxu0 0.0
      %3819 = vmatprep.subr.mxu0 0.0
      %3820 = vmatpush2.xpose.msra.mxu0 0.0
      %3821 = vmatprep.subr.mxu0 0.0
      %3822 = vmatpush2.xpose.msra.mxu0 0.0
      %3823 = vmatprep.subr.mxu0 0.0
      %3824 = vmatpush2.xpose.msra.mxu0 0.0
      %3825 = vmatprep.subr.mxu0 0.0
      %3826 = vmatpush2.xpose.msra.mxu0 0.0
      %3827 = vmatprep.subr.mxu0 0.0
      %3828 = vmatpush2.xpose.msra.mxu0 0.0
      %3829 = vmatprep.subr.mxu0 0.0
      %3830 = vmatpush2.xpose.msra.mxu0 0.0
      %3831 = vmatprep.subr.mxu0 0.0
      %3832 = vmatpush2.xpose.msra.mxu0 0.0
      %3833 = vmatprep.subr.mxu0 0.0
      %3834 = vmatpush2.xpose.msra.mxu0 0.0
      %3835 = vmatprep.subr.mxu0 0.0
      %3836 = vmatpush2.xpose.msra.mxu0 0.0
      %3837 = vmatprep.subr.mxu0 0.0
      %3838 = vmatpush2.xpose.msra.mxu0 0.0
      %3839 = vmatprep.subr.mxu0 0.0
      %3840 = vmatpush2.xpose.msra.mxu0 0.0
      %3841 = vmatprep.subr.mxu0 0.0
      %3842 = vmatpush2.xpose.msra.mxu0 0.0
      %3843 = vmatprep.subr.mxu0 0.0
      %3844 = vmatpush2.xpose.msra.mxu0 0.0
      %3845 = vmatprep.mubr.f32.mxu0 0.0
      %3846 = vmatmul.mubr.f32.gmra.mxu0 %v3776
      %v3847 = vpop.f32.mrf.mxu0
      %v3848 = vadd.f32 0.0, %v3847
      %v3849 = vpop.f32.mrf.mxu0
      %3850 = vdwg.mxu0
      %v3852 = vsel %vm1446, %v3622, 0
      %v3855 = vsel %vm1446, %v3290, 0
      %3857 = vmatprep.subr.mxu0 0.0
      %3858 = vmatpush1.xpose.msra.mxu0 0.0
      %3859 = vmatprep.subr.mxu0 0.0
      %3860 = vmatpush1.xpose.msra.mxu0 0.0
      %3861 = vmatprep.subr.mxu0 0.0
      %3862 = vmatpush1.xpose.msra.mxu0 0.0
      %3863 = vmatprep.subr.mxu0 0.0
      %3864 = vmatpush1.xpose.msra.mxu0 0.0
      %3865 = vmatprep.subr.mxu0 0.0
      %3866 = vmatpush1.xpose.msra.mxu0 0.0
      %3867 = vmatprep.subr.mxu0 0.0
      %3868 = vmatpush1.xpose.msra.mxu0 0.0
      %3869 = vmatprep.subr.mxu0 0.0
      %3870 = vmatpush1.xpose.msra.mxu0 0.0
      %3871 = vmatprep.subr.mxu0 0.0
      %3872 = vmatpush1.xpose.msra.mxu0 0.0
      %3873 = vmatprep.subr.mxu0 0.0
      %3874 = vmatpush1.xpose.msra.mxu0 0.0
      %3875 = vmatprep.subr.mxu0 0.0
      %3876 = vmatpush1.xpose.msra.mxu0 0.0
      %3877 = vmatprep.subr.mxu0 0.0
      %3878 = vmatpush1.xpose.msra.mxu0 0.0
      %3879 = vmatprep.subr.mxu0 0.0
      %3880 = vmatpush1.xpose.msra.mxu0 0.0
      %3881 = vmatprep.subr.mxu0 0.0
      %3882 = vmatpush1.xpose.msra.mxu0 0.0
      %3883 = vmatprep.subr.mxu0 0.0
      %3884 = vmatpush1.xpose.msra.mxu0 0.0
      %3885 = vmatprep.subr.mxu0 0.0
      %3886 = vmatpush1.xpose.msra.mxu0 0.0
      %3887 = vmatprep.subr.mxu0 0.0
      %3888 = vmatpush1.xpose.msra.mxu0 %v3855
      %3889 = vmatprep.subr.mxu0 0.0
      %3890 = vmatpush2.xpose.msra.mxu0 0.0
      %3891 = vmatprep.subr.mxu0 0.0
      %3892 = vmatpush2.xpose.msra.mxu0 0.0
      %3893 = vmatprep.subr.mxu0 0.0
      %3894 = vmatpush2.xpose.msra.mxu0 0.0
      %3895 = vmatprep.subr.mxu0 0.0
      %3896 = vmatpush2.xpose.msra.mxu0 0.0
      %3897 = vmatprep.subr.mxu0 0.0
      %3898 = vmatpush2.xpose.msra.mxu0 0.0
      %3899 = vmatprep.subr.mxu0 0.0
      %3900 = vmatpush2.xpose.msra.mxu0 0.0
      %3901 = vmatprep.subr.mxu0 0.0
      %3902 = vmatpush2.xpose.msra.mxu0 0.0
      %3903 = vmatprep.subr.mxu0 0.0
      %3904 = vmatpush2.xpose.msra.mxu0 0.0
      %3905 = vmatprep.subr.mxu0 0.0
      %3906 = vmatpush2.xpose.msra.mxu0 0.0
      %3907 = vmatprep.subr.mxu0 0.0
      %3908 = vmatpush2.xpose.msra.mxu0 0.0
      %3909 = vmatprep.subr.mxu0 0.0
      %3910 = vmatpush2.xpose.msra.mxu0 0.0
      %3911 = vmatprep.subr.mxu0 0.0
      %3912 = vmatpush2.xpose.msra.mxu0 0.0
      %3913 = vmatprep.subr.mxu0 0.0
      %3914 = vmatpush2.xpose.msra.mxu0 0.0
      %3915 = vmatprep.subr.mxu0 0.0
      %3916 = vmatpush2.xpose.msra.mxu0 0.0
      %3917 = vmatprep.subr.mxu0 0.0
      %3918 = vmatpush2.xpose.msra.mxu0 0.0
      %3919 = vmatprep.subr.mxu0 0.0
      %3920 = vmatpush2.xpose.msra.mxu0 0.0
      %3921 = vmatprep.mubr.f32.mxu0 0.0
      %3922 = vmatmul.mubr.f32.gmra.mxu0 %v3852
      %v3923 = vpop.f32.mrf.mxu0
      %v3924 = vadd.f32 0.0, %v3923
      %v3925 = vpop.f32.mrf.mxu0
      %3926 = vdwg.mxu0
      %v3927 = vsel %vm1446, %v3696, -inf
      %3928 = vmax.xlane.f32.xlu0 %v3927
      %v3929 = vpop.xlane.xlu0 %3928
      %v3930 = vsel %vm1446, %v3772, -inf
      %3931 = vmax.xlane.f32.xlu0 %v3930
      %v3932 = vpop.xlane.xlu0 %3931
      %v3933 = vsel %vm1446, %v3848, -inf
      %3934 = vmax.xlane.f32.xlu0 %v3933
      %v3935 = vpop.xlane.xlu0 %3934
      %v3936 = vsel %vm1446, %v3924, -inf
      %3937 = vmax.xlane.f32.xlu0 %v3936
      %v3938 = vpop.xlane.xlu0 %3937
      %v3939 = vsub.f32 %v3696, %v3929
      %v3940 = vsub.f32 %v3772, %v3932
      %v3941 = vsub.f32 %v3848, %v3935
      %v3942 = vsub.f32 %v3924, %v3938
      %v3943 = vmul.f32 %v3939, 1.442695
      %v3944 = vpow.pop %v3943
      %v3945 = vmul.f32 %v3940, 1.442695
      %v3946 = vpow.pop %v3945
      %v3947 = vmul.f32 %v3941, 1.442695
      %v3948 = vpow.pop %v3947
      %v3949 = vmul.f32 %v3942, 1.442695
      %v3950 = vpow.pop %v3949
      %v3951 = vsel %vm1446, %v3944, 0.0
      %3952 = vadd.xlane.f32.xlu0 %v3951
      %v3953 = vpop.xlane.xlu0 %3952
      %v3954 = vsel %vm1446, %v3946, 0.0
      %3955 = vadd.xlane.f32.xlu0 %v3954
      %v3956 = vpop.xlane.xlu0 %3955
      %v3957 = vsel %vm1446, %v3948, 0.0
      %3958 = vadd.xlane.f32.xlu0 %v3957
      %v3959 = vpop.xlane.xlu0 %3958
      %v3960 = vsel %vm1446, %v3950, 0.0
      %3961 = vadd.xlane.f32.xlu0 %v3960
      %v3962 = vpop.xlane.xlu0 %3961
      %v3963 = vrcp.pop %v3953
      %v3964 = vrcp.pop %v3956
      %v3965 = vrcp.pop %v3959
      %v3966 = vrcp.pop %v3962
      %v3967 = vmul.f32 %v3944, %v3963
      %v3968 = vmul.f32 %v3946, %v3964
      %v3969 = vmul.f32 %v3948, %v3965
      %v3970 = vmul.f32 %v3950, %v3966
      %v3972 = vsel %vm1446, %v3967, 0
      %3974 = vmatprep.subr.mxu0 0.0
      %3975 = vmatpush1.msra.mxu0 0.0
      %3976 = vmatprep.subr.mxu0 0.0
      %3977 = vmatpush1.msra.mxu0 0.0
      %3978 = vmatprep.subr.mxu0 0.0
      %3979 = vmatpush1.msra.mxu0 0.0
      %3980 = vmatprep.subr.mxu0 0.0
      %3981 = vmatpush1.msra.mxu0 0.0
      %3982 = vmatprep.subr.mxu0 0.0
      %3983 = vmatpush1.msra.mxu0 0.0
      %3984 = vmatprep.subr.mxu0 0.0
      %3985 = vmatpush1.msra.mxu0 0.0
      %3986 = vmatprep.subr.mxu0 0.0
      %3987 = vmatpush1.msra.mxu0 0.0
      %3988 = vmatprep.subr.mxu0 0.0
      %3989 = vmatpush1.msra.mxu0 0.0
      %3990 = vmatprep.subr.mxu0 0.0
      %3991 = vmatpush1.msra.mxu0 0.0
      %3992 = vmatprep.subr.mxu0 0.0
      %3993 = vmatpush1.msra.mxu0 0.0
      %3994 = vmatprep.subr.mxu0 0.0
      %3995 = vmatpush1.msra.mxu0 0.0
      %3996 = vmatprep.subr.mxu0 0.0
      %3997 = vmatpush1.msra.mxu0 0.0
      %3998 = vmatprep.subr.mxu0 0.0
      %3999 = vmatpush1.msra.mxu0 0.0
      %4000 = vmatprep.subr.mxu0 0.0
      %4001 = vmatpush1.msra.mxu0 0.0
      %4002 = vmatprep.subr.mxu0 0.0
      %4003 = vmatpush1.msra.mxu0 0.0
      %4004 = vmatprep.subr.mxu0 0.0
      %4005 = vmatpush1.msra.mxu0 %v3406
      %4006 = vmatprep.subr.mxu0 0.0
      %4007 = vmatpush2.msra.mxu0 0.0
      %4008 = vmatprep.subr.mxu0 0.0
      %4009 = vmatpush2.msra.mxu0 0.0
      %4010 = vmatprep.subr.mxu0 0.0
      %4011 = vmatpush2.msra.mxu0 0.0
      %4012 = vmatprep.subr.mxu0 0.0
      %4013 = vmatpush2.msra.mxu0 0.0
      %4014 = vmatprep.subr.mxu0 0.0
      %4015 = vmatpush2.msra.mxu0 0.0
      %4016 = vmatprep.subr.mxu0 0.0
      %4017 = vmatpush2.msra.mxu0 0.0
      %4018 = vmatprep.subr.mxu0 0.0
      %4019 = vmatpush2.msra.mxu0 0.0
      %4020 = vmatprep.subr.mxu0 0.0
      %4021 = vmatpush2.msra.mxu0 0.0
      %4022 = vmatprep.subr.mxu0 0.0
      %4023 = vmatpush2.msra.mxu0 0.0
      %4024 = vmatprep.subr.mxu0 0.0
      %4025 = vmatpush2.msra.mxu0 0.0
      %4026 = vmatprep.subr.mxu0 0.0
      %4027 = vmatpush2.msra.mxu0 0.0
      %4028 = vmatprep.subr.mxu0 0.0
      %4029 = vmatpush2.msra.mxu0 0.0
      %4030 = vmatprep.subr.mxu0 0.0
      %4031 = vmatpush2.msra.mxu0 0.0
      %4032 = vmatprep.subr.mxu0 0.0
      %4033 = vmatpush2.msra.mxu0 0.0
      %4034 = vmatprep.subr.mxu0 0.0
      %4035 = vmatpush2.msra.mxu0 0.0
      %4036 = vmatprep.subr.mxu0 0.0
      %4037 = vmatpush2.msra.mxu0 0.0
      %4038 = vmatprep.mubr.f32.mxu0 0.0
      %4039 = vmatmul.mubr.f32.gmra.mxu0 %v3972
      %v4040 = vpop.f32.mrf.mxu0
      %v4041 = vadd.f32 0.0, %v4040
      %v4042 = vpop.f32.mrf.mxu0
      %4043 = vdwg.mxu0
      %v4045 = vsel %vm1446, %v3968, 0
      %4047 = vmatprep.subr.mxu0 0.0
      %4048 = vmatpush1.msra.mxu0 0.0
      %4049 = vmatprep.subr.mxu0 0.0
      %4050 = vmatpush1.msra.mxu0 0.0
      %4051 = vmatprep.subr.mxu0 0.0
      %4052 = vmatpush1.msra.mxu0 0.0
      %4053 = vmatprep.subr.mxu0 0.0
      %4054 = vmatpush1.msra.mxu0 0.0
      %4055 = vmatprep.subr.mxu0 0.0
      %4056 = vmatpush1.msra.mxu0 0.0
      %4057 = vmatprep.subr.mxu0 0.0
      %4058 = vmatpush1.msra.mxu0 0.0
      %4059 = vmatprep.subr.mxu0 0.0
      %4060 = vmatpush1.msra.mxu0 0.0
      %4061 = vmatprep.subr.mxu0 0.0
      %4062 = vmatpush1.msra.mxu0 0.0
      %4063 = vmatprep.subr.mxu0 0.0
      %4064 = vmatpush1.msra.mxu0 0.0
      %4065 = vmatprep.subr.mxu0 0.0
      %4066 = vmatpush1.msra.mxu0 0.0
      %4067 = vmatprep.subr.mxu0 0.0
      %4068 = vmatpush1.msra.mxu0 0.0
      %4069 = vmatprep.subr.mxu0 0.0
      %4070 = vmatpush1.msra.mxu0 0.0
      %4071 = vmatprep.subr.mxu0 0.0
      %4072 = vmatpush1.msra.mxu0 0.0
      %4073 = vmatprep.subr.mxu0 0.0
      %4074 = vmatpush1.msra.mxu0 0.0
      %4075 = vmatprep.subr.mxu0 0.0
      %4076 = vmatpush1.msra.mxu0 0.0
      %4077 = vmatprep.subr.mxu0 0.0
      %4078 = vmatpush1.msra.mxu0 %v3476
      %4079 = vmatprep.subr.mxu0 0.0
      %4080 = vmatpush2.msra.mxu0 0.0
      %4081 = vmatprep.subr.mxu0 0.0
      %4082 = vmatpush2.msra.mxu0 0.0
      %4083 = vmatprep.subr.mxu0 0.0
      %4084 = vmatpush2.msra.mxu0 0.0
      %4085 = vmatprep.subr.mxu0 0.0
      %4086 = vmatpush2.msra.mxu0 0.0
      %4087 = vmatprep.subr.mxu0 0.0
      %4088 = vmatpush2.msra.mxu0 0.0
      %4089 = vmatprep.subr.mxu0 0.0
      %4090 = vmatpush2.msra.mxu0 0.0
      %4091 = vmatprep.subr.mxu0 0.0
      %4092 = vmatpush2.msra.mxu0 0.0
      %4093 = vmatprep.subr.mxu0 0.0
      %4094 = vmatpush2.msra.mxu0 0.0
      %4095 = vmatprep.subr.mxu0 0.0
      %4096 = vmatpush2.msra.mxu0 0.0
      %4097 = vmatprep.subr.mxu0 0.0
      %4098 = vmatpush2.msra.mxu0 0.0
      %4099 = vmatprep.subr.mxu0 0.0
      %4100 = vmatpush2.msra.mxu0 0.0
      %4101 = vmatprep.subr.mxu0 0.0
      %4102 = vmatpush2.msra.mxu0 0.0
      %4103 = vmatprep.subr.mxu0 0.0
      %4104 = vmatpush2.msra.mxu0 0.0
      %4105 = vmatprep.subr.mxu0 0.0
      %4106 = vmatpush2.msra.mxu0 0.0
      %4107 = vmatprep.subr.mxu0 0.0
      %4108 = vmatpush2.msra.mxu0 0.0
      %4109 = vmatprep.subr.mxu0 0.0
      %4110 = vmatpush2.msra.mxu0 0.0
      %4111 = vmatprep.mubr.f32.mxu0 0.0
      %4112 = vmatmul.mubr.f32.gmra.mxu0 %v4045
      %v4113 = vpop.f32.mrf.mxu0
      %v4114 = vadd.f32 0.0, %v4113
      %v4115 = vpop.f32.mrf.mxu0
      %4116 = vdwg.mxu0
      %v4118 = vsel %vm1446, %v3969, 0
      %4120 = vmatprep.subr.mxu0 0.0
      %4121 = vmatpush1.msra.mxu0 0.0
      %4122 = vmatprep.subr.mxu0 0.0
      %4123 = vmatpush1.msra.mxu0 0.0
      %4124 = vmatprep.subr.mxu0 0.0
      %4125 = vmatpush1.msra.mxu0 0.0
      %4126 = vmatprep.subr.mxu0 0.0
      %4127 = vmatpush1.msra.mxu0 0.0
      %4128 = vmatprep.subr.mxu0 0.0
      %4129 = vmatpush1.msra.mxu0 0.0
      %4130 = vmatprep.subr.mxu0 0.0
      %4131 = vmatpush1.msra.mxu0 0.0
      %4132 = vmatprep.subr.mxu0 0.0
      %4133 = vmatpush1.msra.mxu0 0.0
      %4134 = vmatprep.subr.mxu0 0.0
      %4135 = vmatpush1.msra.mxu0 0.0
      %4136 = vmatprep.subr.mxu0 0.0
      %4137 = vmatpush1.msra.mxu0 0.0
      %4138 = vmatprep.subr.mxu0 0.0
      %4139 = vmatpush1.msra.mxu0 0.0
      %4140 = vmatprep.subr.mxu0 0.0
      %4141 = vmatpush1.msra.mxu0 0.0
      %4142 = vmatprep.subr.mxu0 0.0
      %4143 = vmatpush1.msra.mxu0 0.0
      %4144 = vmatprep.subr.mxu0 0.0
      %4145 = vmatpush1.msra.mxu0 0.0
      %4146 = vmatprep.subr.mxu0 0.0
      %4147 = vmatpush1.msra.mxu0 0.0
      %4148 = vmatprep.subr.mxu0 0.0
      %4149 = vmatpush1.msra.mxu0 0.0
      %4150 = vmatprep.subr.mxu0 0.0
      %4151 = vmatpush1.msra.mxu0 %v3546
      %4152 = vmatprep.subr.mxu0 0.0
      %4153 = vmatpush2.msra.mxu0 0.0
      %4154 = vmatprep.subr.mxu0 0.0
      %4155 = vmatpush2.msra.mxu0 0.0
      %4156 = vmatprep.subr.mxu0 0.0
      %4157 = vmatpush2.msra.mxu0 0.0
      %4158 = vmatprep.subr.mxu0 0.0
      %4159 = vmatpush2.msra.mxu0 0.0
      %4160 = vmatprep.subr.mxu0 0.0
      %4161 = vmatpush2.msra.mxu0 0.0
      %4162 = vmatprep.subr.mxu0 0.0
      %4163 = vmatpush2.msra.mxu0 0.0
      %4164 = vmatprep.subr.mxu0 0.0
      %4165 = vmatpush2.msra.mxu0 0.0
      %4166 = vmatprep.subr.mxu0 0.0
      %4167 = vmatpush2.msra.mxu0 0.0
      %4168 = vmatprep.subr.mxu0 0.0
      %4169 = vmatpush2.msra.mxu0 0.0
      %4170 = vmatprep.subr.mxu0 0.0
      %4171 = vmatpush2.msra.mxu0 0.0
      %4172 = vmatprep.subr.mxu0 0.0
      %4173 = vmatpush2.msra.mxu0 0.0
      %4174 = vmatprep.subr.mxu0 0.0
      %4175 = vmatpush2.msra.mxu0 0.0
      %4176 = vmatprep.subr.mxu0 0.0
      %4177 = vmatpush2.msra.mxu0 0.0
      %4178 = vmatprep.subr.mxu0 0.0
      %4179 = vmatpush2.msra.mxu0 0.0
      %4180 = vmatprep.subr.mxu0 0.0
      %4181 = vmatpush2.msra.mxu0 0.0
      %4182 = vmatprep.subr.mxu0 0.0
      %4183 = vmatpush2.msra.mxu0 0.0
      %4184 = vmatprep.mubr.f32.mxu0 0.0
      %4185 = vmatmul.mubr.f32.gmra.mxu0 %v4118
      %v4186 = vpop.f32.mrf.mxu0
      %v4187 = vadd.f32 0.0, %v4186
      %v4188 = vpop.f32.mrf.mxu0
      %4189 = vdwg.mxu0
      %v4191 = vsel %vm1446, %v3970, 0
      %4193 = vmatprep.subr.mxu0 0.0
      %4194 = vmatpush1.msra.mxu0 0.0
      %4195 = vmatprep.subr.mxu0 0.0
      %4196 = vmatpush1.msra.mxu0 0.0
      %4197 = vmatprep.subr.mxu0 0.0
      %4198 = vmatpush1.msra.mxu0 0.0
      %4199 = vmatprep.subr.mxu0 0.0
      %4200 = vmatpush1.msra.mxu0 0.0
      %4201 = vmatprep.subr.mxu0 0.0
      %4202 = vmatpush1.msra.mxu0 0.0
      %4203 = vmatprep.subr.mxu0 0.0
      %4204 = vmatpush1.msra.mxu0 0.0
      %4205 = vmatprep.subr.mxu0 0.0
      %4206 = vmatpush1.msra.mxu0 0.0
      %4207 = vmatprep.subr.mxu0 0.0
      %4208 = vmatpush1.msra.mxu0 0.0
      %4209 = vmatprep.subr.mxu0 0.0
      %4210 = vmatpush1.msra.mxu0 0.0
      %4211 = vmatprep.subr.mxu0 0.0
      %4212 = vmatpush1.msra.mxu0 0.0
      %4213 = vmatprep.subr.mxu0 0.0
      %4214 = vmatpush1.msra.mxu0 0.0
      %4215 = vmatprep.subr.mxu0 0.0
      %4216 = vmatpush1.msra.mxu0 0.0
      %4217 = vmatprep.subr.mxu0 0.0
      %4218 = vmatpush1.msra.mxu0 0.0
      %4219 = vmatprep.subr.mxu0 0.0
      %4220 = vmatpush1.msra.mxu0 0.0
      %4221 = vmatprep.subr.mxu0 0.0
      %4222 = vmatpush1.msra.mxu0 0.0
      %4223 = vmatprep.subr.mxu0 0.0
      %4224 = vmatpush1.msra.mxu0 %v3616
      %4225 = vmatprep.subr.mxu0 0.0
      %4226 = vmatpush2.msra.mxu0 0.0
      %4227 = vmatprep.subr.mxu0 0.0
      %4228 = vmatpush2.msra.mxu0 0.0
      %4229 = vmatprep.subr.mxu0 0.0
      %4230 = vmatpush2.msra.mxu0 0.0
      %4231 = vmatprep.subr.mxu0 0.0
      %4232 = vmatpush2.msra.mxu0 0.0
      %4233 = vmatprep.subr.mxu0 0.0
      %4234 = vmatpush2.msra.mxu0 0.0
      %4235 = vmatprep.subr.mxu0 0.0
      %4236 = vmatpush2.msra.mxu0 0.0
      %4237 = vmatprep.subr.mxu0 0.0
      %4238 = vmatpush2.msra.mxu0 0.0
      %4239 = vmatprep.subr.mxu0 0.0
      %4240 = vmatpush2.msra.mxu0 0.0
      %4241 = vmatprep.subr.mxu0 0.0
      %4242 = vmatpush2.msra.mxu0 0.0
      %4243 = vmatprep.subr.mxu0 0.0
      %4244 = vmatpush2.msra.mxu0 0.0
      %4245 = vmatprep.subr.mxu0 0.0
      %4246 = vmatpush2.msra.mxu0 0.0
      %4247 = vmatprep.subr.mxu0 0.0
      %4248 = vmatpush2.msra.mxu0 0.0
      %4249 = vmatprep.subr.mxu0 0.0
      %4250 = vmatpush2.msra.mxu0 0.0
      %4251 = vmatprep.subr.mxu0 0.0
      %4252 = vmatpush2.msra.mxu0 0.0
      %4253 = vmatprep.subr.mxu0 0.0
      %4254 = vmatpush2.msra.mxu0 0.0
      %4255 = vmatprep.subr.mxu0 0.0
      %4256 = vmatpush2.msra.mxu0 0.0
      %4257 = vmatprep.mubr.f32.mxu0 0.0
      %4258 = vmatmul.mubr.f32.gmra.mxu0 %v4191
      %v4259 = vpop.f32.mrf.mxu0
      %v4260 = vadd.f32 0.0, %v4259
      %v4261 = vpop.f32.mrf.mxu0
      %4262 = vdwg.mxu0
      %s4263 = scalar_lea.vmem %s6, 32
      %v4264 = vld [vmem:[%s4263] sm:$0xff]
      %v4265 = vld [vmem:[%s4263 + $0x8] sm:$0xff]
      %v4266 = vld [vmem:[%s4263 + $0x10] sm:$0xff]
      %v4267 = vld [vmem:[%s4263 + $0x18] sm:$0xff]
      %v4269 = vsel %vm1446, %v4041, 0
      %4271 = vmatprep.subr.mxu0 0.0
      %4272 = vmatpush1.msra.mxu0 0.0
      %4273 = vmatprep.subr.mxu0 0.0
      %4274 = vmatpush1.msra.mxu0 0.0
      %4275 = vmatprep.subr.mxu0 0.0
      %4276 = vmatpush1.msra.mxu0 0.0
      %4277 = vmatprep.subr.mxu0 0.0
      %4278 = vmatpush1.msra.mxu0 0.0
      %4279 = vmatprep.subr.mxu0 0.0
      %4280 = vmatpush1.msra.mxu0 0.0
      %4281 = vmatprep.subr.mxu0 0.0
      %4282 = vmatpush1.msra.mxu0 0.0
      %4283 = vmatprep.subr.mxu0 0.0
      %4284 = vmatpush1.msra.mxu0 0.0
      %4285 = vmatprep.subr.mxu0 0.0
      %4286 = vmatpush1.msra.mxu0 0.0
      %4287 = vmatprep.subr.mxu0 0.0
      %4288 = vmatpush1.msra.mxu0 0.0
      %4289 = vmatprep.subr.mxu0 0.0
      %4290 = vmatpush1.msra.mxu0 0.0
      %4291 = vmatprep.subr.mxu0 0.0
      %4292 = vmatpush1.msra.mxu0 0.0
      %4293 = vmatprep.subr.mxu0 0.0
      %4294 = vmatpush1.msra.mxu0 0.0
      %4295 = vmatprep.subr.mxu0 0.0
      %4296 = vmatpush1.msra.mxu0 0.0
      %4297 = vmatprep.subr.mxu0 0.0
      %4298 = vmatpush1.msra.mxu0 0.0
      %4299 = vmatprep.subr.mxu0 0.0
      %4300 = vmatpush1.msra.mxu0 0.0
      %4301 = vmatprep.subr.mxu0 0.0
      %4302 = vmatpush1.msra.mxu0 %v4264
      %4303 = vmatprep.subr.mxu0 0.0
      %4304 = vmatpush2.msra.mxu0 0.0
      %4305 = vmatprep.subr.mxu0 0.0
      %4306 = vmatpush2.msra.mxu0 0.0
      %4307 = vmatprep.subr.mxu0 0.0
      %4308 = vmatpush2.msra.mxu0 0.0
      %4309 = vmatprep.subr.mxu0 0.0
      %4310 = vmatpush2.msra.mxu0 0.0
      %4311 = vmatprep.subr.mxu0 0.0
      %4312 = vmatpush2.msra.mxu0 0.0
      %4313 = vmatprep.subr.mxu0 0.0
      %4314 = vmatpush2.msra.mxu0 0.0
      %4315 = vmatprep.subr.mxu0 0.0
      %4316 = vmatpush2.msra.mxu0 0.0
      %4317 = vmatprep.subr.mxu0 0.0
      %4318 = vmatpush2.msra.mxu0 0.0
      %4319 = vmatprep.subr.mxu0 0.0
      %4320 = vmatpush2.msra.mxu0 0.0
      %4321 = vmatprep.subr.mxu0 0.0
      %4322 = vmatpush2.msra.mxu0 0.0
      %4323 = vmatprep.subr.mxu0 0.0
      %4324 = vmatpush2.msra.mxu0 0.0
      %4325 = vmatprep.subr.mxu0 0.0
      %4326 = vmatpush2.msra.mxu0 0.0
      %4327 = vmatprep.subr.mxu0 0.0
      %4328 = vmatpush2.msra.mxu0 0.0
      %4329 = vmatprep.subr.mxu0 0.0
      %4330 = vmatpush2.msra.mxu0 0.0
      %4331 = vmatprep.subr.mxu0 0.0
      %4332 = vmatpush2.msra.mxu0 0.0
      %4333 = vmatprep.subr.mxu0 0.0
      %4334 = vmatpush2.msra.mxu0 0.0
      %4335 = vmatprep.mubr.f32.mxu0 0.0
      %4336 = vmatmul.mubr.f32.gmra.mxu0 %v4269
      %v4337 = vpop.f32.mrf.mxu0
      %v4338 = vadd.f32 0.0, %v4337
      %v4339 = vpop.f32.mrf.mxu0
      %4340 = vdwg.mxu0
      %v4342 = vsel %vm1446, %v4114, 0
      %4344 = vmatprep.subr.mxu0 0.0
      %4345 = vmatpush1.msra.mxu0 0.0
      %4346 = vmatprep.subr.mxu0 0.0
      %4347 = vmatpush1.msra.mxu0 0.0
      %4348 = vmatprep.subr.mxu0 0.0
      %4349 = vmatpush1.msra.mxu0 0.0
      %4350 = vmatprep.subr.mxu0 0.0
      %4351 = vmatpush1.msra.mxu0 0.0
      %4352 = vmatprep.subr.mxu0 0.0
      %4353 = vmatpush1.msra.mxu0 0.0
      %4354 = vmatprep.subr.mxu0 0.0
      %4355 = vmatpush1.msra.mxu0 0.0
      %4356 = vmatprep.subr.mxu0 0.0
      %4357 = vmatpush1.msra.mxu0 0.0
      %4358 = vmatprep.subr.mxu0 0.0
      %4359 = vmatpush1.msra.mxu0 0.0
      %4360 = vmatprep.subr.mxu0 0.0
      %4361 = vmatpush1.msra.mxu0 0.0
      %4362 = vmatprep.subr.mxu0 0.0
      %4363 = vmatpush1.msra.mxu0 0.0
      %4364 = vmatprep.subr.mxu0 0.0
      %4365 = vmatpush1.msra.mxu0 0.0
      %4366 = vmatprep.subr.mxu0 0.0
      %4367 = vmatpush1.msra.mxu0 0.0
      %4368 = vmatprep.subr.mxu0 0.0
      %4369 = vmatpush1.msra.mxu0 0.0
      %4370 = vmatprep.subr.mxu0 0.0
      %4371 = vmatpush1.msra.mxu0 0.0
      %4372 = vmatprep.subr.mxu0 0.0
      %4373 = vmatpush1.msra.mxu0 0.0
      %4374 = vmatprep.subr.mxu0 0.0
      %4375 = vmatpush1.msra.mxu0 %v4265
      %4376 = vmatprep.subr.mxu0 0.0
      %4377 = vmatpush2.msra.mxu0 0.0
      %4378 = vmatprep.subr.mxu0 0.0
      %4379 = vmatpush2.msra.mxu0 0.0
      %4380 = vmatprep.subr.mxu0 0.0
      %4381 = vmatpush2.msra.mxu0 0.0
      %4382 = vmatprep.subr.mxu0 0.0
      %4383 = vmatpush2.msra.mxu0 0.0
      %4384 = vmatprep.subr.mxu0 0.0
      %4385 = vmatpush2.msra.mxu0 0.0
      %4386 = vmatprep.subr.mxu0 0.0
      %4387 = vmatpush2.msra.mxu0 0.0
      %4388 = vmatprep.subr.mxu0 0.0
      %4389 = vmatpush2.msra.mxu0 0.0
      %4390 = vmatprep.subr.mxu0 0.0
      %4391 = vmatpush2.msra.mxu0 0.0
      %4392 = vmatprep.subr.mxu0 0.0
      %4393 = vmatpush2.msra.mxu0 0.0
      %4394 = vmatprep.subr.mxu0 0.0
      %4395 = vmatpush2.msra.mxu0 0.0
      %4396 = vmatprep.subr.mxu0 0.0
      %4397 = vmatpush2.msra.mxu0 0.0
      %4398 = vmatprep.subr.mxu0 0.0
      %4399 = vmatpush2.msra.mxu0 0.0
      %4400 = vmatprep.subr.mxu0 0.0
      %4401 = vmatpush2.msra.mxu0 0.0
      %4402 = vmatprep.subr.mxu0 0.0
      %4403 = vmatpush2.msra.mxu0 0.0
      %4404 = vmatprep.subr.mxu0 0.0
      %4405 = vmatpush2.msra.mxu0 0.0
      %4406 = vmatprep.subr.mxu0 0.0
      %4407 = vmatpush2.msra.mxu0 0.0
      %4408 = vmatprep.mubr.f32.mxu0 0.0
      %4409 = vmatmul.mubr.f32.gmra.mxu0 %v4342
      %v4410 = vpop.f32.mrf.mxu0
      %v4411 = vadd.f32 0.0, %v4410
      %v4412 = vpop.f32.mrf.mxu0
      %4413 = vdwg.mxu0
      %v4415 = vsel %vm1446, %v4187, 0
      %4417 = vmatprep.subr.mxu0 0.0
      %4418 = vmatpush1.msra.mxu0 0.0
      %4419 = vmatprep.subr.mxu0 0.0
      %4420 = vmatpush1.msra.mxu0 0.0
      %4421 = vmatprep.subr.mxu0 0.0
      %4422 = vmatpush1.msra.mxu0 0.0
      %4423 = vmatprep.subr.mxu0 0.0
      %4424 = vmatpush1.msra.mxu0 0.0
      %4425 = vmatprep.subr.mxu0 0.0
      %4426 = vmatpush1.msra.mxu0 0.0
      %4427 = vmatprep.subr.mxu0 0.0
      %4428 = vmatpush1.msra.mxu0 0.0
      %4429 = vmatprep.subr.mxu0 0.0
      %4430 = vmatpush1.msra.mxu0 0.0
      %4431 = vmatprep.subr.mxu0 0.0
      %4432 = vmatpush1.msra.mxu0 0.0
      %4433 = vmatprep.subr.mxu0 0.0
      %4434 = vmatpush1.msra.mxu0 0.0
      %4435 = vmatprep.subr.mxu0 0.0
      %4436 = vmatpush1.msra.mxu0 0.0
      %4437 = vmatprep.subr.mxu0 0.0
      %4438 = vmatpush1.msra.mxu0 0.0
      %4439 = vmatprep.subr.mxu0 0.0
      %4440 = vmatpush1.msra.mxu0 0.0
      %4441 = vmatprep.subr.mxu0 0.0
      %4442 = vmatpush1.msra.mxu0 0.0
      %4443 = vmatprep.subr.mxu0 0.0
      %4444 = vmatpush1.msra.mxu0 0.0
      %4445 = vmatprep.subr.mxu0 0.0
      %4446 = vmatpush1.msra.mxu0 0.0
      %4447 = vmatprep.subr.mxu0 0.0
      %4448 = vmatpush1.msra.mxu0 %v4266
      %4449 = vmatprep.subr.mxu0 0.0
      %4450 = vmatpush2.msra.mxu0 0.0
      %4451 = vmatprep.subr.mxu0 0.0
      %4452 = vmatpush2.msra.mxu0 0.0
      %4453 = vmatprep.subr.mxu0 0.0
      %4454 = vmatpush2.msra.mxu0 0.0
      %4455 = vmatprep.subr.mxu0 0.0
      %4456 = vmatpush2.msra.mxu0 0.0
      %4457 = vmatprep.subr.mxu0 0.0
      %4458 = vmatpush2.msra.mxu0 0.0
      %4459 = vmatprep.subr.mxu0 0.0
      %4460 = vmatpush2.msra.mxu0 0.0
      %4461 = vmatprep.subr.mxu0 0.0
      %4462 = vmatpush2.msra.mxu0 0.0
      %4463 = vmatprep.subr.mxu0 0.0
      %4464 = vmatpush2.msra.mxu0 0.0
      %4465 = vmatprep.subr.mxu0 0.0
      %4466 = vmatpush2.msra.mxu0 0.0
      %4467 = vmatprep.subr.mxu0 0.0
      %4468 = vmatpush2.msra.mxu0 0.0
      %4469 = vmatprep.subr.mxu0 0.0
      %4470 = vmatpush2.msra.mxu0 0.0
      %4471 = vmatprep.subr.mxu0 0.0
      %4472 = vmatpush2.msra.mxu0 0.0
      %4473 = vmatprep.subr.mxu0 0.0
      %4474 = vmatpush2.msra.mxu0 0.0
      %4475 = vmatprep.subr.mxu0 0.0
      %4476 = vmatpush2.msra.mxu0 0.0
      %4477 = vmatprep.subr.mxu0 0.0
      %4478 = vmatpush2.msra.mxu0 0.0
      %4479 = vmatprep.subr.mxu0 0.0
      %4480 = vmatpush2.msra.mxu0 0.0
      %4481 = vmatprep.mubr.f32.mxu0 0.0
      %4482 = vmatmul.mubr.f32.gmra.mxu0 %v4415
      %v4483 = vpop.f32.mrf.mxu0
      %v4484 = vadd.f32 0.0, %v4483
      %v4485 = vpop.f32.mrf.mxu0
      %4486 = vdwg.mxu0
      %v4488 = vsel %vm1446, %v4260, 0
      %4490 = vmatprep.subr.mxu0 0.0
      %4491 = vmatpush1.msra.mxu0 0.0
      %4492 = vmatprep.subr.mxu0 0.0
      %4493 = vmatpush1.msra.mxu0 0.0
      %4494 = vmatprep.subr.mxu0 0.0
      %4495 = vmatpush1.msra.mxu0 0.0
      %4496 = vmatprep.subr.mxu0 0.0
      %4497 = vmatpush1.msra.mxu0 0.0
      %4498 = vmatprep.subr.mxu0 0.0
      %4499 = vmatpush1.msra.mxu0 0.0
      %4500 = vmatprep.subr.mxu0 0.0
      %4501 = vmatpush1.msra.mxu0 0.0
      %4502 = vmatprep.subr.mxu0 0.0
      %4503 = vmatpush1.msra.mxu0 0.0
      %4504 = vmatprep.subr.mxu0 0.0
      %4505 = vmatpush1.msra.mxu0 0.0
      %4506 = vmatprep.subr.mxu0 0.0
      %4507 = vmatpush1.msra.mxu0 0.0
      %4508 = vmatprep.subr.mxu0 0.0
      %4509 = vmatpush1.msra.mxu0 0.0
      %4510 = vmatprep.subr.mxu0 0.0
      %4511 = vmatpush1.msra.mxu0 0.0
      %4512 = vmatprep.subr.mxu0 0.0
      %4513 = vmatpush1.msra.mxu0 0.0
      %4514 = vmatprep.subr.mxu0 0.0
      %4515 = vmatpush1.msra.mxu0 0.0
      %4516 = vmatprep.subr.mxu0 0.0
      %4517 = vmatpush1.msra.mxu0 0.0
      %4518 = vmatprep.subr.mxu0 0.0
      %4519 = vmatpush1.msra.mxu0 0.0
      %4520 = vmatprep.subr.mxu0 0.0
      %4521 = vmatpush1.msra.mxu0 %v4267
      %4522 = vmatprep.subr.mxu0 0.0
      %4523 = vmatpush2.msra.mxu0 0.0
      %4524 = vmatprep.subr.mxu0 0.0
      %4525 = vmatpush2.msra.mxu0 0.0
      %4526 = vmatprep.subr.mxu0 0.0
      %4527 = vmatpush2.msra.mxu0 0.0
      %4528 = vmatprep.subr.mxu0 0.0
      %4529 = vmatpush2.msra.mxu0 0.0
      %4530 = vmatprep.subr.mxu0 0.0
      %4531 = vmatpush2.msra.mxu0 0.0
      %4532 = vmatprep.subr.mxu0 0.0
      %4533 = vmatpush2.msra.mxu0 0.0
      %4534 = vmatprep.subr.mxu0 0.0
      %4535 = vmatpush2.msra.mxu0 0.0
      %4536 = vmatprep.subr.mxu0 0.0
      %4537 = vmatpush2.msra.mxu0 0.0
      %4538 = vmatprep.subr.mxu0 0.0
      %4539 = vmatpush2.msra.mxu0 0.0
      %4540 = vmatprep.subr.mxu0 0.0
      %4541 = vmatpush2.msra.mxu0 0.0
      %4542 = vmatprep.subr.mxu0 0.0
      %4543 = vmatpush2.msra.mxu0 0.0
      %4544 = vmatprep.subr.mxu0 0.0
      %4545 = vmatpush2.msra.mxu0 0.0
      %4546 = vmatprep.subr.mxu0 0.0
      %4547 = vmatpush2.msra.mxu0 0.0
      %4548 = vmatprep.subr.mxu0 0.0
      %4549 = vmatpush2.msra.mxu0 0.0
      %4550 = vmatprep.subr.mxu0 0.0
      %4551 = vmatpush2.msra.mxu0 0.0
      %4552 = vmatprep.subr.mxu0 0.0
      %4553 = vmatpush2.msra.mxu0 0.0
      %4554 = vmatprep.mubr.f32.mxu0 0.0
      %4555 = vmatmul.mubr.f32.gmra.mxu0 %v4488
      %v4556 = vpop.f32.mrf.mxu0
      %v4557 = vadd.f32 0.0, %v4556
      %v4558 = vpop.f32.mrf.mxu0
      %4559 = vdwg.mxu0
      %v4560 = vsel %vm506, %v4338, 0.0
      %v4561 = vsel %vm506, %v4411, 0.0
      %v4562 = vadd.f32 %v4560, %v4561
      %v4563 = vsel %vm506, %v4484, 0.0
      %v4564 = vadd.f32 %v4562, %v4563
      %v4565 = vsel %vm506, %v4557, 0.0
      %v4566 = vadd.f32 %v4564, %v4565
      %s4567 = scalar_lea.vmem %s10, 6
      %v4568 = vld [vmem:[%s4567] sm:$0x1]
      %v4570 = vlaneseq
      %v4571 = vshrl.u32 %v4570, 7
      %v4572 = vsub.s32 0, %v4571
      %v4573 = vrot.slane %v4568, %v4572
      %v4575 = vadd.f32 %v4566, %v4573
      %v4576 = vadd.f32 %v2637, %v4575
      %s4577 = scalar_lea.vmem %s10, 7
      %v4578 = vld [vmem:[%s4577] sm:$0x1]
      %s4579 = scalar_lea.vmem %s10, 8
      %v4580 = vld [vmem:[%s4579] sm:$0x1]
      %v4581 = vsel %vm506, %v4576, 0.0
      %4582 = vadd.xlane.f32.xlu0 %v4581
      %v4583 = vpop.xlane.xlu0 %4582
      %v4584 = vmul.f32 %v4583, %v2406
      %v4585 = vsub.f32 %v4576, %v4584
      %v4586 = vmul.f32 %v4585, %v4585
      %v4587 = vsel %vm506, %v4586, 0.0
      %4588 = vadd.xlane.f32.xlu0 %v4587
      %v4589 = vpop.xlane.xlu0 %4588
      %v4590 = vmul.f32 %v4589, %v2406
      %v4591 = vadd.f32 %v4590, 1e-05
      %v4592 = vrsqrt.pop %v4591
      %v4593 = vmul.f32 %v4585, %v4592
      %v4595 = vlaneseq
      %v4596 = vshrl.u32 %v4595, 7
      %v4597 = vsub.s32 0, %v4596
      %v4598 = vrot.slane %v4578, %v4597
      %v4600 = vmul.f32 %v4593, %v4598
      %v4602 = vlaneseq
      %v4603 = vshrl.u32 %v4602, 7
      %v4604 = vsub.s32 0, %v4603
      %v4605 = vrot.slane %v4580, %v4604
      %v4607 = vadd.f32 %v4600, %v4605
      %s4608 = scalar_lea.vmem %s7, 32
      %v4609 = vld [vmem:[%s4608] sm:$0xff]
      %v4610 = vld [vmem:[%s4608 + $0x8] sm:$0xff]
      %v4611 = vld [vmem:[%s4608 + $0x10] sm:$0xff]
      %v4612 = vld [vmem:[%s4608 + $0x18] sm:$0xff]
      %s4613 = scalar_lea.vmem %s8, 1
      %v4614 = vld [vmem:[%s4613] sm:$0x1]
      %v4616 = vlaneseq
      %v4617 = vshrl.u32 %v4616, 7
      %v4618 = vsub.s32 0, %v4617
      %v4619 = vrot.slane %v4614, %v4618
      %v4622 = vsel %vm506, %v4607, 0
      %4624 = vmatprep.subr.mxu0 0.0
      %4625 = vmatpush1.msra.mxu0 0.0
      %4626 = vmatprep.subr.mxu0 0.0
      %4627 = vmatpush1.msra.mxu0 0.0
      %4628 = vmatprep.subr.mxu0 0.0
      %4629 = vmatpush1.msra.mxu0 0.0
      %4630 = vmatprep.subr.mxu0 0.0
      %4631 = vmatpush1.msra.mxu0 0.0
      %4632 = vmatprep.subr.mxu0 0.0
      %4633 = vmatpush1.msra.mxu0 0.0
      %4634 = vmatprep.subr.mxu0 0.0
      %4635 = vmatpush1.msra.mxu0 0.0
      %4636 = vmatprep.subr.mxu0 0.0
      %4637 = vmatpush1.msra.mxu0 0.0
      %4638 = vmatprep.subr.mxu0 0.0
      %4639 = vmatpush1.msra.mxu0 0.0
      %4640 = vmatprep.subr.mxu0 0.0
      %4641 = vmatpush1.msra.mxu0 0.0
      %4642 = vmatprep.subr.mxu0 0.0
      %4643 = vmatpush1.msra.mxu0 0.0
      %4644 = vmatprep.subr.mxu0 0.0
      %4645 = vmatpush1.msra.mxu0 0.0
      %4646 = vmatprep.subr.mxu0 0.0
      %4647 = vmatpush1.msra.mxu0 0.0
      %4648 = vmatprep.subr.mxu0 0.0
      %4649 = vmatpush1.msra.mxu0 %v4612
      %4650 = vmatprep.subr.mxu0 0.0
      %4651 = vmatpush1.msra.mxu0 %v4611
      %4652 = vmatprep.subr.mxu0 0.0
      %4653 = vmatpush1.msra.mxu0 %v4610
      %4654 = vmatprep.subr.mxu0 0.0
      %4655 = vmatpush1.msra.mxu0 %v4609
      %4656 = vmatprep.subr.mxu0 0.0
      %4657 = vmatpush2.msra.mxu0 0.0
      %4658 = vmatprep.subr.mxu0 0.0
      %4659 = vmatpush2.msra.mxu0 0.0
      %4660 = vmatprep.subr.mxu0 0.0
      %4661 = vmatpush2.msra.mxu0 0.0
      %4662 = vmatprep.subr.mxu0 0.0
      %4663 = vmatpush2.msra.mxu0 0.0
      %4664 = vmatprep.subr.mxu0 0.0
      %4665 = vmatpush2.msra.mxu0 0.0
      %4666 = vmatprep.subr.mxu0 0.0
      %4667 = vmatpush2.msra.mxu0 0.0
      %4668 = vmatprep.subr.mxu0 0.0
      %4669 = vmatpush2.msra.mxu0 0.0
      %4670 = vmatprep.subr.mxu0 0.0
      %4671 = vmatpush2.msra.mxu0 0.0
      %4672 = vmatprep.subr.mxu0 0.0
      %4673 = vmatpush2.msra.mxu0 0.0
      %4674 = vmatprep.subr.mxu0 0.0
      %4675 = vmatpush2.msra.mxu0 0.0
      %4676 = vmatprep.subr.mxu0 0.0
      %4677 = vmatpush2.msra.mxu0 0.0
      %4678 = vmatprep.subr.mxu0 0.0
      %4679 = vmatpush2.msra.mxu0 0.0
      %4680 = vmatprep.subr.mxu0 0.0
      %4681 = vmatpush2.msra.mxu0 0.0
      %4682 = vmatprep.subr.mxu0 0.0
      %4683 = vmatpush2.msra.mxu0 0.0
      %4684 = vmatprep.subr.mxu0 0.0
      %4685 = vmatpush2.msra.mxu0 0.0
      %4686 = vmatprep.subr.mxu0 0.0
      %4687 = vmatpush2.msra.mxu0 0.0
      %4688 = vmatprep.mubr.f32.mxu0 0.0
      %4689 = vmatmul.mubr.f32.gmra.mxu0 %v4622
      %v4690 = vpop.f32.mrf.mxu0
      %v4691 = vadd.f32 %v4619, %v4690
      %v4692 = vpop.f32.mrf.mxu0
      %4693 = vdwg.mxu0
      %v4694 = vmax.f32 %v4691, 0.0
      %s4695 = scalar_lea.vmem %s9, 64
      %v4696 = vld [vmem:[%s4695] sm:$0xff]
      %v4697 = vld [vmem:[%s4695 + $0x8] sm:$0xff]
      %v4698 = vld [vmem:[%s4695 + $0x10] sm:$0xff]
      %v4699 = vld [vmem:[%s4695 + $0x18] sm:$0xff]
      %v4700 = vld [vmem:[%s4695 + $0x20] sm:$0xff]
      %v4701 = vld [vmem:[%s4695 + $0x28] sm:$0xff]
      %v4702 = vld [vmem:[%s4695 + $0x30] sm:$0xff]
      %v4703 = vld [vmem:[%s4695 + $0x38] sm:$0xff]
      %s4704 = scalar_lea.vmem %s10, 9
      %v4705 = vld [vmem:[%s4704] sm:$0x1]
      %v4707 = vlaneseq
      %v4708 = vshrl.u32 %v4707, 7
      %v4709 = vsub.s32 0, %v4708
      %v4710 = vrot.slane %v4705, %v4709
      %v4713 = vsel %vm2532, %v4694, 0
      %4715 = vmatprep.subr.mxu0 0.0
      %4716 = vmatpush1.msra.mxu0 0.0
      %4717 = vmatprep.subr.mxu0 0.0
      %4718 = vmatpush1.msra.mxu0 0.0
      %4719 = vmatprep.subr.mxu0 0.0
      %4720 = vmatpush1.msra.mxu0 0.0
      %4721 = vmatprep.subr.mxu0 0.0
      %4722 = vmatpush1.msra.mxu0 0.0
      %4723 = vmatprep.subr.mxu0 0.0
      %4724 = vmatpush1.msra.mxu0 0.0
      %4725 = vmatprep.subr.mxu0 0.0
      %4726 = vmatpush1.msra.mxu0 0.0
      %4727 = vmatprep.subr.mxu0 0.0
      %4728 = vmatpush1.msra.mxu0 0.0
      %4729 = vmatprep.subr.mxu0 0.0
      %4730 = vmatpush1.msra.mxu0 0.0
      %4731 = vmatprep.subr.mxu0 0.0
      %4732 = vmatpush1.msra.mxu0 %v4703
      %4733 = vmatprep.subr.mxu0 0.0
      %4734 = vmatpush1.msra.mxu0 %v4702
      %4735 = vmatprep.subr.mxu0 0.0
      %4736 = vmatpush1.msra.mxu0 %v4701
      %4737 = vmatprep.subr.mxu0 0.0
      %4738 = vmatpush1.msra.mxu0 %v4700
      %4739 = vmatprep.subr.mxu0 0.0
      %4740 = vmatpush1.msra.mxu0 %v4699
      %4741 = vmatprep.subr.mxu0 0.0
      %4742 = vmatpush1.msra.mxu0 %v4698
      %4743 = vmatprep.subr.mxu0 0.0
      %4744 = vmatpush1.msra.mxu0 %v4697
      %4745 = vmatprep.subr.mxu0 0.0
      %4746 = vmatpush1.msra.mxu0 %v4696
      %4747 = vmatprep.subr.mxu0 0.0
      %4748 = vmatpush2.msra.mxu0 0.0
      %4749 = vmatprep.subr.mxu0 0.0
      %4750 = vmatpush2.msra.mxu0 0.0
      %4751 = vmatprep.subr.mxu0 0.0
      %4752 = vmatpush2.msra.mxu0 0.0
      %4753 = vmatprep.subr.mxu0 0.0
      %4754 = vmatpush2.msra.mxu0 0.0
      %4755 = vmatprep.subr.mxu0 0.0
      %4756 = vmatpush2.msra.mxu0 0.0
      %4757 = vmatprep.subr.mxu0 0.0
      %4758 = vmatpush2.msra.mxu0 0.0
      %4759 = vmatprep.subr.mxu0 0.0
      %4760 = vmatpush2.msra.mxu0 0.0
      %4761 = vmatprep.subr.mxu0 0.0
      %4762 = vmatpush2.msra.mxu0 0.0
      %4763 = vmatprep.subr.mxu0 0.0
      %4764 = vmatpush2.msra.mxu0 0.0
      %4765 = vmatprep.subr.mxu0 0.0
      %4766 = vmatpush2.msra.mxu0 0.0
      %4767 = vmatprep.subr.mxu0 0.0
      %4768 = vmatpush2.msra.mxu0 0.0
      %4769 = vmatprep.subr.mxu0 0.0
      %4770 = vmatpush2.msra.mxu0 0.0
      %4771 = vmatprep.subr.mxu0 0.0
      %4772 = vmatpush2.msra.mxu0 0.0
      %4773 = vmatprep.subr.mxu0 0.0
      %4774 = vmatpush2.msra.mxu0 0.0
      %4775 = vmatprep.subr.mxu0 0.0
      %4776 = vmatpush2.msra.mxu0 0.0
      %4777 = vmatprep.subr.mxu0 0.0
      %4778 = vmatpush2.msra.mxu0 0.0
      %4779 = vmatprep.mubr.f32.mxu0 0.0
      %4780 = vmatmul.mubr.f32.gmra.mxu0 %v4713
      %v4781 = vpop.f32.mrf.mxu0
      %v4782 = vadd.f32 %v4710, %v4781
      %v4783 = vpop.f32.mrf.mxu0
      %4784 = vdwg.mxu0
      %v4785 = vadd.f32 %v4607, %v4782
      %s4786 = scalar_lea.vmem %s10, 10
      %v4787 = vld [vmem:[%s4786] sm:$0x1]
      %s4788 = scalar_lea.vmem %s10, 11
      %v4789 = vld [vmem:[%s4788] sm:$0x1]
      %v4790 = vsel %vm506, %v4785, 0.0
      %4791 = vadd.xlane.f32.xlu0 %v4790
      %v4792 = vpop.xlane.xlu0 %4791
      %v4793 = vmul.f32 %v4792, %v2406
      %v4794 = vsub.f32 %v4785, %v4793
      %v4795 = vmul.f32 %v4794, %v4794
      %v4796 = vsel %vm506, %v4795, 0.0
      %4797 = vadd.xlane.f32.xlu0 %v4796
      %v4798 = vpop.xlane.xlu0 %4797
      %v4799 = vmul.f32 %v4798, %v2406
      %v4800 = vadd.f32 %v4799, 1e-05
      %v4801 = vrsqrt.pop %v4800
      %v4802 = vmul.f32 %v4794, %v4801
      %v4804 = vlaneseq
      %v4805 = vshrl.u32 %v4804, 7
      %v4806 = vsub.s32 0, %v4805
      %v4807 = vrot.slane %v4787, %v4806
      %v4809 = vmul.f32 %v4802, %v4807
      %v4811 = vlaneseq
      %v4812 = vshrl.u32 %v4811, 7
      %v4813 = vsub.s32 0, %v4812
      %v4814 = vrot.slane %v4789, %v4813
      %v4816 = vadd.f32 %v4809, %v4814
      %v4817 = vld [vmem:[%s11] sm:$0xff]
      %v4818 = vld [vmem:[%s11 + $0x8] sm:$0xff]
      %v4819 = vld [vmem:[%s11 + $0x10] sm:$0xff]
      %v4820 = vld [vmem:[%s11 + $0x18] sm:$0xff]
      %v4821 = vld [vmem:[#allocation2] sm:$0x1]
      %v4823 = vlaneseq
      %v4824 = vshrl.u32 %v4823, 7
      %v4825 = vsub.s32 0, %v4824
      %v4826 = vrot.slane %v4821, %v4825
      %v4829 = vsel %vm506, %v4816, 0
      %4831 = vmatprep.subr.mxu0 0.0
      %4832 = vmatpush1.msra.mxu0 0.0
      %4833 = vmatprep.subr.mxu0 0.0
      %4834 = vmatpush1.msra.mxu0 0.0
      %4835 = vmatprep.subr.mxu0 0.0
      %4836 = vmatpush1.msra.mxu0 0.0
      %4837 = vmatprep.subr.mxu0 0.0
      %4838 = vmatpush1.msra.mxu0 0.0
      %4839 = vmatprep.subr.mxu0 0.0
      %4840 = vmatpush1.msra.mxu0 0.0
      %4841 = vmatprep.subr.mxu0 0.0
      %4842 = vmatpush1.msra.mxu0 0.0
      %4843 = vmatprep.subr.mxu0 0.0
      %4844 = vmatpush1.msra.mxu0 0.0
      %4845 = vmatprep.subr.mxu0 0.0
      %4846 = vmatpush1.msra.mxu0 0.0
      %4847 = vmatprep.subr.mxu0 0.0
      %4848 = vmatpush1.msra.mxu0 0.0
      %4849 = vmatprep.subr.mxu0 0.0
      %4850 = vmatpush1.msra.mxu0 0.0
      %4851 = vmatprep.subr.mxu0 0.0
      %4852 = vmatpush1.msra.mxu0 0.0
      %4853 = vmatprep.subr.mxu0 0.0
      %4854 = vmatpush1.msra.mxu0 0.0
      %4855 = vmatprep.subr.mxu0 0.0
      %4856 = vmatpush1.msra.mxu0 %v4820
      %4857 = vmatprep.subr.mxu0 0.0
      %4858 = vmatpush1.msra.mxu0 %v4819
      %4859 = vmatprep.subr.mxu0 0.0
      %4860 = vmatpush1.msra.mxu0 %v4818
      %4861 = vmatprep.subr.mxu0 0.0
      %4862 = vmatpush1.msra.mxu0 %v4817
      %4863 = vmatprep.subr.mxu0 0.0
      %4864 = vmatpush2.msra.mxu0 0.0
      %4865 = vmatprep.subr.mxu0 0.0
      %4866 = vmatpush2.msra.mxu0 0.0
      %4867 = vmatprep.subr.mxu0 0.0
      %4868 = vmatpush2.msra.mxu0 0.0
      %4869 = vmatprep.subr.mxu0 0.0
      %4870 = vmatpush2.msra.mxu0 0.0
      %4871 = vmatprep.subr.mxu0 0.0
      %4872 = vmatpush2.msra.mxu0 0.0
      %4873 = vmatprep.subr.mxu0 0.0
      %4874 = vmatpush2.msra.mxu0 0.0
      %4875 = vmatprep.subr.mxu0 0.0
      %4876 = vmatpush2.msra.mxu0 0.0
      %4877 = vmatprep.subr.mxu0 0.0
      %4878 = vmatpush2.msra.mxu0 0.0
      %4879 = vmatprep.subr.mxu0 0.0
      %4880 = vmatpush2.msra.mxu0 0.0
      %4881 = vmatprep.subr.mxu0 0.0
      %4882 = vmatpush2.msra.mxu0 0.0
      %4883 = vmatprep.subr.mxu0 0.0
      %4884 = vmatpush2.msra.mxu0 0.0
      %4885 = vmatprep.subr.mxu0 0.0
      %4886 = vmatpush2.msra.mxu0 0.0
      %4887 = vmatprep.subr.mxu0 0.0
      %4888 = vmatpush2.msra.mxu0 0.0
      %4889 = vmatprep.subr.mxu0 0.0
      %4890 = vmatpush2.msra.mxu0 0.0
      %4891 = vmatprep.subr.mxu0 0.0
      %4892 = vmatpush2.msra.mxu0 0.0
      %4893 = vmatprep.subr.mxu0 0.0
      %4894 = vmatpush2.msra.mxu0 0.0
      %4895 = vmatprep.mubr.f32.mxu0 0.0
      %4896 = vmatmul.mubr.f32.gmra.mxu0 %v4829
      %v4897 = vpop.f32.mrf.mxu0
      %v4898 = vadd.f32 %v4826, %v4897
      %v4899 = vpop.f32.mrf.mxu0
      %4900 = vdwg.mxu0
      %vm4901 = vcmask 7168
      %4902 = vst.msk [vmem:[%s437] sm:$0xff] %vm4901, %v4898
      %p4903 = scmp.lt.s32.totalorder %s26, 1
      %s4904 = scalar_select %p4903, %s26, 1
      %s4905 = smul.addr %s4904, 8
      %s4906 = scalar_lea.vmem %s13, %s4905
      // Predicated region
      $region73: #{tpu_custom_call.1} parent=71 // pred_check
        %p4907 = pneg %p322
      $region74: #{tpu_custom_call.1} parent=71 // pred_check_branch
        %4909 = sbr.rel (%p4907) target = $region76
      $region75: #{tpu_custom_call.1} parent=71 // pred_region
        _
      $region76: #{tpu_custom_call.1} parent=71 // pred_fallthru
        _
    $region72: #{tpu_custom_call.1} parent=5 // pred_fallthru
      _
    %p4910 = scmp.le.s32.totalorder 2, %s21
    // Predicated region
    $region77: #{tpu_custom_call.1} parent=5 // pred_check
      %p4911 = pneg %p4910
    $region78: #{tpu_custom_call.1} parent=5 // pred_check_branch
      %4913 = sbr.rel (%p4911) target = $region80
    $region79: #{tpu_custom_call.1} parent=5 // pred_region
      %s4914 = ssub.s32 %s21, 2
      // Predicated region
      $region81: #{tpu_custom_call.1} parent=79 // pred_check
        %p4915 = pneg %p328
      $region82: #{tpu_custom_call.1} parent=79 // pred_check_branch
        %4917 = sbr.rel (%p4915) target = $region84
      $region83: #{tpu_custom_call.1} parent=79 // pred_region
        %p4918 = scmp.lt.s32.totalorder %s27, 1
        %s4919 = scalar_select %p4918, %s27, 1
        %s4920 = smul.addr %s4919, 8
        %s4921 = scalar_lea.vmem %s13, %s4920
      $region84: #{tpu_custom_call.1} parent=79 // pred_fallthru
        _
    $region80: #{tpu_custom_call.1} parent=5 // pred_fallthru
      _
  $region6: #{tpu_custom_call.1} parent=0 // loop_footer
    %s25 = sadd.s32 1, %s21
  $region7: #{tpu_custom_call.1} parent=0 // loop_footer_branch
    %20 = sbr.rel target = $region3
  $region8: #{tpu_custom_call.1} parent=0 // loop_exit
    _

</llo_original>
